<compile_context>
chip_gen: v6e
topology: v6e:2x2x1
jax: 0.10.0
libtpu: 0.0.40
codegen_flags: <defaults>
</compile_context>

<pallas_src>
import functools

import jax
import jax.numpy as jnp
from jax.experimental import pallas as pl
from jax.experimental.pallas import tpu as pltpu


# ------------------------------ kernel helpers ------------------------------ #

def _layernorm(x, g, b, eps):
    """Row-wise LayerNorm in f32. x:(M,D), g/b:(1,D)."""
    mu = jnp.mean(x, axis=-1, keepdims=True)
    var = jnp.mean(jnp.square(x - mu), axis=-1, keepdims=True)
    return (x - mu) * jax.lax.rsqrt(var + eps) * g + b


# ------------------------------ fused kernel -------------------------------- #

def _clip_encode_kernel(
    tok_ref, convw_ref, pos_ref, lnpre_g_ref, lnpre_b_ref,
    ln1g_ref, ln1b_ref, wqkv_ref, bqkv_ref, wout_ref, bout_ref,
    ln2g_ref, ln2b_ref, wfc1_ref, bfc1_ref, wfc2_ref, bfc2_ref,
    lnpost_g_ref, lnpost_b_ref, proj_ref,
    out_ref, x_scr,
    *, heads, head_pad, eps):
    """grid = (batch, layer). x_scr (T, D) f32 carries activations across layers."""
    l = pl.program_id(1)
    n_layers = pl.num_programs(1)
    hp = head_pad

    # --- patch embedding + class/pos embedding + ln_pre (first layer step only) ---
    @pl.when(l == 0)
    def _():
        emb = jnp.dot(tok_ref[0].astype(jnp.bfloat16), convw_ref[...],
                      preferred_element_type=jnp.float32)            # (T, D); row0 == 0
        # pos_ref already has the class embedding folded into row 0.
        x_scr[...] = _layernorm(emb + pos_ref[...],
                                lnpre_g_ref[...], lnpre_b_ref[...], eps)

    x = x_scr[...]                                                    # (T, D) f32

    # ------------------------------ attention ------------------------------- #
    y = _layernorm(x, ln1g_ref[0], ln1b_ref[0], eps)
    qkv = jnp.dot(y.astype(jnp.bfloat16), wqkv_ref[0],
                  preferred_element_type=jnp.float32) + bqkv_ref[0]   # (T, 3*H*hp)
    w_out = wout_ref[0]                                               # (H*hp, D) bf16
    q_off, k_off, v_off = 0, heads * hp, 2 * heads * hp

    attn = None
    for h in range(heads):                                            # static unroll
        qh = qkv[:, q_off + h * hp: q_off + (h + 1) * hp]             # (T, hp) aligned
        kh = qkv[:, k_off + h * hp: k_off + (h + 1) * hp]
        vh = qkv[:, v_off + h * hp: v_off + (h + 1) * hp]
        # scores = q @ k^T  (scale already folded into W_q); 128-wide contraction.
        s = jax.lax.dot_general(
            qh.astype(jnp.bfloat16), kh.astype(jnp.bfloat16),
            (((1,), (1,)), ((), ())), preferred_element_type=jnp.float32)  # (T, T)
        s = s - jnp.max(s, axis=-1, keepdims=True)
        p = jnp.exp(s)
        p = p * pl.reciprocal(jnp.sum(p, axis=-1, keepdims=True), approx=True)
        oh = jnp.dot(p.astype(jnp.bfloat16), vh.astype(jnp.bfloat16),
                     preferred_element_type=jnp.float32)              # (T, hp)
        # out-projection fused per head (avoids concatenating heads along lanes).
        part = jnp.dot(oh.astype(jnp.bfloat16), w_out[h * hp:(h + 1) * hp, :],
                       preferred_element_type=jnp.float32)            # (T, D)
        attn = part if attn is None else attn + part
    x = x + attn + bout_ref[0]                                        # residual add

    # --------------------------------- MLP ----------------------------------- #
    y = _layernorm(x, ln2g_ref[0], ln2b_ref[0], eps)
    hact = jnp.dot(y.astype(jnp.bfloat16), wfc1_ref[0],
                   preferred_element_type=jnp.float32) + bfc1_ref[0]  # (T, 4D)
    hact = hact * jax.nn.sigmoid(1.702 * hact)                        # QuickGELU (f32)
    x = x + jnp.dot(hact.astype(jnp.bfloat16), wfc2_ref[0],
                    preferred_element_type=jnp.float32) + bfc2_ref[0]
    x_scr[...] = x

    # --- ln_post on class token + final projection (last layer step only) ----
    @pl.when(l == n_layers - 1)
    def _():
        cls = _layernorm(x[0:1, :], lnpost_g_ref[...], lnpost_b_ref[...], eps)
        out_ref[0] = jnp.dot(cls.astype(jnp.bfloat16), proj_ref[...],
                             preferred_element_type=jnp.float32)      # (1, outdim)


# --------------------------- parameter construction -------------------------- #

def init_clip_params(key, *, in_ch=3, image=32, patch=8, width=128,
                     layers=2, heads=4, outdim=128):
    """Deterministic synthetic CLIP-ViT visual weights, pre-packed for the fused kernel."""
    hd = width // heads
    hp = max(128, hd)                       # per-head dim padded to a full 128-lane block
    grid = image // patch
    T = grid * grid + 1
    P = in_ch * patch * patch
    mlp_dim = 4 * width
    scale = float(hd) ** -0.5

    def nrm(k, shape, std=0.02):
        return std * jax.random.normal(k, shape, dtype=jnp.float32)

    keys = iter(jax.random.split(key, 4 + 6 * layers))

    conv_w = nrm(next(keys), (P, width))
    class_emb = nrm(next(keys), (width,))
    pos = nrm(next(keys), (T, width))
    pos_cls = pos.at[0].add(class_emb)      # class embedding folded into pos row 0
    proj = nrm(next(keys), (width, outdim))

    def pad_cols(w):                        # (D, H*hd) -> (D, H*hp), zero-padded per head
        w = w.reshape(width, heads, hd)
        return (jnp.zeros((width, heads, hp), jnp.float32)
                .at[:, :, :hd].set(w).reshape(width, heads * hp))

    def pad_rows(w):                        # (H*hd, D) -> (H*hp, D), zero-padded per head
        w = w.reshape(heads, hd, width)
        return (jnp.zeros((heads, hp, width), jnp.float32)
                .at[:, :hd, :].set(w).reshape(heads * hp, width))

    wqkv_l, bqkv_l, wout_l, bout_l = [], [], [], []
    ln1g_l, ln1b_l, ln2g_l, ln2b_l = [], [], [], []
    wfc1_l, bfc1_l, wfc2_l, bfc2_l = [], [], [], []
    for _ in range(layers):
        wq = nrm(next(keys), (width, width)) * scale   # attention scale folded into W_q
        wk = nrm(next(keys), (width, width))
        wv = nrm(next(keys), (width, width))
        wqkv_l.append(jnp.concatenate([pad_cols(wq), pad_cols(wk), pad_cols(wv)], axis=1))
        bqkv_l.append(jnp.zeros((1, 3 * heads * hp), jnp.float32))
        wout_l.append(pad_rows(nrm(next(keys), (width, width))))
        bout_l.append(jnp.zeros((1, width), jnp.float32))
        ln1g_l.append(jnp.ones((1, width), jnp.float32))
        ln1b_l.append(jnp.zeros((1, width), jnp.float32))
        ln2g_l.append(jnp.ones((1, width), jnp.float32))
        ln2b_l.append(jnp.zeros((1, width), jnp.float32))
        wfc1_l.append(nrm(next(keys), (width, mlp_dim)))
        bfc1_l.append(jnp.zeros((1, mlp_dim), jnp.float32))
        wfc2_l.append(nrm(next(keys), (mlp_dim, width)))
        bfc2_l.append(jnp.zeros((1, width), jnp.float32))

    return {
        "patch": patch, "width": width, "heads": heads, "layers": layers, "head_pad": hp,
        "conv_w": conv_w.astype(jnp.bfloat16),
        "pos_cls": pos_cls,
        "ln_pre_g": jnp.ones((1, width), jnp.float32),
        "ln_pre_b": jnp.zeros((1, width), jnp.float32),
        "ln_post_g": jnp.ones((1, width), jnp.float32),
        "ln_post_b": jnp.zeros((1, width), jnp.float32),
        "proj": proj.astype(jnp.bfloat16),
        "ln1_g": jnp.stack(ln1g_l), "ln1_b": jnp.stack(ln1b_l),
        "w_qkv": jnp.stack(wqkv_l).astype(jnp.bfloat16), "b_qkv": jnp.stack(bqkv_l),
        "w_out": jnp.stack(wout_l).astype(jnp.bfloat16), "b_out": jnp.stack(bout_l),
        "ln2_g": jnp.stack(ln2g_l), "ln2_b": jnp.stack(ln2b_l),
        "w_fc1": jnp.stack(wfc1_l).astype(jnp.bfloat16), "b_fc1": jnp.stack(bfc1_l),
        "w_fc2": jnp.stack(wfc2_l).astype(jnp.bfloat16), "b_fc2": jnp.stack(bfc2_l),
    }


# -------------------------------- forward pass ------------------------------- #

def clip_encode_image(x_nchw, params):
    """Equivalent of CLIP's model.encode_image(x) (ViT visual tower)."""
    B, C, Himg, Wimg = x_nchw.shape
    p = params["patch"]
    D = params["width"]
    H = params["heads"]
    L = params["layers"]
    hp = params["head_pad"]
    gh, gw = Himg // p, Wimg // p
    N = gh * gw
    T = N + 1
    P = C * p * p
    D3 = params["w_qkv"].shape[-1]
    Hhp = params["w_out"].shape[1]
    Dm = params["w_fc1"].shape[-1]
    outdim = params["proj"].shape[1]

    # Plain-JAX layout glue: space-to-depth patchify + a zero row for the class token
    # (the class embedding itself is folded into pos_cls row 0 at init time).
    patches = (x_nchw.reshape(B, C, gh, p, gw, p)
               .transpose(0, 2, 4, 1, 3, 5)
               .reshape(B, N, P))
    tokens = jnp.concatenate([jnp.zeros((B, 1, P), jnp.float32), patches], axis=1)

    def _rep2(shape):
        return pl.BlockSpec(shape, lambda b, l: (0, 0))

    def _per_layer(shape):
        return pl.BlockSpec((1,) + tuple(shape), lambda b, l: (l, 0, 0))

    grid_spec = pltpu.PrefetchScalarGridSpec(
        num_scalar_prefetch=0,
        grid=(B, L),
        in_specs=[
            pl.BlockSpec((1, T, P), lambda b, l: (b, 0, 0)),   # tokens
            _rep2((P, D)),                                     # conv_w
            _rep2((T, D)),                                     # pos (+cls)
            _rep2((1, D)), _rep2((1, D)),                      # ln_pre g, b
            _per_layer((1, D)), _per_layer((1, D)),            # ln1 g, b
            _per_layer((D, D3)), _per_layer((1, D3)),          # w_qkv, b_qkv
            _per_layer((Hhp, D)), _per_layer((1, D)),          # w_out, b_out
            _per_layer((1, D)), _per_layer((1, D)),            # ln2 g, b
            _per_layer((D, Dm)), _per_layer((1, Dm)),          # w_fc1, b_fc1
            _per_layer((Dm, D)), _per_layer((1, D)),           # w_fc2, b_fc2
            _rep2((1, D)), _rep2((1, D)),                      # ln_post g, b
            _rep2((D, outdim)),                                # proj
        ],
        out_specs=pl.BlockSpec((1, 1, outdim), lambda b, l: (b, 0, 0)),
        scratch_shapes=[pltpu.VMEM((T, D), jnp.float32)],
    )

    out = pl.pallas_call(
        functools.partial(_clip_encode_kernel, heads=H, head_pad=hp, eps=1e-5),
        out_shape=jax.ShapeDtypeStruct((B, 1, outdim), jnp.float32),
        grid_spec=grid_spec,
        compiler_params=pltpu.CompilerParams(
            dimension_semantics=("parallel", "arbitrary"),
            vmem_limit_bytes=64 << 20),
    )(tokens, params["conv_w"], params["pos_cls"],
      params["ln_pre_g"], params["ln_pre_b"],
      params["ln1_g"], params["ln1_b"],
      params["w_qkv"], params["b_qkv"],
      params["w_out"], params["b_out"],
      params["ln2_g"], params["ln2_b"],
      params["w_fc1"], params["b_fc1"],
      params["w_fc2"], params["b_fc2"],
      params["ln_post_g"], params["ln_post_b"],
      params["proj"])
    return out.reshape(B, outdim)


# ------------------------------------ main ------------------------------------ #

if __name__ == "__main__":
    key = jax.random.PRNGKey(0)
    k_params, k_input = jax.random.split(key)

    # Small CLIP-consistent synthetic config (lane-dense feature dims):
    #   B=2 RGB images, 32x32, patch=8 -> 16 patches + cls = 17 tokens,
    #   width=128, 4 heads (head dim 32, lane-padded to 128), 2 layers, output_dim=128.
    params = init_clip_params(
        k_params, in_ch=3, image=32, patch=8, width=128, layers=2, heads=4, outdim=128)
    x = jax.random.normal(k_input, (2, 3, 32, 32), dtype=jnp.float32)  # NCHW like PyTorch

    out = jax.block_until_ready(clip_encode_image(x, params))
    assert out.shape == (2, 128) and out.dtype == jnp.float32
    assert bool(jnp.all(jnp.isfinite(out)))
    print("KERNEL_OK")
</pallas_src>

<mosaic_0001>
module attributes {stable_mosaic.version = 11 : i64} {
  func.func @_clip_encode_kernel(%arg0: i32, %arg1: i32, %arg2: memref<1x17x192xf32, #tpu.memory_space<vmem>>, %arg3: memref<192x128xbf16, #tpu.memory_space<vmem>>, %arg4: memref<17x128xf32, #tpu.memory_space<vmem>>, %arg5: memref<1x128xf32, #tpu.memory_space<vmem>>, %arg6: memref<1x128xf32, #tpu.memory_space<vmem>>, %arg7: memref<1x1x128xf32, #tpu.memory_space<vmem>>, %arg8: memref<1x1x128xf32, #tpu.memory_space<vmem>>, %arg9: memref<1x128x1536xbf16, #tpu.memory_space<vmem>>, %arg10: memref<1x1x1536xf32, #tpu.memory_space<vmem>>, %arg11: memref<1x512x128xbf16, #tpu.memory_space<vmem>>, %arg12: memref<1x1x128xf32, #tpu.memory_space<vmem>>, %arg13: memref<1x1x128xf32, #tpu.memory_space<vmem>>, %arg14: memref<1x1x128xf32, #tpu.memory_space<vmem>>, %arg15: memref<1x128x512xbf16, #tpu.memory_space<vmem>>, %arg16: memref<1x1x512xf32, #tpu.memory_space<vmem>>, %arg17: memref<1x512x128xbf16, #tpu.memory_space<vmem>>, %arg18: memref<1x1x128xf32, #tpu.memory_space<vmem>>, %arg19: memref<1x128xf32, #tpu.memory_space<vmem>>, %arg20: memref<1x128xf32, #tpu.memory_space<vmem>>, %arg21: memref<128x128xbf16, #tpu.memory_space<vmem>>, %arg22: memref<1x1x128xf32, #tpu.memory_space<vmem>>, %arg23: memref<17x128xf32, #tpu.memory_space<vmem>>) attributes {dimension_semantics = [#tpu.dimension_semantics<parallel>, #tpu.dimension_semantics<arbitrary>], iteration_bounds = array<i64: 2, 2>, scalar_prefetch = 0 : i64, scratch_operands = 1 : i64, tpu.core_type = #tpu.core_type<tc>, window_params = [{transform_indices = @transform_0, window_bounds = array<i64: 1, 17, 192>}, {pipeline_mode = #tpu.pipeline_mode<synchronous>, transform_indices = @transform_1, window_bounds = array<i64: 192, 128>}, {pipeline_mode = #tpu.pipeline_mode<synchronous>, transform_indices = @transform_2, window_bounds = array<i64: 17, 128>}, {pipeline_mode = #tpu.pipeline_mode<synchronous>, transform_indices = @transform_3, window_bounds = array<i64: 1, 128>}, {pipeline_mode = #tpu.pipeline_mode<synchronous>, transform_indices = @transform_4, window_bounds = array<i64: 1, 128>}, {transform_indices = @transform_5, window_bounds = array<i64: 1, 1, 128>}, {transform_indices = @transform_6, window_bounds = array<i64: 1, 1, 128>}, {transform_indices = @transform_7, window_bounds = array<i64: 1, 128, 1536>}, {transform_indices = @transform_8, window_bounds = array<i64: 1, 1, 1536>}, {transform_indices = @transform_9, window_bounds = array<i64: 1, 512, 128>}, {transform_indices = @transform_10, window_bounds = array<i64: 1, 1, 128>}, {transform_indices = @transform_11, window_bounds = array<i64: 1, 1, 128>}, {transform_indices = @transform_12, window_bounds = array<i64: 1, 1, 128>}, {transform_indices = @transform_13, window_bounds = array<i64: 1, 128, 512>}, {transform_indices = @transform_14, window_bounds = array<i64: 1, 1, 512>}, {transform_indices = @transform_15, window_bounds = array<i64: 1, 512, 128>}, {transform_indices = @transform_16, window_bounds = array<i64: 1, 1, 128>}, {pipeline_mode = #tpu.pipeline_mode<synchronous>, transform_indices = @transform_17, window_bounds = array<i64: 1, 128>}, {pipeline_mode = #tpu.pipeline_mode<synchronous>, transform_indices = @transform_18, window_bounds = array<i64: 1, 128>}, {pipeline_mode = #tpu.pipeline_mode<synchronous>, transform_indices = @transform_19, window_bounds = array<i64: 128, 128>}, {transform_indices = @transform_20, window_bounds = array<i64: 1, 1, 128>}]} {
    %c0_i32 = arith.constant 0 : i32
    %0 = arith.cmpi eq, %arg1, %c0_i32 : i32
    %1 = arith.extui %0 : i1 to i32
    %c0_i32_0 = arith.constant 0 : i32
    %2 = arith.cmpi ne, %1, %c0_i32_0 : i32
    scf.if %2 {
      %c0_75 = arith.constant 0 : index
      %c0_76 = arith.constant 0 : index
      %c0_77 = arith.constant 0 : index
      %191 = vector.load %arg2[%c0_75, %c0_76, %c0_77] : memref<1x17x192xf32, #tpu.memory_space<vmem>>, vector<1x17x192xf32>
      %192 = vector.shape_cast %191 : vector<1x17x192xf32> to vector<17x192xf32>
      %193 = arith.truncf %192 : vector<17x192xf32> to vector<17x192xbf16>
      %c0_78 = arith.constant 0 : index
      %c0_79 = arith.constant 0 : index
      %194 = vector.load %arg3[%c0_78, %c0_79] : memref<192x128xbf16, #tpu.memory_space<vmem>>, vector<192x128xbf16>
      %cst_80 = arith.constant dense<0.000000e+00> : vector<17x128xf32>
      %195 = tpu.matmul %193, %194, %cst_80 {dimension_numbers = #tpu.dot_dimension_numbers<[1], [0], [0], [1], [0, 0, 1, 1], [], []>} : vector<17x192xbf16>, vector<192x128xbf16>, vector<17x128xf32> -> vector<17x128xf32>
      %c0_81 = arith.constant 0 : index
      %c0_82 = arith.constant 0 : index
      %196 = vector.load %arg4[%c0_81, %c0_82] : memref<17x128xf32, #tpu.memory_space<vmem>>, vector<17x128xf32>
      %197 = arith.addf %195, %196 : vector<17x128xf32>
      %c0_83 = arith.constant 0 : index
      %c0_84 = arith.constant 0 : index
      %198 = vector.load %arg5[%c0_83, %c0_84] : memref<1x128xf32, #tpu.memory_space<vmem>>, vector<1x128xf32>
      %c0_85 = arith.constant 0 : index
      %c0_86 = arith.constant 0 : index
      %199 = vector.load %arg6[%c0_85, %c0_86] : memref<1x128xf32, #tpu.memory_space<vmem>>, vector<1x128xf32>
      %cst_87 = arith.constant dense<0.000000e+00> : vector<17xf32>
      %200 = vector.multi_reduction <add>, %197, %cst_87 [1] : vector<17x128xf32> to vector<17xf32>
      %201 = vector.shape_cast %200 : vector<17xf32> to vector<17x1xf32>
      %cst_88 = arith.constant 1.280000e+02 : f32
      %202 = vector.broadcast %cst_88 : f32 to vector<17x1xf32>
      %203 = arith.divf %201, %202 : vector<17x1xf32>
      %204 = vector.broadcast %203 : vector<17x1xf32> to vector<17x128xf32>
      %205 = arith.subf %197, %204 : vector<17x128xf32>
      %206 = arith.mulf %205, %205 : vector<17x128xf32>
      %cst_89 = arith.constant dense<0.000000e+00> : vector<17xf32>
      %207 = vector.multi_reduction <add>, %206, %cst_89 [1] : vector<17x128xf32> to vector<17xf32>
      %208 = vector.shape_cast %207 : vector<17xf32> to vector<17x1xf32>
      %cst_90 = arith.constant 1.280000e+02 : f32
      %209 = vector.broadcast %cst_90 : f32 to vector<17x1xf32>
      %210 = arith.divf %208, %209 : vector<17x1xf32>
      %211 = vector.broadcast %203 : vector<17x1xf32> to vector<17x128xf32>
      %212 = arith.subf %197, %211 : vector<17x128xf32>
      %cst_91 = arith.constant 9.99999974E-6 : f32
      %213 = vector.broadcast %cst_91 : f32 to vector<17x1xf32>
      %214 = arith.addf %210, %213 : vector<17x1xf32>
      %215 = math.rsqrt %214 : vector<17x1xf32>
      %216 = vector.broadcast %215 : vector<17x1xf32> to vector<17x128xf32>
      %217 = arith.mulf %212, %216 : vector<17x128xf32>
      %218 = vector.broadcast %198 : vector<1x128xf32> to vector<17x128xf32>
      %219 = arith.mulf %217, %218 : vector<17x128xf32>
      %220 = vector.broadcast %199 : vector<1x128xf32> to vector<17x128xf32>
      %221 = arith.addf %219, %220 : vector<17x128xf32>
      %c0_92 = arith.constant 0 : index
      %c0_93 = arith.constant 0 : index
      %222 = vector.load %arg23[%c0_92, %c0_93] : memref<17x128xf32, #tpu.memory_space<vmem>>, vector<17x128xf32>
      tpu.vector_store %arg23[%c0_92, %c0_93], %221 {strides = array<i32>} : memref<17x128xf32, #tpu.memory_space<vmem>>, vector<17x128xf32>,
    } else {
    }
    %c0 = arith.constant 0 : index
    %c0_1 = arith.constant 0 : index
    %3 = vector.load %arg23[%c0, %c0_1] : memref<17x128xf32, #tpu.memory_space<vmem>>, vector<17x128xf32>
    %c0_2 = arith.constant 0 : index
    %c0_3 = arith.constant 0 : index
    %c0_4 = arith.constant 0 : index
    %4 = vector.load %arg7[%c0_2, %c0_3, %c0_4] : memref<1x1x128xf32, #tpu.memory_space<vmem>>, vector<1x1x128xf32>
    %5 = vector.shape_cast %4 : vector<1x1x128xf32> to vector<1x128xf32>
    %c0_5 = arith.constant 0 : index
    %c0_6 = arith.constant 0 : index
    %c0_7 = arith.constant 0 : index
    %6 = vector.load %arg8[%c0_5, %c0_6, %c0_7] : memref<1x1x128xf32, #tpu.memory_space<vmem>>, vector<1x1x128xf32>
    %7 = vector.shape_cast %6 : vector<1x1x128xf32> to vector<1x128xf32>
    %cst = arith.constant dense<0.000000e+00> : vector<17xf32>
    %8 = vector.multi_reduction <add>, %3, %cst [1] : vector<17x128xf32> to vector<17xf32>
    %9 = vector.shape_cast %8 : vector<17xf32> to vector<17x1xf32>
    %cst_8 = arith.constant 1.280000e+02 : f32
    %10 = vector.broadcast %cst_8 : f32 to vector<17x1xf32>
    %11 = arith.divf %9, %10 : vector<17x1xf32>
    %12 = vector.broadcast %11 : vector<17x1xf32> to vector<17x128xf32>
    %13 = arith.subf %3, %12 : vector<17x128xf32>
    %14 = arith.mulf %13, %13 : vector<17x128xf32>
    %cst_9 = arith.constant dense<0.000000e+00> : vector<17xf32>
    %15 = vector.multi_reduction <add>, %14, %cst_9 [1] : vector<17x128xf32> to vector<17xf32>
    %16 = vector.shape_cast %15 : vector<17xf32> to vector<17x1xf32>
    %cst_10 = arith.constant 1.280000e+02 : f32
    %17 = vector.broadcast %cst_10 : f32 to vector<17x1xf32>
    %18 = arith.divf %16, %17 : vector<17x1xf32>
    %19 = vector.broadcast %11 : vector<17x1xf32> to vector<17x128xf32>
    %20 = arith.subf %3, %19 : vector<17x128xf32>
    %cst_11 = arith.constant 9.99999974E-6 : f32
    %21 = vector.broadcast %cst_11 : f32 to vector<17x1xf32>
    %22 = arith.addf %18, %21 : vector<17x1xf32>
    %23 = math.rsqrt %22 : vector<17x1xf32>
    %24 = vector.broadcast %23 : vector<17x1xf32> to vector<17x128xf32>
    %25 = arith.mulf %20, %24 : vector<17x128xf32>
    %26 = vector.broadcast %5 : vector<1x128xf32> to vector<17x128xf32>
    %27 = arith.mulf %25, %26 : vector<17x128xf32>
    %28 = vector.broadcast %7 : vector<1x128xf32> to vector<17x128xf32>
    %29 = arith.addf %27, %28 : vector<17x128xf32>
    %30 = arith.truncf %29 : vector<17x128xf32> to vector<17x128xbf16>
    %c0_12 = arith.constant 0 : index
    %c0_13 = arith.constant 0 : index
    %c0_14 = arith.constant 0 : index
    %31 = vector.load %arg9[%c0_12, %c0_13, %c0_14] : memref<1x128x1536xbf16, #tpu.memory_space<vmem>>, vector<1x128x1536xbf16>
    %32 = vector.shape_cast %31 : vector<1x128x1536xbf16> to vector<128x1536xbf16>
    %cst_15 = arith.constant dense<0.000000e+00> : vector<17x1536xf32>
    %33 = tpu.matmul %30, %32, %cst_15 {dimension_numbers = #tpu.dot_dimension_numbers<[1], [0], [0], [1], [0, 0, 1, 1], [], []>} : vector<17x128xbf16>, vector<128x1536xbf16>, vector<17x1536xf32> -> vector<17x1536xf32>
    %c0_16 = arith.constant 0 : index
    %c0_17 = arith.constant 0 : index
    %c0_18 = arith.constant 0 : index
    %34 = vector.load %arg10[%c0_16, %c0_17, %c0_18] : memref<1x1x1536xf32, #tpu.memory_space<vmem>>, vector<1x1x1536xf32>
    %35 = vector.shape_cast %34 : vector<1x1x1536xf32> to vector<1x1536xf32>
    %36 = vector.broadcast %35 : vector<1x1536xf32> to vector<17x1536xf32>
    %37 = arith.addf %33, %36 : vector<17x1536xf32>
    %c0_19 = arith.constant 0 : index
    %c0_20 = arith.constant 0 : index
    %c0_21 = arith.constant 0 : index
    %38 = vector.load %arg11[%c0_19, %c0_20, %c0_21] : memref<1x512x128xbf16, #tpu.memory_space<vmem>>, vector<1x512x128xbf16>
    %39 = vector.shape_cast %38 : vector<1x512x128xbf16> to vector<512x128xbf16>
    %40 = vector.extract_strided_slice %37 {offsets = [0, 0], sizes = [17, 128], strides = [1, 1]} : vector<17x1536xf32> to vector<17x128xf32>
    %41 = vector.extract_strided_slice %37 {offsets = [0, 512], sizes = [17, 128], strides = [1, 1]} : vector<17x1536xf32> to vector<17x128xf32>
    %42 = vector.extract_strided_slice %37 {offsets = [0, 1024], sizes = [17, 128], strides = [1, 1]} : vector<17x1536xf32> to vector<17x128xf32>
    %43 = arith.truncf %40 : vector<17x128xf32> to vector<17x128xbf16>
    %44 = arith.truncf %41 : vector<17x128xf32> to vector<17x128xbf16>
    %cst_22 = arith.constant dense<0.000000e+00> : vector<17x17xf32>
    %45 = tpu.matmul %43, %44, %cst_22 {dimension_numbers = #tpu.dot_dimension_numbers<[1], [1], [0], [0], [0, 0, 1, 0], [], []>} : vector<17x128xbf16>, vector<17x128xbf16>, vector<17x17xf32> -> vector<17x17xf32>
    %cst_23 = arith.constant dense<0xFF800000> : vector<17xf32>
    %46 = vector.multi_reduction <maximumf>, %45, %cst_23 [1] : vector<17x17xf32> to vector<17xf32>
    %47 = vector.shape_cast %46 : vector<17xf32> to vector<17x1xf32>
    %48 = vector.broadcast %47 : vector<17x1xf32> to vector<17x17xf32>
    %49 = arith.subf %45, %48 : vector<17x17xf32>
    %50 = math.exp %49 : vector<17x17xf32>
    %cst_24 = arith.constant dense<0.000000e+00> : vector<17xf32>
    %51 = vector.multi_reduction <add>, %50, %cst_24 [1] : vector<17x17xf32> to vector<17xf32>
    %52 = vector.shape_cast %51 : vector<17xf32> to vector<17x1xf32>
    %53 = tpu.reciprocal %52 {approx = true} : vector<17x1xf32> -> vector<17x1xf32>
    %54 = vector.broadcast %53 : vector<17x1xf32> to vector<17x17xf32>
    %55 = arith.mulf %50, %54 : vector<17x17xf32>
    %56 = arith.truncf %55 : vector<17x17xf32> to vector<17x17xbf16>
    %57 = arith.truncf %42 : vector<17x128xf32> to vector<17x128xbf16>
    %cst_25 = arith.constant dense<0.000000e+00> : vector<17x128xf32>
    %58 = tpu.matmul %56, %57, %cst_25 {dimension_numbers = #tpu.dot_dimension_numbers<[1], [0], [0], [1], [0, 0, 1, 1], [], []>} : vector<17x17xbf16>, vector<17x128xbf16>, vector<17x128xf32> -> vector<17x128xf32>
    %59 = arith.truncf %58 : vector<17x128xf32> to vector<17x128xbf16>
    %60 = vector.extract_strided_slice %39 {offsets = [0, 0], sizes = [128, 128], strides = [1, 1]} : vector<512x128xbf16> to vector<128x128xbf16>
    %cst_26 = arith.constant dense<0.000000e+00> : vector<17x128xf32>
    %61 = tpu.matmul %59, %60, %cst_26 {dimension_numbers = #tpu.dot_dimension_numbers<[1], [0], [0], [1], [0, 0, 1, 1], [], []>} : vector<17x128xbf16>, vector<128x128xbf16>, vector<17x128xf32> -> vector<17x128xf32>
    %62 = vector.extract_strided_slice %37 {offsets = [0, 128], sizes = [17, 128], strides = [1, 1]} : vector<17x1536xf32> to vector<17x128xf32>
    %63 = vector.extract_strided_slice %37 {offsets = [0, 640], sizes = [17, 128], strides = [1, 1]} : vector<17x1536xf32> to vector<17x128xf32>
    %64 = vector.extract_strided_slice %37 {offsets = [0, 1152], sizes = [17, 128], strides = [1, 1]} : vector<17x1536xf32> to vector<17x128xf32>
    %65 = arith.truncf %62 : vector<17x128xf32> to vector<17x128xbf16>
    %66 = arith.truncf %63 : vector<17x128xf32> to vector<17x128xbf16>
    %cst_27 = arith.constant dense<0.000000e+00> : vector<17x17xf32>
    %67 = tpu.matmul %65, %66, %cst_27 {dimension_numbers = #tpu.dot_dimension_numbers<[1], [1], [0], [0], [0, 0, 1, 0], [], []>} : vector<17x128xbf16>, vector<17x128xbf16>, vector<17x17xf32> -> vector<17x17xf32>
    %cst_28 = arith.constant dense<0xFF800000> : vector<17xf32>
    %68 = vector.multi_reduction <maximumf>, %67, %cst_28 [1] : vector<17x17xf32> to vector<17xf32>
    %69 = vector.shape_cast %68 : vector<17xf32> to vector<17x1xf32>
    %70 = vector.broadcast %69 : vector<17x1xf32> to vector<17x17xf32>
    %71 = arith.subf %67, %70 : vector<17x17xf32>
    %72 = math.exp %71 : vector<17x17xf32>
    %cst_29 = arith.constant dense<0.000000e+00> : vector<17xf32>
    %73 = vector.multi_reduction <add>, %72, %cst_29 [1] : vector<17x17xf32> to vector<17xf32>
    %74 = vector.shape_cast %73 : vector<17xf32> to vector<17x1xf32>
    %75 = tpu.reciprocal %74 {approx = true} : vector<17x1xf32> -> vector<17x1xf32>
    %76 = vector.broadcast %75 : vector<17x1xf32> to vector<17x17xf32>
    %77 = arith.mulf %72, %76 : vector<17x17xf32>
    %78 = arith.truncf %77 : vector<17x17xf32> to vector<17x17xbf16>
    %79 = arith.truncf %64 : vector<17x128xf32> to vector<17x128xbf16>
    %cst_30 = arith.constant dense<0.000000e+00> : vector<17x128xf32>
    %80 = tpu.matmul %78, %79, %cst_30 {dimension_numbers = #tpu.dot_dimension_numbers<[1], [0], [0], [1], [0, 0, 1, 1], [], []>} : vector<17x17xbf16>, vector<17x128xbf16>, vector<17x128xf32> -> vector<17x128xf32>
    %81 = arith.truncf %80 : vector<17x128xf32> to vector<17x128xbf16>
    %82 = vector.extract_strided_slice %39 {offsets = [128, 0], sizes = [128, 128], strides = [1, 1]} : vector<512x128xbf16> to vector<128x128xbf16>
    %cst_31 = arith.constant dense<0.000000e+00> : vector<17x128xf32>
    %83 = tpu.matmul %81, %82, %cst_31 {dimension_numbers = #tpu.dot_dimension_numbers<[1], [0], [0], [1], [0, 0, 1, 1], [], []>} : vector<17x128xbf16>, vector<128x128xbf16>, vector<17x128xf32> -> vector<17x128xf32>
    %84 = arith.addf %61, %83 : vector<17x128xf32>
    %85 = vector.extract_strided_slice %37 {offsets = [0, 256], sizes = [17, 128], strides = [1, 1]} : vector<17x1536xf32> to vector<17x128xf32>
    %86 = vector.extract_strided_slice %37 {offsets = [0, 768], sizes = [17, 128], strides = [1, 1]} : vector<17x1536xf32> to vector<17x128xf32>
    %87 = vector.extract_strided_slice %37 {offsets = [0, 1280], sizes = [17, 128], strides = [1, 1]} : vector<17x1536xf32> to vector<17x128xf32>
    %88 = arith.truncf %85 : vector<17x128xf32> to vector<17x128xbf16>
    %89 = arith.truncf %86 : vector<17x128xf32> to vector<17x128xbf16>
    %cst_32 = arith.constant dense<0.000000e+00> : vector<17x17xf32>
    %90 = tpu.matmul %88, %89, %cst_32 {dimension_numbers = #tpu.dot_dimension_numbers<[1], [1], [0], [0], [0, 0, 1, 0], [], []>} : vector<17x128xbf16>, vector<17x128xbf16>, vector<17x17xf32> -> vector<17x17xf32>
    %cst_33 = arith.constant dense<0xFF800000> : vector<17xf32>
    %91 = vector.multi_reduction <maximumf>, %90, %cst_33 [1] : vector<17x17xf32> to vector<17xf32>
    %92 = vector.shape_cast %91 : vector<17xf32> to vector<17x1xf32>
    %93 = vector.broadcast %92 : vector<17x1xf32> to vector<17x17xf32>
    %94 = arith.subf %90, %93 : vector<17x17xf32>
    %95 = math.exp %94 : vector<17x17xf32>
    %cst_34 = arith.constant dense<0.000000e+00> : vector<17xf32>
    %96 = vector.multi_reduction <add>, %95, %cst_34 [1] : vector<17x17xf32> to vector<17xf32>
    %97 = vector.shape_cast %96 : vector<17xf32> to vector<17x1xf32>
    %98 = tpu.reciprocal %97 {approx = true} : vector<17x1xf32> -> vector<17x1xf32>
    %99 = vector.broadcast %98 : vector<17x1xf32> to vector<17x17xf32>
    %100 = arith.mulf %95, %99 : vector<17x17xf32>
    %101 = arith.truncf %100 : vector<17x17xf32> to vector<17x17xbf16>
    %102 = arith.truncf %87 : vector<17x128xf32> to vector<17x128xbf16>
    %cst_35 = arith.constant dense<0.000000e+00> : vector<17x128xf32>
    %103 = tpu.matmul %101, %102, %cst_35 {dimension_numbers = #tpu.dot_dimension_numbers<[1], [0], [0], [1], [0, 0, 1, 1], [], []>} : vector<17x17xbf16>, vector<17x128xbf16>, vector<17x128xf32> -> vector<17x128xf32>
    %104 = arith.truncf %103 : vector<17x128xf32> to vector<17x128xbf16>
    %105 = vector.extract_strided_slice %39 {offsets = [256, 0], sizes = [128, 128], strides = [1, 1]} : vector<512x128xbf16> to vector<128x128xbf16>
    %cst_36 = arith.constant dense<0.000000e+00> : vector<17x128xf32>
    %106 = tpu.matmul %104, %105, %cst_36 {dimension_numbers = #tpu.dot_dimension_numbers<[1], [0], [0], [1], [0, 0, 1, 1], [], []>} : vector<17x128xbf16>, vector<128x128xbf16>, vector<17x128xf32> -> vector<17x128xf32>
    %107 = arith.addf %84, %106 : vector<17x128xf32>
    %108 = vector.extract_strided_slice %37 {offsets = [0, 384], sizes = [17, 128], strides = [1, 1]} : vector<17x1536xf32> to vector<17x128xf32>
    %109 = vector.extract_strided_slice %37 {offsets = [0, 896], sizes = [17, 128], strides = [1, 1]} : vector<17x1536xf32> to vector<17x128xf32>
    %110 = vector.extract_strided_slice %37 {offsets = [0, 1408], sizes = [17, 128], strides = [1, 1]} : vector<17x1536xf32> to vector<17x128xf32>
    %111 = arith.truncf %108 : vector<17x128xf32> to vector<17x128xbf16>
    %112 = arith.truncf %109 : vector<17x128xf32> to vector<17x128xbf16>
    %cst_37 = arith.constant dense<0.000000e+00> : vector<17x17xf32>
    %113 = tpu.matmul %111, %112, %cst_37 {dimension_numbers = #tpu.dot_dimension_numbers<[1], [1], [0], [0], [0, 0, 1, 0], [], []>} : vector<17x128xbf16>, vector<17x128xbf16>, vector<17x17xf32> -> vector<17x17xf32>
    %cst_38 = arith.constant dense<0xFF800000> : vector<17xf32>
    %114 = vector.multi_reduction <maximumf>, %113, %cst_38 [1] : vector<17x17xf32> to vector<17xf32>
    %115 = vector.shape_cast %114 : vector<17xf32> to vector<17x1xf32>
    %116 = vector.broadcast %115 : vector<17x1xf32> to vector<17x17xf32>
    %117 = arith.subf %113, %116 : vector<17x17xf32>
    %118 = math.exp %117 : vector<17x17xf32>
    %cst_39 = arith.constant dense<0.000000e+00> : vector<17xf32>
    %119 = vector.multi_reduction <add>, %118, %cst_39 [1] : vector<17x17xf32> to vector<17xf32>
    %120 = vector.shape_cast %119 : vector<17xf32> to vector<17x1xf32>
    %121 = tpu.reciprocal %120 {approx = true} : vector<17x1xf32> -> vector<17x1xf32>
    %122 = vector.broadcast %121 : vector<17x1xf32> to vector<17x17xf32>
    %123 = arith.mulf %118, %122 : vector<17x17xf32>
    %124 = arith.truncf %123 : vector<17x17xf32> to vector<17x17xbf16>
    %125 = arith.truncf %110 : vector<17x128xf32> to vector<17x128xbf16>
    %cst_40 = arith.constant dense<0.000000e+00> : vector<17x128xf32>
    %126 = tpu.matmul %124, %125, %cst_40 {dimension_numbers = #tpu.dot_dimension_numbers<[1], [0], [0], [1], [0, 0, 1, 1], [], []>} : vector<17x17xbf16>, vector<17x128xbf16>, vector<17x128xf32> -> vector<17x128xf32>
    %127 = arith.truncf %126 : vector<17x128xf32> to vector<17x128xbf16>
    %128 = vector.extract_strided_slice %39 {offsets = [384, 0], sizes = [128, 128], strides = [1, 1]} : vector<512x128xbf16> to vector<128x128xbf16>
    %cst_41 = arith.constant dense<0.000000e+00> : vector<17x128xf32>
    %129 = tpu.matmul %127, %128, %cst_41 {dimension_numbers = #tpu.dot_dimension_numbers<[1], [0], [0], [1], [0, 0, 1, 1], [], []>} : vector<17x128xbf16>, vector<128x128xbf16>, vector<17x128xf32> -> vector<17x128xf32>
    %130 = arith.addf %107, %129 : vector<17x128xf32>
    %131 = arith.addf %3, %130 : vector<17x128xf32>
    %c0_42 = arith.constant 0 : index
    %c0_43 = arith.constant 0 : index
    %c0_44 = arith.constant 0 : index
    %132 = vector.load %arg12[%c0_42, %c0_43, %c0_44] : memref<1x1x128xf32, #tpu.memory_space<vmem>>, vector<1x1x128xf32>
    %133 = vector.shape_cast %132 : vector<1x1x128xf32> to vector<1x128xf32>
    %134 = vector.broadcast %133 : vector<1x128xf32> to vector<17x128xf32>
    %135 = arith.addf %131, %134 : vector<17x128xf32>
    %c0_45 = arith.constant 0 : index
    %c0_46 = arith.constant 0 : index
    %c0_47 = arith.constant 0 : index
    %136 = vector.load %arg13[%c0_45, %c0_46, %c0_47] : memref<1x1x128xf32, #tpu.memory_space<vmem>>, vector<1x1x128xf32>
    %137 = vector.shape_cast %136 : vector<1x1x128xf32> to vector<1x128xf32>
    %c0_48 = arith.constant 0 : index
    %c0_49 = arith.constant 0 : index
    %c0_50 = arith.constant 0 : index
    %138 = vector.load %arg14[%c0_48, %c0_49, %c0_50] : memref<1x1x128xf32, #tpu.memory_space<vmem>>, vector<1x1x128xf32>
    %139 = vector.shape_cast %138 : vector<1x1x128xf32> to vector<1x128xf32>
    %cst_51 = arith.constant dense<0.000000e+00> : vector<17xf32>
    %140 = vector.multi_reduction <add>, %135, %cst_51 [1] : vector<17x128xf32> to vector<17xf32>
    %141 = vector.shape_cast %140 : vector<17xf32> to vector<17x1xf32>
    %cst_52 = arith.constant 1.280000e+02 : f32
    %142 = vector.broadcast %cst_52 : f32 to vector<17x1xf32>
    %143 = arith.divf %141, %142 : vector<17x1xf32>
    %144 = vector.broadcast %143 : vector<17x1xf32> to vector<17x128xf32>
    %145 = arith.subf %135, %144 : vector<17x128xf32>
    %146 = arith.mulf %145, %145 : vector<17x128xf32>
    %cst_53 = arith.constant dense<0.000000e+00> : vector<17xf32>
    %147 = vector.multi_reduction <add>, %146, %cst_53 [1] : vector<17x128xf32> to vector<17xf32>
    %148 = vector.shape_cast %147 : vector<17xf32> to vector<17x1xf32>
    %cst_54 = arith.constant 1.280000e+02 : f32
    %149 = vector.broadcast %cst_54 : f32 to vector<17x1xf32>
    %150 = arith.divf %148, %149 : vector<17x1xf32>
    %151 = vector.broadcast %143 : vector<17x1xf32> to vector<17x128xf32>
    %152 = arith.subf %135, %151 : vector<17x128xf32>
    %cst_55 = arith.constant 9.99999974E-6 : f32
    %153 = vector.broadcast %cst_55 : f32 to vector<17x1xf32>
    %154 = arith.addf %150, %153 : vector<17x1xf32>
    %155 = math.rsqrt %154 : vector<17x1xf32>
    %156 = vector.broadcast %155 : vector<17x1xf32> to vector<17x128xf32>
    %157 = arith.mulf %152, %156 : vector<17x128xf32>
    %158 = vector.broadcast %137 : vector<1x128xf32> to vector<17x128xf32>
    %159 = arith.mulf %157, %158 : vector<17x128xf32>
    %160 = vector.broadcast %139 : vector<1x128xf32> to vector<17x128xf32>
    %161 = arith.addf %159, %160 : vector<17x128xf32>
    %162 = arith.truncf %161 : vector<17x128xf32> to vector<17x128xbf16>
    %c0_56 = arith.constant 0 : index
    %c0_57 = arith.constant 0 : index
    %c0_58 = arith.constant 0 : index
    %163 = vector.load %arg15[%c0_56, %c0_57, %c0_58] : memref<1x128x512xbf16, #tpu.memory_space<vmem>>, vector<1x128x512xbf16>
    %164 = vector.shape_cast %163 : vector<1x128x512xbf16> to vector<128x512xbf16>
    %cst_59 = arith.constant dense<0.000000e+00> : vector<17x512xf32>
    %165 = tpu.matmul %162, %164, %cst_59 {dimension_numbers = #tpu.dot_dimension_numbers<[1], [0], [0], [1], [0, 0, 1, 1], [], []>} : vector<17x128xbf16>, vector<128x512xbf16>, vector<17x512xf32> -> vector<17x512xf32>
    %c0_60 = arith.constant 0 : index
    %c0_61 = arith.constant 0 : index
    %c0_62 = arith.constant 0 : index
    %166 = vector.load %arg16[%c0_60, %c0_61, %c0_62] : memref<1x1x512xf32, #tpu.memory_space<vmem>>, vector<1x1x512xf32>
    %167 = vector.shape_cast %166 : vector<1x1x512xf32> to vector<1x512xf32>
    %168 = vector.broadcast %167 : vector<1x512xf32> to vector<17x512xf32>
    %169 = arith.addf %165, %168 : vector<17x512xf32>
    %cst_63 = arith.constant 1.702000e+00 : f32
    %170 = vector.broadcast %cst_63 : f32 to vector<17x512xf32>
    %171 = arith.mulf %170, %169 : vector<17x512xf32>
    %172 = arith.negf %171 : vector<17x512xf32>
    %173 = math.exp %172 : vector<17x512xf32>
    %cst_64 = arith.constant 1.000000e+00 : f32
    %174 = vector.broadcast %cst_64 : f32 to vector<17x512xf32>
    %175 = arith.addf %174, %173 : vector<17x512xf32>
    %176 = arith.divf %174, %175 : vector<17x512xf32>
    %177 = arith.mulf %169, %176 : vector<17x512xf32>
    %178 = arith.truncf %177 : vector<17x512xf32> to vector<17x512xbf16>
    %c0_65 = arith.constant 0 : index
    %c0_66 = arith.constant 0 : index
    %c0_67 = arith.constant 0 : index
    %179 = vector.load %arg17[%c0_65, %c0_66, %c0_67] : memref<1x512x128xbf16, #tpu.memory_space<vmem>>, vector<1x512x128xbf16>
    %180 = vector.shape_cast %179 : vector<1x512x128xbf16> to vector<512x128xbf16>
    %cst_68 = arith.constant dense<0.000000e+00> : vector<17x128xf32>
    %181 = tpu.matmul %178, %180, %cst_68 {dimension_numbers = #tpu.dot_dimension_numbers<[1], [0], [0], [1], [0, 0, 1, 1], [], []>} : vector<17x512xbf16>, vector<512x128xbf16>, vector<17x128xf32> -> vector<17x128xf32>
    %182 = arith.addf %135, %181 : vector<17x128xf32>
    %c0_69 = arith.constant 0 : index
    %c0_70 = arith.constant 0 : index
    %c0_71 = arith.constant 0 : index
    %183 = vector.load %arg18[%c0_69, %c0_70, %c0_71] : memref<1x1x128xf32, #tpu.memory_space<vmem>>, vector<1x1x128xf32>
    %184 = vector.shape_cast %183 : vector<1x1x128xf32> to vector<1x128xf32>
    %185 = vector.broadcast %184 : vector<1x128xf32> to vector<17x128xf32>
    %186 = arith.addf %182, %185 : vector<17x128xf32>
    %c0_72 = arith.constant 0 : index
    %c0_73 = arith.constant 0 : index
    %187 = vector.load %arg23[%c0_72, %c0_73] : memref<17x128xf32, #tpu.memory_space<vmem>>, vector<17x128xf32>
    tpu.vector_store %arg23[%c0_72, %c0_73], %186 {strides = array<i32>} : memref<17x128xf32, #tpu.memory_space<vmem>>, vector<17x128xf32>,
    %c1_i32 = arith.constant 1 : i32
    %188 = arith.cmpi eq, %arg1, %c1_i32 : i32
    %189 = arith.extui %188 : i1 to i32
    %c0_i32_74 = arith.constant 0 : i32
    %190 = arith.cmpi ne, %189, %c0_i32_74 : i32
    scf.if %190 {
      %191 = vector.extract_strided_slice %186 {offsets = [0, 0], sizes = [1, 128], strides = [1, 1]} : vector<17x128xf32> to vector<1x128xf32>
      %c0_75 = arith.constant 0 : index
      %c0_76 = arith.constant 0 : index
      %192 = vector.load %arg19[%c0_75, %c0_76] : memref<1x128xf32, #tpu.memory_space<vmem>>, vector<1x128xf32>
      %c0_77 = arith.constant 0 : index
      %c0_78 = arith.constant 0 : index
      %193 = vector.load %arg20[%c0_77, %c0_78] : memref<1x128xf32, #tpu.memory_space<vmem>>, vector<1x128xf32>
      %cst_79 = arith.constant dense<0.000000e+00> : vector<1xf32>
      %194 = vector.multi_reduction <add>, %191, %cst_79 [1] : vector<1x128xf32> to vector<1xf32>
      %195 = vector.shape_cast %194 : vector<1xf32> to vector<1x1xf32>
      %cst_80 = arith.constant 1.280000e+02 : f32
      %196 = vector.broadcast %cst_80 : f32 to vector<1x1xf32>
      %197 = arith.divf %195, %196 : vector<1x1xf32>
      %198 = vector.broadcast %197 : vector<1x1xf32> to vector<1x128xf32>
      %199 = arith.subf %191, %198 : vector<1x128xf32>
      %200 = arith.mulf %199, %199 : vector<1x128xf32>
      %cst_81 = arith.constant dense<0.000000e+00> : vector<1xf32>
      %201 = vector.multi_reduction <add>, %200, %cst_81 [1] : vector<1x128xf32> to vector<1xf32>
      %202 = vector.shape_cast %201 : vector<1xf32> to vector<1x1xf32>
      %cst_82 = arith.constant 1.280000e+02 : f32
      %203 = vector.broadcast %cst_82 : f32 to vector<1x1xf32>
      %204 = arith.divf %202, %203 : vector<1x1xf32>
      %205 = vector.broadcast %197 : vector<1x1xf32> to vector<1x128xf32>
      %206 = arith.subf %191, %205 : vector<1x128xf32>
      %cst_83 = arith.constant 9.99999974E-6 : f32
      %207 = vector.broadcast %cst_83 : f32 to vector<1x1xf32>
      %208 = arith.addf %204, %207 : vector<1x1xf32>
      %209 = math.rsqrt %208 : vector<1x1xf32>
      %210 = vector.broadcast %209 : vector<1x1xf32> to vector<1x128xf32>
      %211 = arith.mulf %206, %210 : vector<1x128xf32>
      %212 = arith.mulf %211, %192 : vector<1x128xf32>
      %213 = arith.addf %212, %193 : vector<1x128xf32>
      %214 = arith.truncf %213 : vector<1x128xf32> to vector<1x128xbf16>
      %c0_84 = arith.constant 0 : index
      %c0_85 = arith.constant 0 : index
      %215 = vector.load %arg21[%c0_84, %c0_85] : memref<128x128xbf16, #tpu.memory_space<vmem>>, vector<128x128xbf16>
      %cst_86 = arith.constant dense<0.000000e+00> : vector<1x128xf32>
      %216 = tpu.matmul %214, %215, %cst_86 {dimension_numbers = #tpu.dot_dimension_numbers<[1], [0], [0], [1], [0, 0, 1, 1], [], []>} : vector<1x128xbf16>, vector<128x128xbf16>, vector<1x128xf32> -> vector<1x128xf32>
      %c0_87 = arith.constant 0 : index
      %c0_88 = arith.constant 0 : index
      %c0_89 = arith.constant 0 : index
      %217 = vector.load %arg22[%c0_87, %c0_88, %c0_89] : memref<1x1x128xf32, #tpu.memory_space<vmem>>, vector<1x1x128xf32>
      %218 = vector.shape_cast %217 : vector<1x1x128xf32> to vector<1x128xf32>
      %219 = vector.shape_cast %216 : vector<1x128xf32> to vector<1x1x128xf32>
      tpu.vector_store %arg22[%c0_87, %c0_88, %c0_89], %219 {strides = array<i32>} : memref<1x1x128xf32, #tpu.memory_space<vmem>>, vector<1x1x128xf32>,
    } else {
    }
    return
  }
  func.func @transform_0(%arg0: i32, %arg1: i32) -> (i32, i32, i32) {
    %c0_i32 = arith.constant 0 : i32
    %c0_i32_0 = arith.constant 0 : i32
    %c0_i32_1 = arith.constant 0 : i32
    return %arg0, %c0_i32, %c0_i32_0 : i32, i32, i32
  }
  func.func @transform_1(%arg0: i32, %arg1: i32) -> (i32, i32) {
    %c0_i32 = arith.constant 0 : i32
    %c0_i32_0 = arith.constant 0 : i32
    %c0_i32_1 = arith.constant 0 : i32
    return %c0_i32, %c0_i32_0 : i32, i32
  }
  func.func @transform_2(%arg0: i32, %arg1: i32) -> (i32, i32) {
    %c0_i32 = arith.constant 0 : i32
    %c0_i32_0 = arith.constant 0 : i32
    %c0_i32_1 = arith.constant 0 : i32
    return %c0_i32, %c0_i32_0 : i32, i32
  }
  func.func @transform_3(%arg0: i32, %arg1: i32) -> (i32, i32) {
    %c0_i32 = arith.constant 0 : i32
    %c0_i32_0 = arith.constant 0 : i32
    %c0_i32_1 = arith.constant 0 : i32
    return %c0_i32, %c0_i32_0 : i32, i32
  }
  func.func @transform_4(%arg0: i32, %arg1: i32) -> (i32, i32) {
    %c0_i32 = arith.constant 0 : i32
    %c0_i32_0 = arith.constant 0 : i32
    %c0_i32_1 = arith.constant 0 : i32
    return %c0_i32, %c0_i32_0 : i32, i32
  }
  func.func @transform_5(%arg0: i32, %arg1: i32) -> (i32, i32, i32) {
    %c0_i32 = arith.constant 0 : i32
    %c0_i32_0 = arith.constant 0 : i32
    %c0_i32_1 = arith.constant 0 : i32
    return %arg1, %c0_i32, %c0_i32_0 : i32, i32, i32
  }
  func.func @transform_6(%arg0: i32, %arg1: i32) -> (i32, i32, i32) {
    %c0_i32 = arith.constant 0 : i32
    %c0_i32_0 = arith.constant 0 : i32
    %c0_i32_1 = arith.constant 0 : i32
    return %arg1, %c0_i32, %c0_i32_0 : i32, i32, i32
  }
  func.func @transform_7(%arg0: i32, %arg1: i32) -> (i32, i32, i32) {
    %c0_i32 = arith.constant 0 : i32
    %c0_i32_0 = arith.constant 0 : i32
    %c0_i32_1 = arith.constant 0 : i32
    return %arg1, %c0_i32, %c0_i32_0 : i32, i32, i32
  }
  func.func @transform_8(%arg0: i32, %arg1: i32) -> (i32, i32, i32) {
    %c0_i32 = arith.constant 0 : i32
    %c0_i32_0 = arith.constant 0 : i32
    %c0_i32_1 = arith.constant 0 : i32
    return %arg1, %c0_i32, %c0_i32_0 : i32, i32, i32
  }
  func.func @transform_9(%arg0: i32, %arg1: i32) -> (i32, i32, i32) {
    %c0_i32 = arith.constant 0 : i32
    %c0_i32_0 = arith.constant 0 : i32
    %c0_i32_1 = arith.constant 0 : i32
    return %arg1, %c0_i32, %c0_i32_0 : i32, i32, i32
  }
  func.func @transform_10(%arg0: i32, %arg1: i32) -> (i32, i32, i32) {
    %c0_i32 = arith.constant 0 : i32
    %c0_i32_0 = arith.constant 0 : i32
    %c0_i32_1 = arith.constant 0 : i32
    return %arg1, %c0_i32, %c0_i32_0 : i32, i32, i32
  }
  func.func @transform_11(%arg0: i32, %arg1: i32) -> (i32, i32, i32) {
    %c0_i32 = arith.constant 0 : i32
    %c0_i32_0 = arith.constant 0 : i32
    %c0_i32_1 = arith.constant 0 : i32
    return %arg1, %c0_i32, %c0_i32_0 : i32, i32, i32
  }
  func.func @transform_12(%arg0: i32, %arg1: i32) -> (i32, i32, i32) {
    %c0_i32 = arith.constant 0 : i32
    %c0_i32_0 = arith.constant 0 : i32
    %c0_i32_1 = arith.constant 0 : i32
    return %arg1, %c0_i32, %c0_i32_0 : i32, i32, i32
  }
  func.func @transform_13(%arg0: i32, %arg1: i32) -> (i32, i32, i32) {
    %c0_i32 = arith.constant 0 : i32
    %c0_i32_0 = arith.constant 0 : i32
    %c0_i32_1 = arith.constant 0 : i32
    return %arg1, %c0_i32, %c0_i32_0 : i32, i32, i32
  }
  func.func @transform_14(%arg0: i32, %arg1: i32) -> (i32, i32, i32) {
    %c0_i32 = arith.constant 0 : i32
    %c0_i32_0 = arith.constant 0 : i32
    %c0_i32_1 = arith.constant 0 : i32
    return %arg1, %c0_i32, %c0_i32_0 : i32, i32, i32
  }
  func.func @transform_15(%arg0: i32, %arg1: i32) -> (i32, i32, i32) {
    %c0_i32 = arith.constant 0 : i32
    %c0_i32_0 = arith.constant 0 : i32
    %c0_i32_1 = arith.constant 0 : i32
    return %arg1, %c0_i32, %c0_i32_0 : i32, i32, i32
  }
  func.func @transform_16(%arg0: i32, %arg1: i32) -> (i32, i32, i32) {
    %c0_i32 = arith.constant 0 : i32
    %c0_i32_0 = arith.constant 0 : i32
    %c0_i32_1 = arith.constant 0 : i32
    return %arg1, %c0_i32, %c0_i32_0 : i32, i32, i32
  }
  func.func @transform_17(%arg0: i32, %arg1: i32) -> (i32, i32) {
    %c0_i32 = arith.constant 0 : i32
    %c0_i32_0 = arith.constant 0 : i32
    %c0_i32_1 = arith.constant 0 : i32
    return %c0_i32, %c0_i32_0 : i32, i32
  }
  func.func @transform_18(%arg0: i32, %arg1: i32) -> (i32, i32) {
    %c0_i32 = arith.constant 0 : i32
    %c0_i32_0 = arith.constant 0 : i32
    %c0_i32_1 = arith.constant 0 : i32
    return %c0_i32, %c0_i32_0 : i32, i32
  }
  func.func @transform_19(%arg0: i32, %arg1: i32) -> (i32, i32) {
    %c0_i32 = arith.constant 0 : i32
    %c0_i32_0 = arith.constant 0 : i32
    %c0_i32_1 = arith.constant 0 : i32
    return %c0_i32, %c0_i32_0 : i32, i32
  }
  func.func @transform_20(%arg0: i32, %arg1: i32) -> (i32, i32, i32) {
    %c0_i32 = arith.constant 0 : i32
    %c0_i32_0 = arith.constant 0 : i32
    %c0_i32_1 = arith.constant 0 : i32
    return %arg0, %c0_i32, %c0_i32_0 : i32, i32, i32
  }
}

</mosaic_0001>

<llo_original>
// kernel: tpu_custom_call.1
$region0: #{tpu_custom_call.1}
  #allocation0 [shape = 'u32[]', space=smem, size = 0x4, offset = 0x4, fixed_abs, tag = 'smem constant byte address 0x4 - core index']
  #allocation1 [shape = 'u32[144,128]{1,0:T(1,128)}', space=vmem, size = 0x12000, scoped, tag = 'internal scratch']
  #allocation2 [shape = 'f32[17,128]{1,0:T(8,128)}', space=vmem, size = 0x3000, scoped, tag = 'scratch operand']
  %s0 = inlined_call_operand.vmem [shape: f32[2,17,192], index: 0, kind: input, shape index: {}]
  %s1 = inlined_call_operand.vmem [shape: bf16[192,128], index: 1, kind: input, shape index: {}]
  %s2 = inlined_call_operand.hbm [shape: f32[17,128], index: 2, kind: input, shape index: {}]
  %s3 = inlined_call_operand.hbm [shape: f32[1,128], index: 3, kind: input, shape index: {}]
  %s4 = inlined_call_operand.hbm [shape: f32[1,128], index: 4, kind: input, shape index: {}]
  %s5 = inlined_call_operand.vmem [shape: f32[2,1,128], index: 5, kind: input, shape index: {}]
  %s6 = inlined_call_operand.vmem [shape: f32[2,1,128], index: 6, kind: input, shape index: {}]
  %s7 = inlined_call_operand.hbm [shape: bf16[2,128,1536], index: 7, kind: input, shape index: {}]
  %s8 = inlined_call_operand.hbm [shape: f32[2,1,1536], index: 8, kind: input, shape index: {}]
  %s9 = inlined_call_operand.hbm [shape: bf16[2,512,128], index: 9, kind: input, shape index: {}]
  %s10 = inlined_call_operand.vmem [shape: f32[2,1,128], index: 10, kind: input, shape index: {}]
  %s11 = inlined_call_operand.vmem [shape: f32[2,1,128], index: 11, kind: input, shape index: {}]
  %s12 = inlined_call_operand.vmem [shape: f32[2,1,128], index: 12, kind: input, shape index: {}]
  %s13 = inlined_call_operand.hbm [shape: bf16[2,128,512], index: 13, kind: input, shape index: {}]
  %s14 = inlined_call_operand.vmem [shape: f32[2,1,512], index: 14, kind: input, shape index: {}]
  %s15 = inlined_call_operand.hbm [shape: bf16[2,512,128], index: 15, kind: input, shape index: {}]
  %s16 = inlined_call_operand.vmem [shape: f32[2,1,128], index: 16, kind: input, shape index: {}]
  %s17 = inlined_call_operand.vmem [shape: f32[1,128], index: 17, kind: input, shape index: {}]
  %s18 = inlined_call_operand.vmem [shape: f32[1,128], index: 18, kind: input, shape index: {}]
  %s19 = inlined_call_operand.vmem [shape: bf16[128,128], index: 19, kind: input, shape index: {}]
  %s20 = inlined_call_operand.hbm [shape: f32[2,1,128], index: 20, kind: output, shape index: {}]
  %s21 = sld [smem:[#allocation0]]
  $region153: #{tpu_custom_call.1} parent=0
    _
  %s23 = ssub.s32 1, %s21
  %s24 = scalar_select 0, %s23, %s21
  $region1: #{tpu_custom_call.1} parent=0
    #allocation3 [shape = 'u8[12288]{0}', space=vmem, size = 0x3000, scoped, tag = 'input window, operand 2, single buffered']
    #allocation4 [shape = 's32[2]{0}', space=sflag, size = 0x8, scoped, tag = 'scoped memory for tpu_custom_call.1']
    #allocation5 [shape = 's32[2]{0}', space=sflag, size = 0x8, scoped, tag = 'scoped memory for tpu_custom_call.1']
    #allocation6 [shape = 'u8[512]{0}', space=vmem, size = 0x400, scoped, tag = 'input window, operand 3, single buffered']
    #allocation7 [shape = 's32[1]{0}', space=sflag, size = 0x4, scoped, tag = 'scoped memory for tpu_custom_call.1']
    #allocation8 [shape = 'u8[512]{0}', space=vmem, size = 0x400, scoped, tag = 'input window, operand 4, single buffered']
    #allocation9 [shape = 'u8[786432]{0}', space=vmem, size = 0xc0000, scoped, tag = 'input window, operand 7']
    #allocation10 [shape = 's32[2]{0}', space=sflag, size = 0x8, scoped, tag = 'scoped memory for tpu_custom_call.1']
    #allocation11 [shape = 'u8[12288]{0}', space=vmem, size = 0x3000, scoped, tag = 'input window, operand 8']
    #allocation12 [shape = 'u8[262144]{0}', space=vmem, size = 0x40000, scoped, tag = 'input window, operand 9']
    #allocation13 [shape = 's32[2]{0}', space=sflag, size = 0x8, scoped, tag = 'scoped memory for tpu_custom_call.1']
    #allocation14 [shape = 'u8[262144]{0}', space=vmem, size = 0x40000, scoped, tag = 'input window, operand 13']
    #allocation15 [shape = 'u8[262144]{0}', space=vmem, size = 0x40000, scoped, tag = 'input window, operand 15']
    #allocation16 [shape = 's32[2]{0}', space=sflag, size = 0x8, scoped, tag = 'scoped memory for tpu_custom_call.1']
    #allocation17 [shape = 'u8[1024]{0}', space=vmem, size = 0x400, scoped, tag = 'output window, operand 0']
    %25 = vsyncpa [#allocation4], 0
    %26 = vsyncpa [#allocation7], 0
    %27 = vsyncpa [#allocation10], 0
    %s28 = scalar_lea.sflag [#allocation10], 1
    %29 = vsyncpa %s28, 0
    %30 = vsyncpa [#allocation13], 0
    %s31 = scalar_lea.sflag [#allocation13], 1
    %32 = vsyncpa %s31, 0
    %33 = vsyncpa [#allocation16], 0
    %s34 = scalar_lea.sflag [#allocation16], 1
    %35 = vsyncpa %s34, 0
    %36 = vsyncpa [#allocation5], 0
    %s37 = scalar_lea.sflag [#allocation5], 1
    %38 = vsyncpa %s37, 0
    loop: start=0, step=1, limit=6
    $region2: #{tpu_custom_call.1} parent=1 // loop_pre_header
      _
    $region3: #{tpu_custom_call.1} parent=1 // loop_header
      %s40 = sphi 0, %s44
      %p41 = scmp.ge.s32.totalorder %s40, 6
      %s47 = sphi 0, %s59
      %s48 = sphi 0, %s55
      %s49 = sphi 0, %s47
      %s50 = sphi 0, %s48
      %s51 = sphi 0, %s49
      %s52 = sphi 0, %s50
      %s62 = sphi 0, %s64
      %s65 = sphi 0, %s62
      %s66 = sphi 0, %s65
      %s82 = sphi 0, %s66
      %s86 = sphi 0, %s86
      %s88 = sphi 0, %s86
      %s89 = sphi 0, %s88
      %s103 = sphi 0, %s89
      %s107 = sphi 0, %s107
      %s109 = sphi 0, %s107
      %s110 = sphi 0, %s109
      %s124 = sphi 0, %s110
      %s128 = sphi 0, %s128
      %s130 = sphi 0, %s128
      %s131 = sphi 0, %s130
      %s145 = sphi 0, %s131
      %s149 = sphi 0, %s149
      %s151 = sphi 0, %s149
      %s152 = sphi 0, %s151
      %s166 = sphi 0, %s152
      %s172 = sphi 0, %s174
      %s175 = sphi 0, %s172
      %s176 = sphi 0, %s175
      %s192 = sphi 0, %s176
      %s198 = sphi 0, %s200
      %s201 = sphi 0, %s198
      %s202 = sphi 0, %s201
      %s218 = sphi 0, %s202
      %s224 = sphi 0, %s226
      %s227 = sphi 0, %s224
      %s228 = sphi 0, %s227
      %s244 = sphi 0, %s228
      %s250 = sphi 0, %s252
      %s253 = sphi 0, %s250
      %s254 = sphi 0, %s253
      %s270 = sphi 0, %s254
      %s276 = sphi 0, %s278
      %s279 = sphi 0, %s276
      %s280 = sphi 0, %s279
      %s296 = sphi 0, %s280
      %s302 = sphi 0, %s304
      %s305 = sphi 0, %s302
      %s306 = sphi 0, %s305
      %s322 = sphi 0, %s306
      %s328 = sphi 0, %s330
      %s331 = sphi 0, %s328
      %s332 = sphi 0, %s331
      %s348 = sphi 0, %s332
      %s354 = sphi 0, %s356
      %s357 = sphi 0, %s354
      %s358 = sphi 0, %s357
      %s374 = sphi 0, %s358
      %s380 = sphi 0, %s382
      %s383 = sphi 0, %s380
      %s384 = sphi 0, %s383
      %s400 = sphi 0, %s384
      %s406 = sphi 0, %s408
      %s409 = sphi 0, %s406
      %s410 = sphi 0, %s409
      %s426 = sphi 0, %s410
      %s432 = sphi 0, %s434
      %s435 = sphi 0, %s432
      %s436 = sphi 0, %s435
      %s452 = sphi 0, %s436
      %s458 = sphi 0, %s460
      %s461 = sphi 0, %s458
      %s462 = sphi 0, %s461
      %s478 = sphi 0, %s462
      %s482 = sphi 0, %s482
      %s484 = sphi 0, %s482
      %s485 = sphi 0, %s484
      %s499 = sphi 0, %s485
      %s503 = sphi 0, %s503
      %s505 = sphi 0, %s503
      %s506 = sphi 0, %s505
      %s520 = sphi 0, %s506
      %s524 = sphi 0, %s524
      %s526 = sphi 0, %s524
      %s527 = sphi 0, %s526
      %s541 = sphi 0, %s527
      %s547 = sphi 0, %s549
      %s550 = sphi 0, %s547
      %s551 = sphi 0, %s550
      %s567 = sphi 0, %s551
    $region4: #{tpu_custom_call.1} parent=1 // loop_header_branch
      %43 = sbr.rel (%p41) target = $region8
    $region5: #{tpu_custom_call.1} parent=1 // loop_body
      %s45 = ssub.s32 %s40, 1
      %s46 = ssub.s32 %s40, 2
      %s53 = sadd.s32 1, %s48
      %p54 = scmp.ge.s32.totalorder %s53, 2
      %s55 = scalar_select %p54, 0, %s53
      %s56 = sadd.s32 1, %s47
      %s57 = scalar_select %p54, %s56, %s47
      %p58 = scmp.ge.s32.totalorder %s57, 2
      %s59 = scalar_select %p58, 0, %s57
      %s60 = ssub.s32 %s47, %s59
      %p61 = scmp.eq.s32.totalorder %s60, 0
      %s63 = sadd.s32 %s62, 1
      %s64 = scalar_select %p61, %s62, %s63
      %p67 = pneg %p61
      %p68 = scmp.eq.s32.totalorder %s40, 3
      %p69 = por %p67, %p68
      %p70 = scmp.ne.s32.totalorder %s62, %s65
      %p71 = scmp.eq.s32.totalorder %s40, 0
      %p72 = por %p70, %p71
      %p73 = scmp.ne.s32.totalorder %s62, %s65
      %p74 = scmp.eq.s32.totalorder %s45, 3
      %p75 = por %p73, %p74
      %p76 = scmp.ne.s32.totalorder %s65, %s66
      %p77 = scmp.eq.s32.totalorder %s45, 0
      %p78 = por %p76, %p77
      %p79 = scmp.ne.s32.totalorder %s65, %s66
      %p80 = scmp.eq.s32.totalorder %s46, 3
      %p81 = por %p79, %p80
      %p83 = scmp.ne.s32.totalorder %s66, %s82
      %p84 = scmp.eq.s32.totalorder %s46, 0
      %p85 = por %p83, %p84
      %s87 = sadd.s32 %s86, 1
      %p90 = scmp.eq.s32.totalorder %s40, 3
      %p91 = scmp.ne.s32.totalorder %s86, %s88
      %p92 = scmp.eq.s32.totalorder %s40, 0
      %p93 = por %p91, %p92
      %p94 = scmp.ne.s32.totalorder %s86, %s88
      %p95 = scmp.eq.s32.totalorder %s45, 3
      %p96 = por %p94, %p95
      %p97 = scmp.ne.s32.totalorder %s88, %s89
      %p98 = scmp.eq.s32.totalorder %s45, 0
      %p99 = por %p97, %p98
      %p100 = scmp.ne.s32.totalorder %s88, %s89
      %p101 = scmp.eq.s32.totalorder %s46, 3
      %p102 = por %p100, %p101
      %p104 = scmp.ne.s32.totalorder %s89, %s103
      %p105 = scmp.eq.s32.totalorder %s46, 0
      %p106 = por %p104, %p105
      %s108 = sadd.s32 %s107, 1
      %p111 = scmp.eq.s32.totalorder %s40, 3
      %p112 = scmp.ne.s32.totalorder %s107, %s109
      %p113 = scmp.eq.s32.totalorder %s40, 0
      %p114 = por %p112, %p113
      %p115 = scmp.ne.s32.totalorder %s107, %s109
      %p116 = scmp.eq.s32.totalorder %s45, 3
      %p117 = por %p115, %p116
      %p118 = scmp.ne.s32.totalorder %s109, %s110
      %p119 = scmp.eq.s32.totalorder %s45, 0
      %p120 = por %p118, %p119
      %p121 = scmp.ne.s32.totalorder %s109, %s110
      %p122 = scmp.eq.s32.totalorder %s46, 3
      %p123 = por %p121, %p122
      %p125 = scmp.ne.s32.totalorder %s110, %s124
      %p126 = scmp.eq.s32.totalorder %s46, 0
      %p127 = por %p125, %p126
      %s129 = sadd.s32 %s128, 1
      %p132 = scmp.eq.s32.totalorder %s40, 3
      %p133 = scmp.ne.s32.totalorder %s128, %s130
      %p134 = scmp.eq.s32.totalorder %s40, 0
      %p135 = por %p133, %p134
      %p136 = scmp.ne.s32.totalorder %s128, %s130
      %p137 = scmp.eq.s32.totalorder %s45, 3
      %p138 = por %p136, %p137
      %p139 = scmp.ne.s32.totalorder %s130, %s131
      %p140 = scmp.eq.s32.totalorder %s45, 0
      %p141 = por %p139, %p140
      %p142 = scmp.ne.s32.totalorder %s130, %s131
      %p143 = scmp.eq.s32.totalorder %s46, 3
      %p144 = por %p142, %p143
      %p146 = scmp.ne.s32.totalorder %s131, %s145
      %p147 = scmp.eq.s32.totalorder %s46, 0
      %p148 = por %p146, %p147
      %s150 = sadd.s32 %s149, 1
      %p153 = scmp.eq.s32.totalorder %s40, 3
      %p154 = scmp.ne.s32.totalorder %s149, %s151
      %p155 = scmp.eq.s32.totalorder %s40, 0
      %p156 = por %p154, %p155
      %p157 = scmp.ne.s32.totalorder %s149, %s151
      %p158 = scmp.eq.s32.totalorder %s45, 3
      %p159 = por %p157, %p158
      %p160 = scmp.ne.s32.totalorder %s151, %s152
      %p161 = scmp.eq.s32.totalorder %s45, 0
      %p162 = por %p160, %p161
      %p163 = scmp.ne.s32.totalorder %s151, %s152
      %p164 = scmp.eq.s32.totalorder %s46, 3
      %p165 = por %p163, %p164
      %p167 = scmp.ne.s32.totalorder %s152, %s166
      %p168 = scmp.eq.s32.totalorder %s46, 0
      %p169 = por %p167, %p168
      %s170 = ssub.s32 %s48, %s55
      %p171 = scmp.eq.s32.totalorder %s170, 0
      %s173 = sadd.s32 %s172, 1
      %s174 = scalar_select %p171, %s172, %s173
      %p177 = pneg %p171
      %p178 = scmp.eq.s32.totalorder %s40, 3
      %p179 = por %p177, %p178
      %p180 = scmp.ne.s32.totalorder %s172, %s175
      %p181 = scmp.eq.s32.totalorder %s40, 0
      %p182 = por %p180, %p181
      %p183 = scmp.ne.s32.totalorder %s172, %s175
      %p184 = scmp.eq.s32.totalorder %s45, 3
      %p185 = por %p183, %p184
      %p186 = scmp.ne.s32.totalorder %s175, %s176
      %p187 = scmp.eq.s32.totalorder %s45, 0
      %p188 = por %p186, %p187
      %p189 = scmp.ne.s32.totalorder %s175, %s176
      %p190 = scmp.eq.s32.totalorder %s46, 3
      %p191 = por %p189, %p190
      %p193 = scmp.ne.s32.totalorder %s176, %s192
      %p194 = scmp.eq.s32.totalorder %s46, 0
      %p195 = por %p193, %p194
      %s196 = ssub.s32 %s48, %s55
      %p197 = scmp.eq.s32.totalorder %s196, 0
      %s199 = sadd.s32 %s198, 1
      %s200 = scalar_select %p197, %s198, %s199
      %p203 = pneg %p197
      %p204 = scmp.eq.s32.totalorder %s40, 3
      %p205 = por %p203, %p204
      %p206 = scmp.ne.s32.totalorder %s198, %s201
      %p207 = scmp.eq.s32.totalorder %s40, 0
      %p208 = por %p206, %p207
      %p209 = scmp.ne.s32.totalorder %s198, %s201
      %p210 = scmp.eq.s32.totalorder %s45, 3
      %p211 = por %p209, %p210
      %p212 = scmp.ne.s32.totalorder %s201, %s202
      %p213 = scmp.eq.s32.totalorder %s45, 0
      %p214 = por %p212, %p213
      %p215 = scmp.ne.s32.totalorder %s201, %s202
      %p216 = scmp.eq.s32.totalorder %s46, 3
      %p217 = por %p215, %p216
      %p219 = scmp.ne.s32.totalorder %s202, %s218
      %p220 = scmp.eq.s32.totalorder %s46, 0
      %p221 = por %p219, %p220
      %s222 = ssub.s32 %s48, %s55
      %p223 = scmp.eq.s32.totalorder %s222, 0
      %s225 = sadd.s32 %s224, 1
      %s226 = scalar_select %p223, %s224, %s225
      %p229 = pneg %p223
      %p230 = scmp.eq.s32.totalorder %s40, 3
      %p231 = por %p229, %p230
      %p232 = scmp.ne.s32.totalorder %s224, %s227
      %p233 = scmp.eq.s32.totalorder %s40, 0
      %p234 = por %p232, %p233
      %p235 = scmp.ne.s32.totalorder %s224, %s227
      %p236 = scmp.eq.s32.totalorder %s45, 3
      %p237 = por %p235, %p236
      %p238 = scmp.ne.s32.totalorder %s227, %s228
      %p239 = scmp.eq.s32.totalorder %s45, 0
      %p240 = por %p238, %p239
      %p241 = scmp.ne.s32.totalorder %s227, %s228
      %p242 = scmp.eq.s32.totalorder %s46, 3
      %p243 = por %p241, %p242
      %p245 = scmp.ne.s32.totalorder %s228, %s244
      %p246 = scmp.eq.s32.totalorder %s46, 0
      %p247 = por %p245, %p246
      %s248 = ssub.s32 %s48, %s55
      %p249 = scmp.eq.s32.totalorder %s248, 0
      %s251 = sadd.s32 %s250, 1
      %s252 = scalar_select %p249, %s250, %s251
      %p255 = pneg %p249
      %p256 = scmp.eq.s32.totalorder %s40, 3
      %p257 = por %p255, %p256
      %p258 = scmp.ne.s32.totalorder %s250, %s253
      %p259 = scmp.eq.s32.totalorder %s40, 0
      %p260 = por %p258, %p259
      %p261 = scmp.ne.s32.totalorder %s250, %s253
      %p262 = scmp.eq.s32.totalorder %s45, 3
      %p263 = por %p261, %p262
      %p264 = scmp.ne.s32.totalorder %s253, %s254
      %p265 = scmp.eq.s32.totalorder %s45, 0
      %p266 = por %p264, %p265
      %p267 = scmp.ne.s32.totalorder %s253, %s254
      %p268 = scmp.eq.s32.totalorder %s46, 3
      %p269 = por %p267, %p268
      %p271 = scmp.ne.s32.totalorder %s254, %s270
      %p272 = scmp.eq.s32.totalorder %s46, 0
      %p273 = por %p271, %p272
      %s274 = ssub.s32 %s48, %s55
      %p275 = scmp.eq.s32.totalorder %s274, 0
      %s277 = sadd.s32 %s276, 1
      %s278 = scalar_select %p275, %s276, %s277
      %p281 = pneg %p275
      %p282 = scmp.eq.s32.totalorder %s40, 3
      %p283 = por %p281, %p282
      %p284 = scmp.ne.s32.totalorder %s276, %s279
      %p285 = scmp.eq.s32.totalorder %s40, 0
      %p286 = por %p284, %p285
      %p287 = scmp.ne.s32.totalorder %s276, %s279
      %p288 = scmp.eq.s32.totalorder %s45, 3
      %p289 = por %p287, %p288
      %p290 = scmp.ne.s32.totalorder %s279, %s280
      %p291 = scmp.eq.s32.totalorder %s45, 0
      %p292 = por %p290, %p291
      %p293 = scmp.ne.s32.totalorder %s279, %s280
      %p294 = scmp.eq.s32.totalorder %s46, 3
      %p295 = por %p293, %p294
      %p297 = scmp.ne.s32.totalorder %s280, %s296
      %p298 = scmp.eq.s32.totalorder %s46, 0
      %p299 = por %p297, %p298
      %s300 = ssub.s32 %s48, %s55
      %p301 = scmp.eq.s32.totalorder %s300, 0
      %s303 = sadd.s32 %s302, 1
      %s304 = scalar_select %p301, %s302, %s303
      %p307 = pneg %p301
      %p308 = scmp.eq.s32.totalorder %s40, 3
      %p309 = por %p307, %p308
      %p310 = scmp.ne.s32.totalorder %s302, %s305
      %p311 = scmp.eq.s32.totalorder %s40, 0
      %p312 = por %p310, %p311
      %p313 = scmp.ne.s32.totalorder %s302, %s305
      %p314 = scmp.eq.s32.totalorder %s45, 3
      %p315 = por %p313, %p314
      %p316 = scmp.ne.s32.totalorder %s305, %s306
      %p317 = scmp.eq.s32.totalorder %s45, 0
      %p318 = por %p316, %p317
      %p319 = scmp.ne.s32.totalorder %s305, %s306
      %p320 = scmp.eq.s32.totalorder %s46, 3
      %p321 = por %p319, %p320
      %p323 = scmp.ne.s32.totalorder %s306, %s322
      %p324 = scmp.eq.s32.totalorder %s46, 0
      %p325 = por %p323, %p324
      %s326 = ssub.s32 %s48, %s55
      %p327 = scmp.eq.s32.totalorder %s326, 0
      %s329 = sadd.s32 %s328, 1
      %s330 = scalar_select %p327, %s328, %s329
      %p333 = pneg %p327
      %p334 = scmp.eq.s32.totalorder %s40, 3
      %p335 = por %p333, %p334
      %p336 = scmp.ne.s32.totalorder %s328, %s331
      %p337 = scmp.eq.s32.totalorder %s40, 0
      %p338 = por %p336, %p337
      %p339 = scmp.ne.s32.totalorder %s328, %s331
      %p340 = scmp.eq.s32.totalorder %s45, 3
      %p341 = por %p339, %p340
      %p342 = scmp.ne.s32.totalorder %s331, %s332
      %p343 = scmp.eq.s32.totalorder %s45, 0
      %p344 = por %p342, %p343
      %p345 = scmp.ne.s32.totalorder %s331, %s332
      %p346 = scmp.eq.s32.totalorder %s46, 3
      %p347 = por %p345, %p346
      %p349 = scmp.ne.s32.totalorder %s332, %s348
      %p350 = scmp.eq.s32.totalorder %s46, 0
      %p351 = por %p349, %p350
      %s352 = ssub.s32 %s48, %s55
      %p353 = scmp.eq.s32.totalorder %s352, 0
      %s355 = sadd.s32 %s354, 1
      %s356 = scalar_select %p353, %s354, %s355
      %p359 = pneg %p353
      %p360 = scmp.eq.s32.totalorder %s40, 3
      %p361 = por %p359, %p360
      %p362 = scmp.ne.s32.totalorder %s354, %s357
      %p363 = scmp.eq.s32.totalorder %s40, 0
      %p364 = por %p362, %p363
      %p365 = scmp.ne.s32.totalorder %s354, %s357
      %p366 = scmp.eq.s32.totalorder %s45, 3
      %p367 = por %p365, %p366
      %p368 = scmp.ne.s32.totalorder %s357, %s358
      %p369 = scmp.eq.s32.totalorder %s45, 0
      %p370 = por %p368, %p369
      %p371 = scmp.ne.s32.totalorder %s357, %s358
      %p372 = scmp.eq.s32.totalorder %s46, 3
      %p373 = por %p371, %p372
      %p375 = scmp.ne.s32.totalorder %s358, %s374
      %p376 = scmp.eq.s32.totalorder %s46, 0
      %p377 = por %p375, %p376
      %s378 = ssub.s32 %s48, %s55
      %p379 = scmp.eq.s32.totalorder %s378, 0
      %s381 = sadd.s32 %s380, 1
      %s382 = scalar_select %p379, %s380, %s381
      %p385 = pneg %p379
      %p386 = scmp.eq.s32.totalorder %s40, 3
      %p387 = por %p385, %p386
      %p388 = scmp.ne.s32.totalorder %s380, %s383
      %p389 = scmp.eq.s32.totalorder %s40, 0
      %p390 = por %p388, %p389
      %p391 = scmp.ne.s32.totalorder %s380, %s383
      %p392 = scmp.eq.s32.totalorder %s45, 3
      %p393 = por %p391, %p392
      %p394 = scmp.ne.s32.totalorder %s383, %s384
      %p395 = scmp.eq.s32.totalorder %s45, 0
      %p396 = por %p394, %p395
      %p397 = scmp.ne.s32.totalorder %s383, %s384
      %p398 = scmp.eq.s32.totalorder %s46, 3
      %p399 = por %p397, %p398
      %p401 = scmp.ne.s32.totalorder %s384, %s400
      %p402 = scmp.eq.s32.totalorder %s46, 0
      %p403 = por %p401, %p402
      %s404 = ssub.s32 %s48, %s55
      %p405 = scmp.eq.s32.totalorder %s404, 0
      %s407 = sadd.s32 %s406, 1
      %s408 = scalar_select %p405, %s406, %s407
      %p411 = pneg %p405
      %p412 = scmp.eq.s32.totalorder %s40, 3
      %p413 = por %p411, %p412
      %p414 = scmp.ne.s32.totalorder %s406, %s409
      %p415 = scmp.eq.s32.totalorder %s40, 0
      %p416 = por %p414, %p415
      %p417 = scmp.ne.s32.totalorder %s406, %s409
      %p418 = scmp.eq.s32.totalorder %s45, 3
      %p419 = por %p417, %p418
      %p420 = scmp.ne.s32.totalorder %s409, %s410
      %p421 = scmp.eq.s32.totalorder %s45, 0
      %p422 = por %p420, %p421
      %p423 = scmp.ne.s32.totalorder %s409, %s410
      %p424 = scmp.eq.s32.totalorder %s46, 3
      %p425 = por %p423, %p424
      %p427 = scmp.ne.s32.totalorder %s410, %s426
      %p428 = scmp.eq.s32.totalorder %s46, 0
      %p429 = por %p427, %p428
      %s430 = ssub.s32 %s48, %s55
      %p431 = scmp.eq.s32.totalorder %s430, 0
      %s433 = sadd.s32 %s432, 1
      %s434 = scalar_select %p431, %s432, %s433
      %p437 = pneg %p431
      %p438 = scmp.eq.s32.totalorder %s40, 3
      %p439 = por %p437, %p438
      %p440 = scmp.ne.s32.totalorder %s432, %s435
      %p441 = scmp.eq.s32.totalorder %s40, 0
      %p442 = por %p440, %p441
      %p443 = scmp.ne.s32.totalorder %s432, %s435
      %p444 = scmp.eq.s32.totalorder %s45, 3
      %p445 = por %p443, %p444
      %p446 = scmp.ne.s32.totalorder %s435, %s436
      %p447 = scmp.eq.s32.totalorder %s45, 0
      %p448 = por %p446, %p447
      %p449 = scmp.ne.s32.totalorder %s435, %s436
      %p450 = scmp.eq.s32.totalorder %s46, 3
      %p451 = por %p449, %p450
      %p453 = scmp.ne.s32.totalorder %s436, %s452
      %p454 = scmp.eq.s32.totalorder %s46, 0
      %p455 = por %p453, %p454
      %s456 = ssub.s32 %s48, %s55
      %p457 = scmp.eq.s32.totalorder %s456, 0
      %s459 = sadd.s32 %s458, 1
      %s460 = scalar_select %p457, %s458, %s459
      %p463 = pneg %p457
      %p464 = scmp.eq.s32.totalorder %s40, 3
      %p465 = por %p463, %p464
      %p466 = scmp.ne.s32.totalorder %s458, %s461
      %p467 = scmp.eq.s32.totalorder %s40, 0
      %p468 = por %p466, %p467
      %p469 = scmp.ne.s32.totalorder %s458, %s461
      %p470 = scmp.eq.s32.totalorder %s45, 3
      %p471 = por %p469, %p470
      %p472 = scmp.ne.s32.totalorder %s461, %s462
      %p473 = scmp.eq.s32.totalorder %s45, 0
      %p474 = por %p472, %p473
      %p475 = scmp.ne.s32.totalorder %s461, %s462
      %p476 = scmp.eq.s32.totalorder %s46, 3
      %p477 = por %p475, %p476
      %p479 = scmp.ne.s32.totalorder %s462, %s478
      %p480 = scmp.eq.s32.totalorder %s46, 0
      %p481 = por %p479, %p480
      %s483 = sadd.s32 %s482, 1
      %p486 = scmp.eq.s32.totalorder %s40, 3
      %p487 = scmp.ne.s32.totalorder %s482, %s484
      %p488 = scmp.eq.s32.totalorder %s40, 0
      %p489 = por %p487, %p488
      %p490 = scmp.ne.s32.totalorder %s482, %s484
      %p491 = scmp.eq.s32.totalorder %s45, 3
      %p492 = por %p490, %p491
      %p493 = scmp.ne.s32.totalorder %s484, %s485
      %p494 = scmp.eq.s32.totalorder %s45, 0
      %p495 = por %p493, %p494
      %p496 = scmp.ne.s32.totalorder %s484, %s485
      %p497 = scmp.eq.s32.totalorder %s46, 3
      %p498 = por %p496, %p497
      %p500 = scmp.ne.s32.totalorder %s485, %s499
      %p501 = scmp.eq.s32.totalorder %s46, 0
      %p502 = por %p500, %p501
      %s504 = sadd.s32 %s503, 1
      %p507 = scmp.eq.s32.totalorder %s40, 3
      %p508 = scmp.ne.s32.totalorder %s503, %s505
      %p509 = scmp.eq.s32.totalorder %s40, 0
      %p510 = por %p508, %p509
      %p511 = scmp.ne.s32.totalorder %s503, %s505
      %p512 = scmp.eq.s32.totalorder %s45, 3
      %p513 = por %p511, %p512
      %p514 = scmp.ne.s32.totalorder %s505, %s506
      %p515 = scmp.eq.s32.totalorder %s45, 0
      %p516 = por %p514, %p515
      %p517 = scmp.ne.s32.totalorder %s505, %s506
      %p518 = scmp.eq.s32.totalorder %s46, 3
      %p519 = por %p517, %p518
      %p521 = scmp.ne.s32.totalorder %s506, %s520
      %p522 = scmp.eq.s32.totalorder %s46, 0
      %p523 = por %p521, %p522
      %s525 = sadd.s32 %s524, 1
      %p528 = scmp.eq.s32.totalorder %s40, 3
      %p529 = scmp.ne.s32.totalorder %s524, %s526
      %p530 = scmp.eq.s32.totalorder %s40, 0
      %p531 = por %p529, %p530
      %p532 = scmp.ne.s32.totalorder %s524, %s526
      %p533 = scmp.eq.s32.totalorder %s45, 3
      %p534 = por %p532, %p533
      %p535 = scmp.ne.s32.totalorder %s526, %s527
      %p536 = scmp.eq.s32.totalorder %s45, 0
      %p537 = por %p535, %p536
      %p538 = scmp.ne.s32.totalorder %s526, %s527
      %p539 = scmp.eq.s32.totalorder %s46, 3
      %p540 = por %p538, %p539
      %p542 = scmp.ne.s32.totalorder %s527, %s541
      %p543 = scmp.eq.s32.totalorder %s46, 0
      %p544 = por %p542, %p543
      %s545 = ssub.s32 %s47, %s59
      %p546 = scmp.eq.s32.totalorder %s545, 0
      %s548 = sadd.s32 %s547, 1
      %s549 = scalar_select %p546, %s547, %s548
      %p552 = pneg %p546
      %p553 = scmp.eq.s32.totalorder %s40, 3
      %p554 = por %p552, %p553
      %p555 = scmp.ne.s32.totalorder %s547, %s550
      %p556 = scmp.eq.s32.totalorder %s40, 0
      %p557 = por %p555, %p556
      %p558 = scmp.ne.s32.totalorder %s547, %s550
      %p559 = scmp.eq.s32.totalorder %s45, 3
      %p560 = por %p558, %p559
      %p561 = scmp.ne.s32.totalorder %s550, %s551
      %p562 = scmp.eq.s32.totalorder %s45, 0
      %p563 = por %p561, %p562
      %p564 = scmp.ne.s32.totalorder %s550, %s551
      %p565 = scmp.eq.s32.totalorder %s46, 3
      %p566 = por %p564, %p565
      %p568 = scmp.ne.s32.totalorder %s551, %s567
      %p569 = scmp.eq.s32.totalorder %s46, 0
      %p570 = por %p568, %p569
      %p571 = scmp.le.s32.totalorder 1, %s40
      %p572 = scmp.lt.s32.totalorder %s40, 5
      %p573 = pnand %p571, %p572
      %p574 = pneg %p573
      // Predicated region
      $region9: #{tpu_custom_call.1} parent=5 // pred_check
        _
      $region10: #{tpu_custom_call.1} parent=5 // pred_check_branch
        %576 = sbr.rel (%p573) target = $region12
      $region11: #{tpu_custom_call.1} parent=5 // pred_region
        %s577 = ssub.s32 %s40, 1
        // Predicated region
        $region13: #{tpu_custom_call.1} parent=11 // pred_check
          %p578 = pneg %p99
        $region14: #{tpu_custom_call.1} parent=11 // pred_check_branch
          %580 = sbr.rel (%p578) target = $region16
        $region15: #{tpu_custom_call.1} parent=11 // pred_region
          _
        $region16: #{tpu_custom_call.1} parent=11 // pred_fallthru
          _
        // Predicated region
        $region17: #{tpu_custom_call.1} parent=11 // pred_check
          %p581 = pneg %p120
        $region18: #{tpu_custom_call.1} parent=11 // pred_check_branch
          %583 = sbr.rel (%p581) target = $region20
        $region19: #{tpu_custom_call.1} parent=11 // pred_region
          %s585 = ssub.s32 384, 384
          %586 = vsyncadd [#allocation4], %s585
          %s587 = sshll.u32 [#allocation3], 4
          %s588 = int_to_ptr.vmem [resolvable:$true] %s587
          %593 = dma.hbm_to_vmem [thread:$0]  %s2, 384, %s588, [#allocation4], 128, 128, 8
        $region20: #{tpu_custom_call.1} parent=11 // pred_fallthru
          _
        // Predicated region
        $region21: #{tpu_custom_call.1} parent=11 // pred_check
          %p594 = pneg %p141
        $region22: #{tpu_custom_call.1} parent=11 // pred_check_branch
          %596 = sbr.rel (%p594) target = $region24
        $region23: #{tpu_custom_call.1} parent=11 // pred_region
          %s598 = ssub.s32 16, 16
          %599 = vsyncadd [#allocation7], %s598
          %s601 = sshll.u32 [#allocation6], 4
          %s602 = int_to_ptr.vmem [resolvable:$true] %s601
          %604 = dma.hbm_to_vmem [thread:$0]  %s3, 16, %s602, [#allocation7]
        $region24: #{tpu_custom_call.1} parent=11 // pred_fallthru
          _
        // Predicated region
        $region25: #{tpu_custom_call.1} parent=11 // pred_check
          %p605 = pneg %p162
        $region26: #{tpu_custom_call.1} parent=11 // pred_check_branch
          %607 = sbr.rel (%p605) target = $region28
        $region27: #{tpu_custom_call.1} parent=11 // pred_region
          %s609 = ssub.s32 16, 16
          %610 = vsyncadd [#allocation7], %s609
          %s612 = sshll.u32 [#allocation8], 4
          %s613 = int_to_ptr.vmem [resolvable:$true] %s612
          %615 = dma.hbm_to_vmem [thread:$0]  %s4, 16, %s613, [#allocation7]
        $region28: #{tpu_custom_call.1} parent=11 // pred_fallthru
          _
        // Predicated region
        $region29: #{tpu_custom_call.1} parent=11 // pred_check
          %p616 = pneg %p495
        $region30: #{tpu_custom_call.1} parent=11 // pred_check_branch
          %618 = sbr.rel (%p616) target = $region32
        $region31: #{tpu_custom_call.1} parent=11 // pred_region
          _
        $region32: #{tpu_custom_call.1} parent=11 // pred_fallthru
          _
        // Predicated region
        $region33: #{tpu_custom_call.1} parent=11 // pred_check
          %p619 = pneg %p516
        $region34: #{tpu_custom_call.1} parent=11 // pred_check_branch
          %621 = sbr.rel (%p619) target = $region36
        $region35: #{tpu_custom_call.1} parent=11 // pred_region
          _
        $region36: #{tpu_custom_call.1} parent=11 // pred_fallthru
          _
        // Predicated region
        $region37: #{tpu_custom_call.1} parent=11 // pred_check
          %p622 = pneg %p537
        $region38: #{tpu_custom_call.1} parent=11 // pred_check_branch
          %624 = sbr.rel (%p622) target = $region40
        $region39: #{tpu_custom_call.1} parent=11 // pred_region
          _
        $region40: #{tpu_custom_call.1} parent=11 // pred_fallthru
          _
      $region12: #{tpu_custom_call.1} parent=5 // pred_fallthru
        _
      %p625 = scmp.lt.s32.totalorder %s40, 4
      // Predicated region
      $region41: #{tpu_custom_call.1} parent=5 // pred_check
        %p626 = pneg %p625
      $region42: #{tpu_custom_call.1} parent=5 // pred_check_branch
        %628 = sbr.rel (%p626) target = $region44
      $region43: #{tpu_custom_call.1} parent=5 // pred_region
        // Predicated region
        $region45: #{tpu_custom_call.1} parent=43 // pred_check
          %p629 = pneg %p72
        $region46: #{tpu_custom_call.1} parent=43 // pred_check_branch
          %631 = sbr.rel (%p629) target = $region48
        $region47: #{tpu_custom_call.1} parent=43 // pred_region
          %p632 = scmp.lt.s32.totalorder %s47, 1
          %s633 = scalar_select %p632, %s47, 1
          %s634 = smul.addr %s633, 6
          %s635 = smul.addr %s634, 8
          %s636 = scalar_lea.vmem %s0, %s635
        $region48: #{tpu_custom_call.1} parent=43 // pred_fallthru
          _
        // Predicated region
        $region49: #{tpu_custom_call.1} parent=43 // pred_check
          %p637 = pneg %p182
        $region50: #{tpu_custom_call.1} parent=43 // pred_check_branch
          %639 = sbr.rel (%p637) target = $region52
        $region51: #{tpu_custom_call.1} parent=43 // pred_region
          %p640 = scmp.lt.s32.totalorder %s48, 1
          %s641 = scalar_select %p640, %s48, 1
          %s642 = scalar_lea.vmem %s5, %s641
        $region52: #{tpu_custom_call.1} parent=43 // pred_fallthru
          _
        // Predicated region
        $region53: #{tpu_custom_call.1} parent=43 // pred_check
          %p643 = pneg %p208
        $region54: #{tpu_custom_call.1} parent=43 // pred_check_branch
          %645 = sbr.rel (%p643) target = $region56
        $region55: #{tpu_custom_call.1} parent=43 // pred_region
          %p646 = scmp.lt.s32.totalorder %s48, 1
          %s647 = scalar_select %p646, %s48, 1
          %s648 = scalar_lea.vmem %s6, %s647
        $region56: #{tpu_custom_call.1} parent=43 // pred_fallthru
          _
        // Predicated region
        $region57: #{tpu_custom_call.1} parent=43 // pred_check
          %p649 = pneg %p234
        $region58: #{tpu_custom_call.1} parent=43 // pred_check_branch
          %651 = sbr.rel (%p649) target = $region60
        $region59: #{tpu_custom_call.1} parent=43 // pred_region
          %s652 = sand.u32 %s40, 1
          %s653 = scalar_lea.sflag [#allocation10], %s652
          %s654 = sand.u32 %s224, 1
          %s655 = smul.addr %s654, 768
          %s656 = scalar_lea.vmem [#allocation9], %s655
          %s658 = ssub.s32 12288, 12288
          %659 = vsyncadd %s653, %s658
          %s660 = smul.addr %s48, 192
          %s661 = smul.addr %s660, 64
          %s662 = scalar_lea.hbm %s7, %s661
          %s663 = sshll.u32 %s656, 4
          %s664 = int_to_ptr.vmem [resolvable:$true] %s663
          %669 = dma.hbm_to_vmem [thread:$0]  %s662, 12288, %s664, %s653, 768, 768, 48
        $region60: #{tpu_custom_call.1} parent=43 // pred_fallthru
          _
        // Predicated region
        $region61: #{tpu_custom_call.1} parent=43 // pred_check
          %p670 = pneg %p260
        $region62: #{tpu_custom_call.1} parent=43 // pred_check_branch
          %672 = sbr.rel (%p670) target = $region64
        $region63: #{tpu_custom_call.1} parent=43 // pred_region
          %s673 = sand.u32 %s40, 1
          %s674 = scalar_lea.sflag [#allocation10], %s673
          %s675 = sand.u32 %s250, 1
          %s676 = smul.addr %s675, 12
          %s677 = scalar_lea.vmem [#allocation11], %s676
          %s679 = ssub.s32 192, 192
          %680 = vsyncadd %s674, %s679
          %s681 = smul.addr %s48, 12
          %s682 = smul.addr %s681, 16
          %s683 = scalar_lea.hbm %s8, %s682
          %s685 = sshll.u32 %s677, 4
          %s686 = int_to_ptr.vmem [resolvable:$true] %s685
          %688 = dma.hbm_to_vmem [thread:$0]  %s683, 192, %s686, %s674
        $region64: #{tpu_custom_call.1} parent=43 // pred_fallthru
          _
        // Predicated region
        $region65: #{tpu_custom_call.1} parent=43 // pred_check
          %p689 = pneg %p286
        $region66: #{tpu_custom_call.1} parent=43 // pred_check_branch
          %691 = sbr.rel (%p689) target = $region68
        $region67: #{tpu_custom_call.1} parent=43 // pred_region
          %s692 = sand.u32 %s40, 1
          %s693 = scalar_lea.sflag [#allocation13], %s692
          %s694 = sand.u32 %s276, 1
          %s695 = smul.addr %s694, 256
          %s696 = scalar_lea.vmem [#allocation12], %s695
          %s698 = ssub.s32 4096, 4096
          %699 = vsyncadd %s693, %s698
          %s700 = smul.addr %s48, 64
          %s701 = smul.addr %s700, 64
          %s702 = scalar_lea.hbm %s9, %s701
          %s703 = sshll.u32 %s696, 4
          %s704 = int_to_ptr.vmem [resolvable:$true] %s703
          %709 = dma.hbm_to_vmem [thread:$0]  %s702, 4096, %s704, %s693, 64, 64, 4
        $region68: #{tpu_custom_call.1} parent=43 // pred_fallthru
          _
        // Predicated region
        $region69: #{tpu_custom_call.1} parent=43 // pred_check
          %p710 = pneg %p312
        $region70: #{tpu_custom_call.1} parent=43 // pred_check_branch
          %712 = sbr.rel (%p710) target = $region72
        $region71: #{tpu_custom_call.1} parent=43 // pred_region
          %p713 = scmp.lt.s32.totalorder %s48, 1
          %s714 = scalar_select %p713, %s48, 1
          %s715 = scalar_lea.vmem %s10, %s714
        $region72: #{tpu_custom_call.1} parent=43 // pred_fallthru
          _
        // Predicated region
        $region73: #{tpu_custom_call.1} parent=43 // pred_check
          %p716 = pneg %p338
        $region74: #{tpu_custom_call.1} parent=43 // pred_check_branch
          %718 = sbr.rel (%p716) target = $region76
        $region75: #{tpu_custom_call.1} parent=43 // pred_region
          %p719 = scmp.lt.s32.totalorder %s48, 1
          %s720 = scalar_select %p719, %s48, 1
          %s721 = scalar_lea.vmem %s11, %s720
        $region76: #{tpu_custom_call.1} parent=43 // pred_fallthru
          _
        // Predicated region
        $region77: #{tpu_custom_call.1} parent=43 // pred_check
          %p722 = pneg %p364
        $region78: #{tpu_custom_call.1} parent=43 // pred_check_branch
          %724 = sbr.rel (%p722) target = $region80
        $region79: #{tpu_custom_call.1} parent=43 // pred_region
          %p725 = scmp.lt.s32.totalorder %s48, 1
          %s726 = scalar_select %p725, %s48, 1
          %s727 = scalar_lea.vmem %s12, %s726
        $region80: #{tpu_custom_call.1} parent=43 // pred_fallthru
          _
        // Predicated region
        $region81: #{tpu_custom_call.1} parent=43 // pred_check
          %p728 = pneg %p390
        $region82: #{tpu_custom_call.1} parent=43 // pred_check_branch
          %730 = sbr.rel (%p728) target = $region84
        $region83: #{tpu_custom_call.1} parent=43 // pred_region
          %s731 = sand.u32 %s40, 1
          %s732 = scalar_lea.sflag [#allocation13], %s731
          %s733 = sand.u32 %s380, 1
          %s734 = smul.addr %s733, 256
          %s735 = scalar_lea.vmem [#allocation14], %s734
          %s737 = ssub.s32 4096, 4096
          %738 = vsyncadd %s732, %s737
          %s739 = smul.addr %s48, 64
          %s740 = smul.addr %s739, 64
          %s741 = scalar_lea.hbm %s13, %s740
          %s742 = sshll.u32 %s735, 4
          %s743 = int_to_ptr.vmem [resolvable:$true] %s742
          %748 = dma.hbm_to_vmem [thread:$0]  %s741, 4096, %s743, %s732, 256, 256, 16
        $region84: #{tpu_custom_call.1} parent=43 // pred_fallthru
          _
        // Predicated region
        $region85: #{tpu_custom_call.1} parent=43 // pred_check
          %p749 = pneg %p416
        $region86: #{tpu_custom_call.1} parent=43 // pred_check_branch
          %751 = sbr.rel (%p749) target = $region88
        $region87: #{tpu_custom_call.1} parent=43 // pred_region
          %p752 = scmp.lt.s32.totalorder %s48, 1
          %s753 = scalar_select %p752, %s48, 1
          %s754 = smul.addr %s753, 4
          %s755 = scalar_lea.vmem %s14, %s754
        $region88: #{tpu_custom_call.1} parent=43 // pred_fallthru
          _
        // Predicated region
        $region89: #{tpu_custom_call.1} parent=43 // pred_check
          %p756 = pneg %p442
        $region90: #{tpu_custom_call.1} parent=43 // pred_check_branch
          %758 = sbr.rel (%p756) target = $region92
        $region91: #{tpu_custom_call.1} parent=43 // pred_region
          %s759 = sand.u32 %s432, 1
          %s760 = scalar_lea.sflag [#allocation16], %s759
          %s761 = sand.u32 %s432, 1
          %s762 = smul.addr %s761, 256
          %s763 = scalar_lea.vmem [#allocation15], %s762
          %s765 = ssub.s32 4096, 4096
          %766 = vsyncadd %s760, %s765
          %s767 = smul.addr %s48, 64
          %s768 = smul.addr %s767, 64
          %s769 = scalar_lea.hbm %s15, %s768
          %s770 = sshll.u32 %s763, 4
          %s771 = int_to_ptr.vmem [resolvable:$true] %s770
          %776 = dma.hbm_to_vmem [thread:$0]  %s769, 4096, %s771, %s760, 64, 64, 4
        $region92: #{tpu_custom_call.1} parent=43 // pred_fallthru
          _
        // Predicated region
        $region93: #{tpu_custom_call.1} parent=43 // pred_check
          %p777 = pneg %p468
        $region94: #{tpu_custom_call.1} parent=43 // pred_check_branch
          %779 = sbr.rel (%p777) target = $region96
        $region95: #{tpu_custom_call.1} parent=43 // pred_region
          %p780 = scmp.lt.s32.totalorder %s48, 1
          %s781 = scalar_select %p780, %s48, 1
          %s782 = scalar_lea.vmem %s16, %s781
        $region96: #{tpu_custom_call.1} parent=43 // pred_fallthru
          _
      $region44: #{tpu_custom_call.1} parent=5 // pred_fallthru
        _
      %p783 = scmp.le.s32.totalorder 1, %s40
      %p784 = scmp.lt.s32.totalorder %s40, 5
      %p785 = pnand %p783, %p784
      %p786 = pneg %p785
      // Predicated region
      $region97: #{tpu_custom_call.1} parent=5 // pred_check
        _
      $region98: #{tpu_custom_call.1} parent=5 // pred_check_branch
        %788 = sbr.rel (%p785) target = $region100
      $region99: #{tpu_custom_call.1} parent=5 // pred_region
        %s789 = ssub.s32 %s40, 1
        // Predicated region
        $region101: #{tpu_custom_call.1} parent=99 // pred_check
          %p790 = pneg %p120
        $region102: #{tpu_custom_call.1} parent=99 // pred_check_branch
          %792 = sbr.rel (%p790) target = $region104
        $region103: #{tpu_custom_call.1} parent=99 // pred_region
          %793 = dma.done [#allocation4], 384
        $region104: #{tpu_custom_call.1} parent=99 // pred_fallthru
          _
        // Predicated region
        $region105: #{tpu_custom_call.1} parent=99 // pred_check
          %p794 = pneg %p141
        $region106: #{tpu_custom_call.1} parent=99 // pred_check_branch
          %796 = sbr.rel (%p794) target = $region108
        $region107: #{tpu_custom_call.1} parent=99 // pred_region
          %797 = dma.done [#allocation7], 16
        $region108: #{tpu_custom_call.1} parent=99 // pred_fallthru
          _
        // Predicated region
        $region109: #{tpu_custom_call.1} parent=99 // pred_check
          %p798 = pneg %p162
        $region110: #{tpu_custom_call.1} parent=99 // pred_check_branch
          %800 = sbr.rel (%p798) target = $region112
        $region111: #{tpu_custom_call.1} parent=99 // pred_region
          %801 = dma.done [#allocation7], 16
        $region112: #{tpu_custom_call.1} parent=99 // pred_fallthru
          _
        %s802 = sand.u32 %s45, 1
        %s803 = scalar_lea.sflag [#allocation10], %s802
        %s804 = sand.u32 %s227, 1
        %s805 = smul.addr %s804, 768
        %s806 = scalar_lea.vmem [#allocation9], %s805
        // Predicated region
        $region113: #{tpu_custom_call.1} parent=99 // pred_check
          %p807 = pneg %p240
        $region114: #{tpu_custom_call.1} parent=99 // pred_check_branch
          %809 = sbr.rel (%p807) target = $region116
        $region115: #{tpu_custom_call.1} parent=99 // pred_region
          %810 = dma.done %s803, 12288
        $region116: #{tpu_custom_call.1} parent=99 // pred_fallthru
          _
        %s811 = sand.u32 %s45, 1
        %s812 = scalar_lea.sflag [#allocation10], %s811
        %s813 = sand.u32 %s253, 1
        %s814 = smul.addr %s813, 12
        %s815 = scalar_lea.vmem [#allocation11], %s814
        // Predicated region
        $region117: #{tpu_custom_call.1} parent=99 // pred_check
          %p816 = pneg %p266
        $region118: #{tpu_custom_call.1} parent=99 // pred_check_branch
          %818 = sbr.rel (%p816) target = $region120
        $region119: #{tpu_custom_call.1} parent=99 // pred_region
          %819 = dma.done %s812, 192
        $region120: #{tpu_custom_call.1} parent=99 // pred_fallthru
          _
        %s820 = sand.u32 %s45, 1
        %s821 = scalar_lea.sflag [#allocation13], %s820
        %s822 = sand.u32 %s279, 1
        %s823 = smul.addr %s822, 256
        %s824 = scalar_lea.vmem [#allocation12], %s823
        // Predicated region
        $region121: #{tpu_custom_call.1} parent=99 // pred_check
          %p825 = pneg %p292
        $region122: #{tpu_custom_call.1} parent=99 // pred_check_branch
          %827 = sbr.rel (%p825) target = $region124
        $region123: #{tpu_custom_call.1} parent=99 // pred_region
          %828 = dma.done %s821, 4096
        $region124: #{tpu_custom_call.1} parent=99 // pred_fallthru
          _
        %s829 = sand.u32 %s45, 1
        %s830 = scalar_lea.sflag [#allocation13], %s829
        %s831 = sand.u32 %s383, 1
        %s832 = smul.addr %s831, 256
        %s833 = scalar_lea.vmem [#allocation14], %s832
        // Predicated region
        $region125: #{tpu_custom_call.1} parent=99 // pred_check
          %p834 = pneg %p396
        $region126: #{tpu_custom_call.1} parent=99 // pred_check_branch
          %836 = sbr.rel (%p834) target = $region128
        $region127: #{tpu_custom_call.1} parent=99 // pred_region
          %837 = dma.done %s830, 4096
        $region128: #{tpu_custom_call.1} parent=99 // pred_fallthru
          _
        %s838 = sand.u32 %s435, 1
        %s839 = scalar_lea.sflag [#allocation16], %s838
        %s840 = sand.u32 %s435, 1
        %s841 = smul.addr %s840, 256
        %s842 = scalar_lea.vmem [#allocation15], %s841
        // Predicated region
        $region129: #{tpu_custom_call.1} parent=99 // pred_check
          %p843 = pneg %p448
        $region130: #{tpu_custom_call.1} parent=99 // pred_check_branch
          %845 = sbr.rel (%p843) target = $region132
        $region131: #{tpu_custom_call.1} parent=99 // pred_region
          %846 = dma.done %s839, 4096
        $region132: #{tpu_custom_call.1} parent=99 // pred_fallthru
          _
        %p847 = scmp.lt.s32.totalorder %s49, 1
        %s848 = scalar_select %p847, %s49, 1
        %s849 = smul.addr %s848, 6
        %s850 = smul.addr %s849, 8
        %s851 = scalar_lea.vmem %s0, %s850
        %p852 = pneg %p78
        %p853 = pneg %p75
        %p854 = pneg %p99
        %p855 = pneg %p96
        %p856 = pneg %p120
        %p857 = pneg %p117
        %p858 = pneg %p141
        %p859 = pneg %p138
        %p860 = pneg %p162
        %p861 = pneg %p159
        %p862 = scmp.lt.s32.totalorder %s50, 1
        %s863 = scalar_select %p862, %s50, 1
        %s864 = scalar_lea.vmem %s5, %s863
        %p865 = pneg %p188
        %p866 = pneg %p185
        %p867 = scmp.lt.s32.totalorder %s50, 1
        %s868 = scalar_select %p867, %s50, 1
        %s869 = scalar_lea.vmem %s6, %s868
        %p870 = pneg %p214
        %p871 = pneg %p211
        %s872 = sand.u32 %s45, 1
        %s873 = scalar_lea.sflag [#allocation10], %s872
        %s874 = sand.u32 %s227, 1
        %s875 = smul.addr %s874, 768
        %s876 = scalar_lea.vmem [#allocation9], %s875
        %p877 = pneg %p240
        %p878 = pneg %p237
        %s879 = sand.u32 %s45, 1
        %s880 = scalar_lea.sflag [#allocation10], %s879
        %s881 = sand.u32 %s253, 1
        %s882 = smul.addr %s881, 12
        %s883 = scalar_lea.vmem [#allocation11], %s882
        %p884 = pneg %p266
        %p885 = pneg %p263
        %s886 = sand.u32 %s45, 1
        %s887 = scalar_lea.sflag [#allocation13], %s886
        %s888 = sand.u32 %s279, 1
        %s889 = smul.addr %s888, 256
        %s890 = scalar_lea.vmem [#allocation12], %s889
        %p891 = pneg %p292
        %p892 = pneg %p289
        %p893 = scmp.lt.s32.totalorder %s50, 1
        %s894 = scalar_select %p893, %s50, 1
        %s895 = scalar_lea.vmem %s10, %s894
        %p896 = pneg %p318
        %p897 = pneg %p315
        %p898 = scmp.lt.s32.totalorder %s50, 1
        %s899 = scalar_select %p898, %s50, 1
        %s900 = scalar_lea.vmem %s11, %s899
        %p901 = pneg %p344
        %p902 = pneg %p341
        %p903 = scmp.lt.s32.totalorder %s50, 1
        %s904 = scalar_select %p903, %s50, 1
        %s905 = scalar_lea.vmem %s12, %s904
        %p906 = pneg %p370
        %p907 = pneg %p367
        %s908 = sand.u32 %s45, 1
        %s909 = scalar_lea.sflag [#allocation13], %s908
        %s910 = sand.u32 %s383, 1
        %s911 = smul.addr %s910, 256
        %s912 = scalar_lea.vmem [#allocation14], %s911
        %p913 = pneg %p396
        %p914 = pneg %p393
        %p915 = scmp.lt.s32.totalorder %s50, 1
        %s916 = scalar_select %p915, %s50, 1
        %s917 = smul.addr %s916, 4
        %s918 = scalar_lea.vmem %s14, %s917
        %p919 = pneg %p422
        %p920 = pneg %p419
        %s921 = sand.u32 %s435, 1
        %s922 = scalar_lea.sflag [#allocation16], %s921
        %s923 = sand.u32 %s435, 1
        %s924 = smul.addr %s923, 256
        %s925 = scalar_lea.vmem [#allocation15], %s924
        %p926 = pneg %p448
        %p927 = pneg %p445
        %p928 = scmp.lt.s32.totalorder %s50, 1
        %s929 = scalar_select %p928, %s50, 1
        %s930 = scalar_lea.vmem %s16, %s929
        %p931 = pneg %p474
        %p932 = pneg %p471
        %p933 = pneg %p495
        %p934 = pneg %p492
        %p935 = pneg %p516
        %p936 = pneg %p513
        %p937 = pneg %p537
        %p938 = pneg %p534
        %p939 = pneg %p563
        %p940 = pneg %p560
        %s941 = sand.u32 %s550, 1
        %s942 = scalar_lea.sflag [#allocation5], %s941
        %s943 = sand.u32 %s550, 1
        %s944 = scalar_lea.vmem [#allocation17], %s943
        %p945 = scmp.lt.s32.totalorder %s49, 1
        %s946 = scalar_select %p945, %s49, 1
        %s947 = smul.addr %s946, 6
        %s948 = smul.addr %s947, 8
        %s949 = scalar_lea.vmem %s0, %s948
        %p950 = scmp.lt.s32.totalorder %s50, 1
        %s951 = scalar_select %p950, %s50, 1
        %s952 = scalar_lea.vmem %s5, %s951
        %p953 = scmp.lt.s32.totalorder %s50, 1
        %s954 = scalar_select %p953, %s50, 1
        %s955 = scalar_lea.vmem %s6, %s954
        %p956 = scmp.lt.s32.totalorder %s50, 1
        %s957 = scalar_select %p956, %s50, 1
        %s958 = scalar_lea.vmem %s10, %s957
        %p959 = scmp.lt.s32.totalorder %s50, 1
        %s960 = scalar_select %p959, %s50, 1
        %s961 = scalar_lea.vmem %s11, %s960
        %p962 = scmp.lt.s32.totalorder %s50, 1
        %s963 = scalar_select %p962, %s50, 1
        %s964 = scalar_lea.vmem %s12, %s963
        %p965 = scmp.lt.s32.totalorder %s50, 1
        %s966 = scalar_select %p965, %s50, 1
        %s967 = smul.addr %s966, 4
        %s968 = scalar_lea.vmem %s14, %s967
        %p969 = scmp.lt.s32.totalorder %s50, 1
        %s970 = scalar_select %p969, %s50, 1
        %s971 = scalar_lea.vmem %s16, %s970
        %p973 = scmp.eq.s32.totalorder %s50, 0
        // Predicated region
        $region133: #{tpu_custom_call.1} parent=99 // pred_check
          %p974 = pneg %p973
        $region134: #{tpu_custom_call.1} parent=99 // pred_check_branch
          %976 = sbr.rel (%p974) target = $region136
        $region135: #{tpu_custom_call.1} parent=99 // pred_region
          %v977 = vld [vmem:[%s949] sm:$0xff]
          %v978 = vld [vmem:[%s949 + $0x8] sm:$0xff]
          %v979 = vld [vmem:[%s949 + $0x10] sm:$0xff]
          %v980 = vld [vmem:[%s949 + $0x18] sm:$0xff]
          %v981 = vld [vmem:[%s949 + $0x20] sm:$0x1]
          %v982 = vld [vmem:[%s949 + $0x28] sm:$0x1]
          %v983 = vpack.c.bf16 %v979, %v977
          %v984 = vpack.c.bf16 %v980, %v978
          %v985 = vpack.c.bf16 %v981, %v981
          %v986 = vpack.c.bf16 %v982, %v982
          %v987 = vld [vmem:[%s1] sm:$0xf]
          %v988 = vld [vmem:[%s1 + $0x4] sm:$0xf]
          %v989 = vld [vmem:[%s1 + $0x8] sm:$0xf]
          %v990 = vld [vmem:[%s1 + $0xc] sm:$0xf]
          %v991 = vld [vmem:[%s1 + $0x10] sm:$0xf]
          %v992 = vld [vmem:[%s1 + $0x14] sm:$0xf]
          %v993 = vld [vmem:[%s1 + $0x18] sm:$0xf]
          %v994 = vld [vmem:[%s1 + $0x1c] sm:$0xf]
          %v995 = vld [vmem:[%s1 + $0x20] sm:$0xf]
          %v996 = vld [vmem:[%s1 + $0x24] sm:$0xf]
          %v997 = vld [vmem:[%s1 + $0x28] sm:$0xf]
          %v998 = vld [vmem:[%s1 + $0x2c] sm:$0xf]
          %v999 = vld [vmem:[%s1 + $0x30] sm:$0xf]
          %v1000 = vld [vmem:[%s1 + $0x34] sm:$0xf]
          %v1001 = vld [vmem:[%s1 + $0x38] sm:$0xf]
          %v1002 = vld [vmem:[%s1 + $0x3c] sm:$0xf]
          %v1003 = vld [vmem:[%s1 + $0x40] sm:$0xf]
          %v1004 = vld [vmem:[%s1 + $0x44] sm:$0xf]
          %v1005 = vld [vmem:[%s1 + $0x48] sm:$0xf]
          %v1006 = vld [vmem:[%s1 + $0x4c] sm:$0xf]
          %v1007 = vld [vmem:[%s1 + $0x50] sm:$0xf]
          %v1008 = vld [vmem:[%s1 + $0x54] sm:$0xf]
          %v1009 = vld [vmem:[%s1 + $0x58] sm:$0xf]
          %v1010 = vld [vmem:[%s1 + $0x5c] sm:$0xf]
          %v1011 = vld [vmem:[#allocation3] sm:$0xff]
          %v1012 = vld [vmem:[#allocation3 + $0x8] sm:$0xff]
          %v1013 = vld [vmem:[#allocation3 + $0x10] sm:$0x1]
          %v1038 = vunpack.c.l.b16 %v987
          %v1039 = vunpack.c.l.b16 %v988
          %v1040 = vunpack.c.l.b16 %v989
          %v1041 = vunpack.c.l.b16 %v990
          %v1042 = vunpack.c.l.b16 %v991
          %v1043 = vunpack.c.l.b16 %v992
          %v1044 = vunpack.c.l.b16 %v993
          %v1045 = vunpack.c.l.b16 %v994
          %v1046 = vunpack.c.l.b16 %v995
          %v1047 = vunpack.c.l.b16 %v996
          %v1048 = vunpack.c.l.b16 %v997
          %v1049 = vunpack.c.l.b16 %v998
          %v1050 = vunpack.c.l.b16 %v999
          %v1051 = vunpack.c.l.b16 %v1000
          %v1052 = vunpack.c.l.b16 %v1001
          %v1053 = vunpack.c.l.b16 %v1002
          %v1054 = vunpack.c.l.b16 %v1003
          %v1055 = vunpack.c.l.b16 %v1004
          %v1056 = vunpack.c.l.b16 %v1005
          %v1057 = vunpack.c.l.b16 %v1006
          %v1058 = vunpack.c.l.b16 %v1007
          %v1059 = vunpack.c.l.b16 %v1008
          %v1060 = vunpack.c.l.b16 %v1009
          %v1061 = vunpack.c.l.b16 %v1010
          %v1062 = vpack.c.b16 %v1039, %v1038
          %v1063 = vpack.c.b16 %v1041, %v1040
          %v1064 = vpack.c.b16 %v1043, %v1042
          %v1065 = vpack.c.b16 %v1045, %v1044
          %v1066 = vpack.c.b16 %v1047, %v1046
          %v1067 = vpack.c.b16 %v1049, %v1048
          %v1068 = vpack.c.b16 %v1051, %v1050
          %v1069 = vpack.c.b16 %v1053, %v1052
          %v1070 = vpack.c.b16 %v1055, %v1054
          %v1071 = vpack.c.b16 %v1057, %v1056
          %v1072 = vpack.c.b16 %v1059, %v1058
          %v1073 = vpack.c.b16 %v1061, %v1060
          %vm1086 = vcmask 523264
          %v1088 = vsel %vm1086, %v984, 0
          %v1091 = vsel %vm1086, %v986, 0
          %1093 = vmatprep.subr.bf16.mxu0 0
          %1094 = vmatpush1.bf16.msra.mxu0 %v1069
          %1095 = vmatprep.subr.bf16.mxu0 0
          %1096 = vmatpush1.bf16.msra.mxu0 %v1068
          %1097 = vmatprep.subr.bf16.mxu0 0
          %1098 = vmatpush1.bf16.msra.mxu0 %v1067
          %1099 = vmatprep.subr.bf16.mxu0 0
          %1100 = vmatpush1.bf16.msra.mxu0 %v1066
          %1101 = vmatprep.subr.bf16.mxu0 0
          %1102 = vmatpush1.bf16.msra.mxu0 %v1065
          %1103 = vmatprep.subr.bf16.mxu0 0
          %1104 = vmatpush1.bf16.msra.mxu0 %v1064
          %1105 = vmatprep.subr.bf16.mxu0 0
          %1106 = vmatpush1.bf16.msra.mxu0 %v1063
          %1107 = vmatprep.subr.bf16.mxu0 0
          %1108 = vmatpush1.bf16.msra.mxu0 %v1062
          %1109 = vmatprep.subr.bf16.mxu0 0
          %1110 = vmatpush2.bf16.msra.mxu0 0
          %1111 = vmatprep.subr.bf16.mxu0 0
          %1112 = vmatpush2.bf16.msra.mxu0 0
          %1113 = vmatprep.subr.bf16.mxu0 0
          %1114 = vmatpush2.bf16.msra.mxu0 0
          %1115 = vmatprep.subr.bf16.mxu0 0
          %1116 = vmatpush2.bf16.msra.mxu0 0
          %1117 = vmatprep.subr.bf16.mxu0 0
          %1118 = vmatpush2.bf16.msra.mxu0 %v1073
          %1119 = vmatprep.subr.bf16.mxu0 0
          %1120 = vmatpush2.bf16.msra.mxu0 %v1072
          %1121 = vmatprep.subr.bf16.mxu0 0
          %1122 = vmatpush2.bf16.msra.mxu0 %v1071
          %1123 = vmatprep.subr.bf16.mxu0 0
          %1124 = vmatpush2.bf16.msra.mxu0 %v1070
          %1125 = vmatprep.mubr.bf16.mxu0 %v1088
          %1126 = vmatmul.mubr.bf16.gmra.mxu0 %v983
          %v1127 = vpop.f32.mrf.mxu0
          %v1128 = vadd.f32 %v1011, %v1127
          %v1129 = vpop.f32.mrf.mxu0
          %v1130 = vpop.f32.mrf.mxu0
          %v1131 = vadd.f32 %v1012, %v1130
          %v1132 = vpop.f32.mrf.mxu0
          %1133 = vmatprep.mubr.bf16.mxu0 %v1091
          %1134 = vmatmul.mubr.bf16.gmra.mxu0 %v985
          %v1135 = vpop.f32.mrf.mxu0
          %v1136 = vadd.f32 %v1013, %v1135
          %v1137 = vpop.f32.mrf.mxu0
          %v1138 = vpop.f32.mrf.mxu0
          %v1139 = vpop.f32.mrf.mxu0
          %1140 = vdwg.mxu0
          %v1141 = vld [vmem:[#allocation6] sm:$0x1]
          %v1142 = vld [vmem:[#allocation8] sm:$0x1]
          %1143 = vadd.xlane.f32.xlu0 %v1128
          %v1144 = vpop.xlane.xlu0 %1143
          %1145 = vadd.xlane.f32.xlu0 %v1131
          %v1146 = vpop.xlane.xlu0 %1145
          %vm1147 = vcmask 1040384
          %v1148 = vsel %vm1147, %v1136, 0.0
          %1149 = vadd.xlane.f32.xlu0 %v1148
          %v1150 = vpop.xlane.xlu0 %1149
          %v1151 = vrcp.pop 128.0
          %v1152 = vmul.f32 %v1144, %v1151
          %v1153 = vmul.f32 %v1146, %v1151
          %v1154 = vmul.f32 %v1150, %v1151
          %v1155 = vsub.f32 %v1128, %v1152
          %v1156 = vsub.f32 %v1131, %v1153
          %v1157 = vsub.f32 %v1136, %v1154
          %v1158 = vmul.f32 %v1155, %v1155
          %v1159 = vmul.f32 %v1156, %v1156
          %v1160 = vmul.f32 %v1157, %v1157
          %1161 = vadd.xlane.f32.xlu0 %v1158
          %v1162 = vpop.xlane.xlu0 %1161
          %1163 = vadd.xlane.f32.xlu0 %v1159
          %v1164 = vpop.xlane.xlu0 %1163
          %v1165 = vsel %vm1147, %v1160, 0.0
          %1166 = vadd.xlane.f32.xlu0 %v1165
          %v1167 = vpop.xlane.xlu0 %1166
          %v1168 = vmul.f32 %v1162, %v1151
          %v1169 = vmul.f32 %v1164, %v1151
          %v1170 = vmul.f32 %v1167, %v1151
          %v1171 = vadd.f32 %v1168, 1e-05
          %v1172 = vadd.f32 %v1169, 1e-05
          %v1173 = vadd.f32 %v1170, 1e-05
          %v1174 = vrsqrt.pop %v1171
          %v1175 = vrsqrt.pop %v1172
          %v1176 = vrsqrt.pop %v1173
          %v1177 = vmul.f32 %v1155, %v1174
          %v1178 = vmul.f32 %v1156, %v1175
          %v1179 = vmul.f32 %v1157, %v1176
          %v1181 = vlaneseq
          %v1182 = vshrl.u32 %v1181, 7
          %v1183 = vsub.s32 0, %v1182
          %v1184 = vrot.slane %v1141, %v1183
          %v1186 = vmul.f32 %v1177, %v1184
          %v1187 = vmul.f32 %v1178, %v1184
          %v1188 = vmul.f32 %v1179, %v1184
          %v1190 = vlaneseq
          %v1191 = vshrl.u32 %v1190, 7
          %v1192 = vsub.s32 0, %v1191
          %v1193 = vrot.slane %v1142, %v1192
          %v1195 = vadd.f32 %v1186, %v1193
          %v1196 = vadd.f32 %v1187, %v1193
          %v1197 = vadd.f32 %v1188, %v1193
          %1198 = vst [vmem:[#allocation2] sm:$0xff] %v1195
          %1199 = vst [vmem:[#allocation2 + $0x8] sm:$0xff] %v1196
          %1200 = vst [vmem:[#allocation2 + $0x10] sm:$0x1] %v1197
        $region136: #{tpu_custom_call.1} parent=99 // pred_fallthru
          _
        %v1201 = vld [vmem:[#allocation2] sm:$0xff]
        %v1202 = vld [vmem:[#allocation2 + $0x8] sm:$0xff]
        %v1203 = vld [vmem:[#allocation2 + $0x10] sm:$0x1]
        %v1204 = vld [vmem:[%s952] sm:$0x1]
        %v1205 = vld [vmem:[%s955] sm:$0x1]
        %1206 = vadd.xlane.f32.xlu0 %v1201
        %v1207 = vpop.xlane.xlu0 %1206
        %1208 = vadd.xlane.f32.xlu0 %v1202
        %v1209 = vpop.xlane.xlu0 %1208
        %vm1210 = vcmask 1040384
        %v1211 = vsel %vm1210, %v1203, 0.0
        %1212 = vadd.xlane.f32.xlu0 %v1211
        %v1213 = vpop.xlane.xlu0 %1212
        %v1214 = vrcp.pop 128.0
        %v1215 = vmul.f32 %v1207, %v1214
        %v1216 = vmul.f32 %v1209, %v1214
        %v1217 = vmul.f32 %v1213, %v1214
        %v1218 = vsub.f32 %v1201, %v1215
        %v1219 = vsub.f32 %v1202, %v1216
        %v1220 = vsub.f32 %v1203, %v1217
        %v1221 = vmul.f32 %v1218, %v1218
        %v1222 = vmul.f32 %v1219, %v1219
        %v1223 = vmul.f32 %v1220, %v1220
        %1224 = vadd.xlane.f32.xlu0 %v1221
        %v1225 = vpop.xlane.xlu0 %1224
        %1226 = vadd.xlane.f32.xlu0 %v1222
        %v1227 = vpop.xlane.xlu0 %1226
        %v1228 = vsel %vm1210, %v1223, 0.0
        %1229 = vadd.xlane.f32.xlu0 %v1228
        %v1230 = vpop.xlane.xlu0 %1229
        %v1231 = vmul.f32 %v1225, %v1214
        %v1232 = vmul.f32 %v1227, %v1214
        %v1233 = vmul.f32 %v1230, %v1214
        %v1234 = vadd.f32 %v1231, 1e-05
        %v1235 = vadd.f32 %v1232, 1e-05
        %v1236 = vadd.f32 %v1233, 1e-05
        %v1237 = vrsqrt.pop %v1234
        %v1238 = vrsqrt.pop %v1235
        %v1239 = vrsqrt.pop %v1236
        %v1240 = vmul.f32 %v1218, %v1237
        %v1241 = vmul.f32 %v1219, %v1238
        %v1242 = vmul.f32 %v1220, %v1239
        %v1244 = vlaneseq
        %v1245 = vshrl.u32 %v1244, 7
        %v1246 = vsub.s32 0, %v1245
        %v1247 = vrot.slane %v1204, %v1246
        %v1249 = vmul.f32 %v1240, %v1247
        %v1250 = vmul.f32 %v1241, %v1247
        %v1251 = vmul.f32 %v1242, %v1247
        %v1253 = vlaneseq
        %v1254 = vshrl.u32 %v1253, 7
        %v1255 = vsub.s32 0, %v1254
        %v1256 = vrot.slane %v1205, %v1255
        %v1258 = vadd.f32 %v1249, %v1256
        %v1259 = vadd.f32 %v1250, %v1256
        %v1260 = vadd.f32 %v1251, %v1256
        %v1261 = vpack.c.bf16 %v1259, %v1258
        %v1262 = vpack.c.bf16 %v1260, %v1260
        %v1263 = vld [vmem:[%s806] sm:$0xff]
        %v1264 = vld [vmem:[%s806 + $0x8] sm:$0xff]
        %v1265 = vld [vmem:[%s806 + $0x10] sm:$0xff]
        %v1266 = vld [vmem:[%s806 + $0x18] sm:$0xff]
        %v1267 = vld [vmem:[%s806 + $0x20] sm:$0xff]
        %v1268 = vld [vmem:[%s806 + $0x28] sm:$0xff]
        %v1269 = vld [vmem:[%s806 + $0x30] sm:$0xff]
        %v1270 = vld [vmem:[%s806 + $0x38] sm:$0xff]
        %v1271 = vld [vmem:[%s806 + $0x40] sm:$0xff]
        %v1272 = vld [vmem:[%s806 + $0x48] sm:$0xff]
        %v1273 = vld [vmem:[%s806 + $0x50] sm:$0xff]
        %v1274 = vld [vmem:[%s806 + $0x58] sm:$0xff]
        %v1275 = vld [vmem:[%s806 + $0x60] sm:$0xff]
        %v1276 = vld [vmem:[%s806 + $0x68] sm:$0xff]
        %v1277 = vld [vmem:[%s806 + $0x70] sm:$0xff]
        %v1278 = vld [vmem:[%s806 + $0x78] sm:$0xff]
        %v1279 = vld [vmem:[%s806 + $0x80] sm:$0xff]
        %v1280 = vld [vmem:[%s806 + $0x88] sm:$0xff]
        %v1281 = vld [vmem:[%s806 + $0x90] sm:$0xff]
        %v1282 = vld [vmem:[%s806 + $0x98] sm:$0xff]
        %v1283 = vld [vmem:[%s806 + $0xa0] sm:$0xff]
        %v1284 = vld [vmem:[%s806 + $0xa8] sm:$0xff]
        %v1285 = vld [vmem:[%s806 + $0xb0] sm:$0xff]
        %v1286 = vld [vmem:[%s806 + $0xb8] sm:$0xff]
        %v1287 = vld [vmem:[%s806 + $0xc0] sm:$0xff]
        %v1288 = vld [vmem:[%s806 + $0xc8] sm:$0xff]
        %v1289 = vld [vmem:[%s806 + $0xd0] sm:$0xff]
        %v1290 = vld [vmem:[%s806 + $0xd8] sm:$0xff]
        %v1291 = vld [vmem:[%s806 + $0xe0] sm:$0xff]
        %v1292 = vld [vmem:[%s806 + $0xe8] sm:$0xff]
        %v1293 = vld [vmem:[%s806 + $0xf0] sm:$0xff]
        %v1294 = vld [vmem:[%s806 + $0xf8] sm:$0xff]
        %v1295 = vld [vmem:[%s806 + $0x100] sm:$0xff]
        %v1296 = vld [vmem:[%s806 + $0x108] sm:$0xff]
        %v1297 = vld [vmem:[%s806 + $0x110] sm:$0xff]
        %v1298 = vld [vmem:[%s806 + $0x118] sm:$0xff]
        %v1299 = vld [vmem:[%s806 + $0x120] sm:$0xff]
        %v1300 = vld [vmem:[%s806 + $0x128] sm:$0xff]
        %v1301 = vld [vmem:[%s806 + $0x130] sm:$0xff]
        %v1302 = vld [vmem:[%s806 + $0x138] sm:$0xff]
        %v1303 = vld [vmem:[%s806 + $0x140] sm:$0xff]
        %v1304 = vld [vmem:[%s806 + $0x148] sm:$0xff]
        %v1305 = vld [vmem:[%s806 + $0x150] sm:$0xff]
        %v1306 = vld [vmem:[%s806 + $0x158] sm:$0xff]
        %v1307 = vld [vmem:[%s806 + $0x160] sm:$0xff]
        %v1308 = vld [vmem:[%s806 + $0x168] sm:$0xff]
        %v1309 = vld [vmem:[%s806 + $0x170] sm:$0xff]
        %v1310 = vld [vmem:[%s806 + $0x178] sm:$0xff]
        %v1311 = vld [vmem:[%s806 + $0x180] sm:$0xff]
        %v1312 = vld [vmem:[%s806 + $0x188] sm:$0xff]
        %v1313 = vld [vmem:[%s806 + $0x190] sm:$0xff]
        %v1314 = vld [vmem:[%s806 + $0x198] sm:$0xff]
        %v1315 = vld [vmem:[%s806 + $0x1a0] sm:$0xff]
        %v1316 = vld [vmem:[%s806 + $0x1a8] sm:$0xff]
        %v1317 = vld [vmem:[%s806 + $0x1b0] sm:$0xff]
        %v1318 = vld [vmem:[%s806 + $0x1b8] sm:$0xff]
        %v1319 = vld [vmem:[%s806 + $0x1c0] sm:$0xff]
        %v1320 = vld [vmem:[%s806 + $0x1c8] sm:$0xff]
        %v1321 = vld [vmem:[%s806 + $0x1d0] sm:$0xff]
        %v1322 = vld [vmem:[%s806 + $0x1d8] sm:$0xff]
        %v1323 = vld [vmem:[%s806 + $0x1e0] sm:$0xff]
        %v1324 = vld [vmem:[%s806 + $0x1e8] sm:$0xff]
        %v1325 = vld [vmem:[%s806 + $0x1f0] sm:$0xff]
        %v1326 = vld [vmem:[%s806 + $0x1f8] sm:$0xff]
        %v1327 = vld [vmem:[%s806 + $0x200] sm:$0xff]
        %v1328 = vld [vmem:[%s806 + $0x208] sm:$0xff]
        %v1329 = vld [vmem:[%s806 + $0x210] sm:$0xff]
        %v1330 = vld [vmem:[%s806 + $0x218] sm:$0xff]
        %v1331 = vld [vmem:[%s806 + $0x220] sm:$0xff]
        %v1332 = vld [vmem:[%s806 + $0x228] sm:$0xff]
        %v1333 = vld [vmem:[%s806 + $0x230] sm:$0xff]
        %v1334 = vld [vmem:[%s806 + $0x238] sm:$0xff]
        %v1335 = vld [vmem:[%s806 + $0x240] sm:$0xff]
        %v1336 = vld [vmem:[%s806 + $0x248] sm:$0xff]
        %v1337 = vld [vmem:[%s806 + $0x250] sm:$0xff]
        %v1338 = vld [vmem:[%s806 + $0x258] sm:$0xff]
        %v1339 = vld [vmem:[%s806 + $0x260] sm:$0xff]
        %v1340 = vld [vmem:[%s806 + $0x268] sm:$0xff]
        %v1341 = vld [vmem:[%s806 + $0x270] sm:$0xff]
        %v1342 = vld [vmem:[%s806 + $0x278] sm:$0xff]
        %v1343 = vld [vmem:[%s806 + $0x280] sm:$0xff]
        %v1344 = vld [vmem:[%s806 + $0x288] sm:$0xff]
        %v1345 = vld [vmem:[%s806 + $0x290] sm:$0xff]
        %v1346 = vld [vmem:[%s806 + $0x298] sm:$0xff]
        %v1347 = vld [vmem:[%s806 + $0x2a0] sm:$0xff]
        %v1348 = vld [vmem:[%s806 + $0x2a8] sm:$0xff]
        %v1349 = vld [vmem:[%s806 + $0x2b0] sm:$0xff]
        %v1350 = vld [vmem:[%s806 + $0x2b8] sm:$0xff]
        %v1351 = vld [vmem:[%s806 + $0x2c0] sm:$0xff]
        %v1352 = vld [vmem:[%s806 + $0x2c8] sm:$0xff]
        %v1353 = vld [vmem:[%s806 + $0x2d0] sm:$0xff]
        %v1354 = vld [vmem:[%s806 + $0x2d8] sm:$0xff]
        %v1355 = vld [vmem:[%s806 + $0x2e0] sm:$0xff]
        %v1356 = vld [vmem:[%s806 + $0x2e8] sm:$0xff]
        %v1357 = vld [vmem:[%s806 + $0x2f0] sm:$0xff]
        %v1358 = vld [vmem:[%s806 + $0x2f8] sm:$0xff]
        %v1359 = vld [vmem:[%s815] sm:$0xff]
        %v1360 = vld [vmem:[%s815 + $0x8] sm:$0xf]
        %v1363 = vlaneseq
        %v1364 = vshrl.u32 %v1363, 7
        %v1365 = vsub.s32 0, %v1364
        %v1366 = vrot.slane %v1359, %v1365
        %v1367 = vlaneseq
        %v1368 = vshrl.u32 %v1367, 7
        %v1369 = vsub.s32 1, %v1368
        %v1370 = vrot.slane %v1359, %v1369
        %v1371 = vlaneseq
        %v1372 = vshrl.u32 %v1371, 7
        %v1373 = vsub.s32 2, %v1372
        %v1374 = vrot.slane %v1359, %v1373
        %v1375 = vlaneseq
        %v1376 = vshrl.u32 %v1375, 7
        %v1377 = vsub.s32 3, %v1376
        %v1378 = vrot.slane %v1359, %v1377
        %v1379 = vlaneseq
        %v1380 = vshrl.u32 %v1379, 7
        %v1381 = vsub.s32 4, %v1380
        %v1382 = vrot.slane %v1359, %v1381
        %v1383 = vlaneseq
        %v1384 = vshrl.u32 %v1383, 7
        %v1385 = vsub.s32 5, %v1384
        %v1386 = vrot.slane %v1359, %v1385
        %v1387 = vlaneseq
        %v1388 = vshrl.u32 %v1387, 7
        %v1389 = vsub.s32 6, %v1388
        %v1390 = vrot.slane %v1359, %v1389
        %v1391 = vlaneseq
        %v1392 = vshrl.u32 %v1391, 7
        %v1393 = vsub.s32 7, %v1392
        %v1394 = vrot.slane %v1359, %v1393
        %v1395 = vlaneseq
        %v1396 = vshrl.u32 %v1395, 7
        %v1397 = vsub.s32 0, %v1396
        %v1398 = vrot.slane %v1360, %v1397
        %v1399 = vlaneseq
        %v1400 = vshrl.u32 %v1399, 7
        %v1401 = vsub.s32 1, %v1400
        %v1402 = vrot.slane %v1360, %v1401
        %v1403 = vlaneseq
        %v1404 = vshrl.u32 %v1403, 7
        %v1405 = vsub.s32 2, %v1404
        %v1406 = vrot.slane %v1360, %v1405
        %v1407 = vlaneseq
        %v1408 = vshrl.u32 %v1407, 7
        %v1409 = vsub.s32 3, %v1408
        %v1410 = vrot.slane %v1360, %v1409
        %v1519 = vunpack.c.l.b16 %v1263
        %v1520 = vunpack.c.h.b16 %v1263
        %v1521 = vunpack.c.l.b16 %v1264
        %v1522 = vunpack.c.h.b16 %v1264
        %v1523 = vunpack.c.l.b16 %v1265
        %v1524 = vunpack.c.h.b16 %v1265
        %v1525 = vunpack.c.l.b16 %v1266
        %v1526 = vunpack.c.h.b16 %v1266
        %v1527 = vunpack.c.l.b16 %v1267
        %v1528 = vunpack.c.h.b16 %v1267
        %v1529 = vunpack.c.l.b16 %v1268
        %v1530 = vunpack.c.h.b16 %v1268
        %v1531 = vunpack.c.l.b16 %v1269
        %v1532 = vunpack.c.h.b16 %v1269
        %v1533 = vunpack.c.l.b16 %v1270
        %v1534 = vunpack.c.h.b16 %v1270
        %v1535 = vunpack.c.l.b16 %v1271
        %v1536 = vunpack.c.h.b16 %v1271
        %v1537 = vunpack.c.l.b16 %v1272
        %v1538 = vunpack.c.h.b16 %v1272
        %v1539 = vunpack.c.l.b16 %v1273
        %v1540 = vunpack.c.h.b16 %v1273
        %v1541 = vunpack.c.l.b16 %v1274
        %v1542 = vunpack.c.h.b16 %v1274
        %v1543 = vunpack.c.l.b16 %v1275
        %v1544 = vunpack.c.h.b16 %v1275
        %v1545 = vunpack.c.l.b16 %v1276
        %v1546 = vunpack.c.h.b16 %v1276
        %v1547 = vunpack.c.l.b16 %v1277
        %v1548 = vunpack.c.h.b16 %v1277
        %v1549 = vunpack.c.l.b16 %v1278
        %v1550 = vunpack.c.h.b16 %v1278
        %v1551 = vunpack.c.l.b16 %v1279
        %v1552 = vunpack.c.h.b16 %v1279
        %v1553 = vunpack.c.l.b16 %v1280
        %v1554 = vunpack.c.h.b16 %v1280
        %v1555 = vunpack.c.l.b16 %v1281
        %v1556 = vunpack.c.h.b16 %v1281
        %v1557 = vunpack.c.l.b16 %v1282
        %v1558 = vunpack.c.h.b16 %v1282
        %v1559 = vunpack.c.l.b16 %v1283
        %v1560 = vunpack.c.h.b16 %v1283
        %v1561 = vunpack.c.l.b16 %v1284
        %v1562 = vunpack.c.h.b16 %v1284
        %v1563 = vunpack.c.l.b16 %v1285
        %v1564 = vunpack.c.h.b16 %v1285
        %v1565 = vunpack.c.l.b16 %v1286
        %v1566 = vunpack.c.h.b16 %v1286
        %v1567 = vunpack.c.l.b16 %v1287
        %v1568 = vunpack.c.h.b16 %v1287
        %v1569 = vunpack.c.l.b16 %v1288
        %v1570 = vunpack.c.h.b16 %v1288
        %v1571 = vunpack.c.l.b16 %v1289
        %v1572 = vunpack.c.h.b16 %v1289
        %v1573 = vunpack.c.l.b16 %v1290
        %v1574 = vunpack.c.h.b16 %v1290
        %v1575 = vunpack.c.l.b16 %v1291
        %v1576 = vunpack.c.h.b16 %v1291
        %v1577 = vunpack.c.l.b16 %v1292
        %v1578 = vunpack.c.h.b16 %v1292
        %v1579 = vunpack.c.l.b16 %v1293
        %v1580 = vunpack.c.h.b16 %v1293
        %v1581 = vunpack.c.l.b16 %v1294
        %v1582 = vunpack.c.h.b16 %v1294
        %v1583 = vunpack.c.l.b16 %v1295
        %v1584 = vunpack.c.h.b16 %v1295
        %v1585 = vunpack.c.l.b16 %v1296
        %v1586 = vunpack.c.h.b16 %v1296
        %v1587 = vunpack.c.l.b16 %v1297
        %v1588 = vunpack.c.h.b16 %v1297
        %v1589 = vunpack.c.l.b16 %v1298
        %v1590 = vunpack.c.h.b16 %v1298
        %v1591 = vunpack.c.l.b16 %v1299
        %v1592 = vunpack.c.h.b16 %v1299
        %v1593 = vunpack.c.l.b16 %v1300
        %v1594 = vunpack.c.h.b16 %v1300
        %v1595 = vunpack.c.l.b16 %v1301
        %v1596 = vunpack.c.h.b16 %v1301
        %v1597 = vunpack.c.l.b16 %v1302
        %v1598 = vunpack.c.h.b16 %v1302
        %v1599 = vunpack.c.l.b16 %v1303
        %v1600 = vunpack.c.h.b16 %v1303
        %v1601 = vunpack.c.l.b16 %v1304
        %v1602 = vunpack.c.h.b16 %v1304
        %v1603 = vunpack.c.l.b16 %v1305
        %v1604 = vunpack.c.h.b16 %v1305
        %v1605 = vunpack.c.l.b16 %v1306
        %v1606 = vunpack.c.h.b16 %v1306
        %v1607 = vunpack.c.l.b16 %v1307
        %v1608 = vunpack.c.h.b16 %v1307
        %v1609 = vunpack.c.l.b16 %v1308
        %v1610 = vunpack.c.h.b16 %v1308
        %v1611 = vunpack.c.l.b16 %v1309
        %v1612 = vunpack.c.h.b16 %v1309
        %v1613 = vunpack.c.l.b16 %v1310
        %v1614 = vunpack.c.h.b16 %v1310
        %v1615 = vunpack.c.l.b16 %v1311
        %v1616 = vunpack.c.h.b16 %v1311
        %v1617 = vunpack.c.l.b16 %v1312
        %v1618 = vunpack.c.h.b16 %v1312
        %v1619 = vunpack.c.l.b16 %v1313
        %v1620 = vunpack.c.h.b16 %v1313
        %v1621 = vunpack.c.l.b16 %v1314
        %v1622 = vunpack.c.h.b16 %v1314
        %v1623 = vunpack.c.l.b16 %v1315
        %v1624 = vunpack.c.h.b16 %v1315
        %v1625 = vunpack.c.l.b16 %v1316
        %v1626 = vunpack.c.h.b16 %v1316
        %v1627 = vunpack.c.l.b16 %v1317
        %v1628 = vunpack.c.h.b16 %v1317
        %v1629 = vunpack.c.l.b16 %v1318
        %v1630 = vunpack.c.h.b16 %v1318
        %v1631 = vunpack.c.l.b16 %v1319
        %v1632 = vunpack.c.h.b16 %v1319
        %v1633 = vunpack.c.l.b16 %v1320
        %v1634 = vunpack.c.h.b16 %v1320
        %v1635 = vunpack.c.l.b16 %v1321
        %v1636 = vunpack.c.h.b16 %v1321
        %v1637 = vunpack.c.l.b16 %v1322
        %v1638 = vunpack.c.h.b16 %v1322
        %v1639 = vunpack.c.l.b16 %v1323
        %v1640 = vunpack.c.h.b16 %v1323
        %v1641 = vunpack.c.l.b16 %v1324
        %v1642 = vunpack.c.h.b16 %v1324
        %v1643 = vunpack.c.l.b16 %v1325
        %v1644 = vunpack.c.h.b16 %v1325
        %v1645 = vunpack.c.l.b16 %v1326
        %v1646 = vunpack.c.h.b16 %v1326
        %v1647 = vunpack.c.l.b16 %v1327
        %v1648 = vunpack.c.h.b16 %v1327
        %v1649 = vunpack.c.l.b16 %v1328
        %v1650 = vunpack.c.h.b16 %v1328
        %v1651 = vunpack.c.l.b16 %v1329
        %v1652 = vunpack.c.h.b16 %v1329
        %v1653 = vunpack.c.l.b16 %v1330
        %v1654 = vunpack.c.h.b16 %v1330
        %v1655 = vunpack.c.l.b16 %v1331
        %v1656 = vunpack.c.h.b16 %v1331
        %v1657 = vunpack.c.l.b16 %v1332
        %v1658 = vunpack.c.h.b16 %v1332
        %v1659 = vunpack.c.l.b16 %v1333
        %v1660 = vunpack.c.h.b16 %v1333
        %v1661 = vunpack.c.l.b16 %v1334
        %v1662 = vunpack.c.h.b16 %v1334
        %v1663 = vunpack.c.l.b16 %v1335
        %v1664 = vunpack.c.h.b16 %v1335
        %v1665 = vunpack.c.l.b16 %v1336
        %v1666 = vunpack.c.h.b16 %v1336
        %v1667 = vunpack.c.l.b16 %v1337
        %v1668 = vunpack.c.h.b16 %v1337
        %v1669 = vunpack.c.l.b16 %v1338
        %v1670 = vunpack.c.h.b16 %v1338
        %v1671 = vunpack.c.l.b16 %v1339
        %v1672 = vunpack.c.h.b16 %v1339
        %v1673 = vunpack.c.l.b16 %v1340
        %v1674 = vunpack.c.h.b16 %v1340
        %v1675 = vunpack.c.l.b16 %v1341
        %v1676 = vunpack.c.h.b16 %v1341
        %v1677 = vunpack.c.l.b16 %v1342
        %v1678 = vunpack.c.h.b16 %v1342
        %v1679 = vunpack.c.l.b16 %v1343
        %v1680 = vunpack.c.h.b16 %v1343
        %v1681 = vunpack.c.l.b16 %v1344
        %v1682 = vunpack.c.h.b16 %v1344
        %v1683 = vunpack.c.l.b16 %v1345
        %v1684 = vunpack.c.h.b16 %v1345
        %v1685 = vunpack.c.l.b16 %v1346
        %v1686 = vunpack.c.h.b16 %v1346
        %v1687 = vunpack.c.l.b16 %v1347
        %v1688 = vunpack.c.h.b16 %v1347
        %v1689 = vunpack.c.l.b16 %v1348
        %v1690 = vunpack.c.h.b16 %v1348
        %v1691 = vunpack.c.l.b16 %v1349
        %v1692 = vunpack.c.h.b16 %v1349
        %v1693 = vunpack.c.l.b16 %v1350
        %v1694 = vunpack.c.h.b16 %v1350
        %v1695 = vunpack.c.l.b16 %v1351
        %v1696 = vunpack.c.h.b16 %v1351
        %v1697 = vunpack.c.l.b16 %v1352
        %v1698 = vunpack.c.h.b16 %v1352
        %v1699 = vunpack.c.l.b16 %v1353
        %v1700 = vunpack.c.h.b16 %v1353
        %v1701 = vunpack.c.l.b16 %v1354
        %v1702 = vunpack.c.h.b16 %v1354
        %v1703 = vunpack.c.l.b16 %v1355
        %v1704 = vunpack.c.h.b16 %v1355
        %v1705 = vunpack.c.l.b16 %v1356
        %v1706 = vunpack.c.h.b16 %v1356
        %v1707 = vunpack.c.l.b16 %v1357
        %v1708 = vunpack.c.h.b16 %v1357
        %v1709 = vunpack.c.l.b16 %v1358
        %v1710 = vunpack.c.h.b16 %v1358
        %v1711 = vpack.c.b16 %v1531, %v1519
        %v1712 = vpack.c.b16 %v1532, %v1520
        %v1713 = vpack.c.b16 %v1533, %v1521
        %v1714 = vpack.c.b16 %v1534, %v1522
        %v1715 = vpack.c.b16 %v1535, %v1523
        %v1716 = vpack.c.b16 %v1536, %v1524
        %v1717 = vpack.c.b16 %v1537, %v1525
        %v1718 = vpack.c.b16 %v1538, %v1526
        %v1719 = vpack.c.b16 %v1539, %v1527
        %v1720 = vpack.c.b16 %v1540, %v1528
        %v1721 = vpack.c.b16 %v1541, %v1529
        %v1722 = vpack.c.b16 %v1542, %v1530
        %v1723 = vpack.c.b16 %v1555, %v1543
        %v1724 = vpack.c.b16 %v1556, %v1544
        %v1725 = vpack.c.b16 %v1557, %v1545
        %v1726 = vpack.c.b16 %v1558, %v1546
        %v1727 = vpack.c.b16 %v1559, %v1547
        %v1728 = vpack.c.b16 %v1560, %v1548
        %v1729 = vpack.c.b16 %v1561, %v1549
        %v1730 = vpack.c.b16 %v1562, %v1550
        %v1731 = vpack.c.b16 %v1563, %v1551
        %v1732 = vpack.c.b16 %v1564, %v1552
        %v1733 = vpack.c.b16 %v1565, %v1553
        %v1734 = vpack.c.b16 %v1566, %v1554
        %v1735 = vpack.c.b16 %v1579, %v1567
        %v1736 = vpack.c.b16 %v1580, %v1568
        %v1737 = vpack.c.b16 %v1581, %v1569
        %v1738 = vpack.c.b16 %v1582, %v1570
        %v1739 = vpack.c.b16 %v1583, %v1571
        %v1740 = vpack.c.b16 %v1584, %v1572
        %v1741 = vpack.c.b16 %v1585, %v1573
        %v1742 = vpack.c.b16 %v1586, %v1574
        %v1743 = vpack.c.b16 %v1587, %v1575
        %v1744 = vpack.c.b16 %v1588, %v1576
        %v1745 = vpack.c.b16 %v1589, %v1577
        %v1746 = vpack.c.b16 %v1590, %v1578
        %v1747 = vpack.c.b16 %v1603, %v1591
        %v1748 = vpack.c.b16 %v1604, %v1592
        %v1749 = vpack.c.b16 %v1605, %v1593
        %v1750 = vpack.c.b16 %v1606, %v1594
        %v1751 = vpack.c.b16 %v1607, %v1595
        %v1752 = vpack.c.b16 %v1608, %v1596
        %v1753 = vpack.c.b16 %v1609, %v1597
        %v1754 = vpack.c.b16 %v1610, %v1598
        %v1755 = vpack.c.b16 %v1611, %v1599
        %v1756 = vpack.c.b16 %v1612, %v1600
        %v1757 = vpack.c.b16 %v1613, %v1601
        %v1758 = vpack.c.b16 %v1614, %v1602
        %v1759 = vpack.c.b16 %v1627, %v1615
        %v1760 = vpack.c.b16 %v1628, %v1616
        %v1761 = vpack.c.b16 %v1629, %v1617
        %v1762 = vpack.c.b16 %v1630, %v1618
        %v1763 = vpack.c.b16 %v1631, %v1619
        %v1764 = vpack.c.b16 %v1632, %v1620
        %v1765 = vpack.c.b16 %v1633, %v1621
        %v1766 = vpack.c.b16 %v1634, %v1622
        %v1767 = vpack.c.b16 %v1635, %v1623
        %v1768 = vpack.c.b16 %v1636, %v1624
        %v1769 = vpack.c.b16 %v1637, %v1625
        %v1770 = vpack.c.b16 %v1638, %v1626
        %v1771 = vpack.c.b16 %v1651, %v1639
        %v1772 = vpack.c.b16 %v1652, %v1640
        %v1773 = vpack.c.b16 %v1653, %v1641
        %v1774 = vpack.c.b16 %v1654, %v1642
        %v1775 = vpack.c.b16 %v1655, %v1643
        %v1776 = vpack.c.b16 %v1656, %v1644
        %v1777 = vpack.c.b16 %v1657, %v1645
        %v1778 = vpack.c.b16 %v1658, %v1646
        %v1779 = vpack.c.b16 %v1659, %v1647
        %v1780 = vpack.c.b16 %v1660, %v1648
        %v1781 = vpack.c.b16 %v1661, %v1649
        %v1782 = vpack.c.b16 %v1662, %v1650
        %v1783 = vpack.c.b16 %v1675, %v1663
        %v1784 = vpack.c.b16 %v1676, %v1664
        %v1785 = vpack.c.b16 %v1677, %v1665
        %v1786 = vpack.c.b16 %v1678, %v1666
        %v1787 = vpack.c.b16 %v1679, %v1667
        %v1788 = vpack.c.b16 %v1680, %v1668
        %v1789 = vpack.c.b16 %v1681, %v1669
        %v1790 = vpack.c.b16 %v1682, %v1670
        %v1791 = vpack.c.b16 %v1683, %v1671
        %v1792 = vpack.c.b16 %v1684, %v1672
        %v1793 = vpack.c.b16 %v1685, %v1673
        %v1794 = vpack.c.b16 %v1686, %v1674
        %v1795 = vpack.c.b16 %v1699, %v1687
        %v1796 = vpack.c.b16 %v1700, %v1688
        %v1797 = vpack.c.b16 %v1701, %v1689
        %v1798 = vpack.c.b16 %v1702, %v1690
        %v1799 = vpack.c.b16 %v1703, %v1691
        %v1800 = vpack.c.b16 %v1704, %v1692
        %v1801 = vpack.c.b16 %v1705, %v1693
        %v1802 = vpack.c.b16 %v1706, %v1694
        %v1803 = vpack.c.b16 %v1707, %v1695
        %v1804 = vpack.c.b16 %v1708, %v1696
        %v1805 = vpack.c.b16 %v1709, %v1697
        %v1806 = vpack.c.b16 %v1710, %v1698
        %1903 = vmatprep.subr.bf16.mxu0 %v1796
        %1904 = vmatpush1.bf16.msra.mxu0 %v1795
        %1905 = vmatprep.subr.bf16.mxu0 %v1784
        %1906 = vmatpush1.bf16.msra.mxu0 %v1783
        %1907 = vmatprep.subr.bf16.mxu0 %v1772
        %1908 = vmatpush1.bf16.msra.mxu0 %v1771
        %1909 = vmatprep.subr.bf16.mxu0 %v1760
        %1910 = vmatpush1.bf16.msra.mxu0 %v1759
        %1911 = vmatprep.subr.bf16.mxu0 %v1748
        %1912 = vmatpush1.bf16.msra.mxu0 %v1747
        %1913 = vmatprep.subr.bf16.mxu0 %v1736
        %1914 = vmatpush1.bf16.msra.mxu0 %v1735
        %1915 = vmatprep.subr.bf16.mxu0 %v1724
        %1916 = vmatpush1.bf16.msra.mxu0 %v1723
        %1917 = vmatprep.subr.bf16.mxu0 %v1712
        %1918 = vmatpush1.bf16.msra.mxu0 %v1711
        %1919 = vmatprep.subr.bf16.mxu0 0
        %1920 = vmatpush2.bf16.msra.mxu0 0
        %1921 = vmatprep.subr.bf16.mxu0 0
        %1922 = vmatpush2.bf16.msra.mxu0 0
        %1923 = vmatprep.subr.bf16.mxu0 0
        %1924 = vmatpush2.bf16.msra.mxu0 0
        %1925 = vmatprep.subr.bf16.mxu0 0
        %1926 = vmatpush2.bf16.msra.mxu0 0
        %1927 = vmatprep.subr.bf16.mxu0 0
        %1928 = vmatpush2.bf16.msra.mxu0 0
        %1929 = vmatprep.subr.bf16.mxu0 0
        %1930 = vmatpush2.bf16.msra.mxu0 0
        %1931 = vmatprep.subr.bf16.mxu0 0
        %1932 = vmatpush2.bf16.msra.mxu0 0
        %1933 = vmatprep.subr.bf16.mxu0 0
        %1934 = vmatpush2.bf16.msra.mxu0 0
        %1935 = vmatprep.mubr.bf16.mxu0 0
        %1936 = vmatmul.mubr.bf16.gmra.mxu0 %v1261
        %v1937 = vpop.f32.mrf.mxu0
        %v1938 = vadd.f32 %v1366, %v1937
        %v1939 = vpop.f32.mrf.mxu0
        %v1940 = vadd.f32 %v1370, %v1939
        %v1941 = vpop.f32.mrf.mxu0
        %v1942 = vadd.f32 %v1366, %v1941
        %v1943 = vpop.f32.mrf.mxu0
        %v1944 = vadd.f32 %v1370, %v1943
        %1945 = vmatprep.mubr.bf16.mxu0 0
        %1946 = vmatmul.mubr.bf16.gmra.mxu0 %v1262
        %v1947 = vpop.f32.mrf.mxu0
        %v1948 = vadd.f32 %v1366, %v1947
        %v1949 = vpop.f32.mrf.mxu0
        %v1950 = vadd.f32 %v1370, %v1949
        %v1951 = vpop.f32.mrf.mxu0
        %v1952 = vpop.f32.mrf.mxu0
        %1953 = vdwg.mxu0
        %1954 = vmatprep.subr.bf16.mxu0 %v1798
        %1955 = vmatpush1.bf16.msra.mxu0 %v1797
        %1956 = vmatprep.subr.bf16.mxu0 %v1786
        %1957 = vmatpush1.bf16.msra.mxu0 %v1785
        %1958 = vmatprep.subr.bf16.mxu0 %v1774
        %1959 = vmatpush1.bf16.msra.mxu0 %v1773
        %1960 = vmatprep.subr.bf16.mxu0 %v1762
        %1961 = vmatpush1.bf16.msra.mxu0 %v1761
        %1962 = vmatprep.subr.bf16.mxu0 %v1750
        %1963 = vmatpush1.bf16.msra.mxu0 %v1749
        %1964 = vmatprep.subr.bf16.mxu0 %v1738
        %1965 = vmatpush1.bf16.msra.mxu0 %v1737
        %1966 = vmatprep.subr.bf16.mxu0 %v1726
        %1967 = vmatpush1.bf16.msra.mxu0 %v1725
        %1968 = vmatprep.subr.bf16.mxu0 %v1714
        %1969 = vmatpush1.bf16.msra.mxu0 %v1713
        %1970 = vmatprep.subr.bf16.mxu0 0
        %1971 = vmatpush2.bf16.msra.mxu0 0
        %1972 = vmatprep.subr.bf16.mxu0 0
        %1973 = vmatpush2.bf16.msra.mxu0 0
        %1974 = vmatprep.subr.bf16.mxu0 0
        %1975 = vmatpush2.bf16.msra.mxu0 0
        %1976 = vmatprep.subr.bf16.mxu0 0
        %1977 = vmatpush2.bf16.msra.mxu0 0
        %1978 = vmatprep.subr.bf16.mxu0 0
        %1979 = vmatpush2.bf16.msra.mxu0 0
        %1980 = vmatprep.subr.bf16.mxu0 0
        %1981 = vmatpush2.bf16.msra.mxu0 0
        %1982 = vmatprep.subr.bf16.mxu0 0
        %1983 = vmatpush2.bf16.msra.mxu0 0
        %1984 = vmatprep.subr.bf16.mxu0 0
        %1985 = vmatpush2.bf16.msra.mxu0 0
        %1986 = vmatprep.mubr.bf16.mxu0 0
        %1987 = vmatmul.mubr.bf16.gmra.mxu0 %v1261
        %v1988 = vpop.f32.mrf.mxu0
        %v1989 = vadd.f32 %v1374, %v1988
        %v1990 = vpop.f32.mrf.mxu0
        %v1991 = vadd.f32 %v1378, %v1990
        %v1992 = vpop.f32.mrf.mxu0
        %v1993 = vadd.f32 %v1374, %v1992
        %v1994 = vpop.f32.mrf.mxu0
        %v1995 = vadd.f32 %v1378, %v1994
        %1996 = vmatprep.mubr.bf16.mxu0 0
        %1997 = vmatmul.mubr.bf16.gmra.mxu0 %v1262
        %v1998 = vpop.f32.mrf.mxu0
        %v1999 = vadd.f32 %v1374, %v1998
        %v2000 = vpop.f32.mrf.mxu0
        %v2001 = vadd.f32 %v1378, %v2000
        %v2002 = vpop.f32.mrf.mxu0
        %v2003 = vpop.f32.mrf.mxu0
        %2004 = vdwg.mxu0
        %2005 = vmatprep.subr.bf16.mxu0 %v1800
        %2006 = vmatpush1.bf16.msra.mxu0 %v1799
        %2007 = vmatprep.subr.bf16.mxu0 %v1788
        %2008 = vmatpush1.bf16.msra.mxu0 %v1787
        %2009 = vmatprep.subr.bf16.mxu0 %v1776
        %2010 = vmatpush1.bf16.msra.mxu0 %v1775
        %2011 = vmatprep.subr.bf16.mxu0 %v1764
        %2012 = vmatpush1.bf16.msra.mxu0 %v1763
        %2013 = vmatprep.subr.bf16.mxu0 %v1752
        %2014 = vmatpush1.bf16.msra.mxu0 %v1751
        %2015 = vmatprep.subr.bf16.mxu0 %v1740
        %2016 = vmatpush1.bf16.msra.mxu0 %v1739
        %2017 = vmatprep.subr.bf16.mxu0 %v1728
        %2018 = vmatpush1.bf16.msra.mxu0 %v1727
        %2019 = vmatprep.subr.bf16.mxu0 %v1716
        %2020 = vmatpush1.bf16.msra.mxu0 %v1715
        %2021 = vmatprep.subr.bf16.mxu0 0
        %2022 = vmatpush2.bf16.msra.mxu0 0
        %2023 = vmatprep.subr.bf16.mxu0 0
        %2024 = vmatpush2.bf16.msra.mxu0 0
        %2025 = vmatprep.subr.bf16.mxu0 0
        %2026 = vmatpush2.bf16.msra.mxu0 0
        %2027 = vmatprep.subr.bf16.mxu0 0
        %2028 = vmatpush2.bf16.msra.mxu0 0
        %2029 = vmatprep.subr.bf16.mxu0 0
        %2030 = vmatpush2.bf16.msra.mxu0 0
        %2031 = vmatprep.subr.bf16.mxu0 0
        %2032 = vmatpush2.bf16.msra.mxu0 0
        %2033 = vmatprep.subr.bf16.mxu0 0
        %2034 = vmatpush2.bf16.msra.mxu0 0
        %2035 = vmatprep.subr.bf16.mxu0 0
        %2036 = vmatpush2.bf16.msra.mxu0 0
        %2037 = vmatprep.mubr.bf16.mxu0 0
        %2038 = vmatmul.mubr.bf16.gmra.mxu0 %v1261
        %v2039 = vpop.f32.mrf.mxu0
        %v2040 = vadd.f32 %v1382, %v2039
        %v2041 = vpop.f32.mrf.mxu0
        %v2042 = vadd.f32 %v1386, %v2041
        %v2043 = vpop.f32.mrf.mxu0
        %v2044 = vadd.f32 %v1382, %v2043
        %v2045 = vpop.f32.mrf.mxu0
        %v2046 = vadd.f32 %v1386, %v2045
        %2047 = vmatprep.mubr.bf16.mxu0 0
        %2048 = vmatmul.mubr.bf16.gmra.mxu0 %v1262
        %v2049 = vpop.f32.mrf.mxu0
        %v2050 = vadd.f32 %v1382, %v2049
        %v2051 = vpop.f32.mrf.mxu0
        %v2052 = vadd.f32 %v1386, %v2051
        %v2053 = vpop.f32.mrf.mxu0
        %v2054 = vpop.f32.mrf.mxu0
        %2055 = vdwg.mxu0
        %2056 = vmatprep.subr.bf16.mxu0 %v1802
        %2057 = vmatpush1.bf16.msra.mxu0 %v1801
        %2058 = vmatprep.subr.bf16.mxu0 %v1790
        %2059 = vmatpush1.bf16.msra.mxu0 %v1789
        %2060 = vmatprep.subr.bf16.mxu0 %v1778
        %2061 = vmatpush1.bf16.msra.mxu0 %v1777
        %2062 = vmatprep.subr.bf16.mxu0 %v1766
        %2063 = vmatpush1.bf16.msra.mxu0 %v1765
        %2064 = vmatprep.subr.bf16.mxu0 %v1754
        %2065 = vmatpush1.bf16.msra.mxu0 %v1753
        %2066 = vmatprep.subr.bf16.mxu0 %v1742
        %2067 = vmatpush1.bf16.msra.mxu0 %v1741
        %2068 = vmatprep.subr.bf16.mxu0 %v1730
        %2069 = vmatpush1.bf16.msra.mxu0 %v1729
        %2070 = vmatprep.subr.bf16.mxu0 %v1718
        %2071 = vmatpush1.bf16.msra.mxu0 %v1717
        %2072 = vmatprep.subr.bf16.mxu0 0
        %2073 = vmatpush2.bf16.msra.mxu0 0
        %2074 = vmatprep.subr.bf16.mxu0 0
        %2075 = vmatpush2.bf16.msra.mxu0 0
        %2076 = vmatprep.subr.bf16.mxu0 0
        %2077 = vmatpush2.bf16.msra.mxu0 0
        %2078 = vmatprep.subr.bf16.mxu0 0
        %2079 = vmatpush2.bf16.msra.mxu0 0
        %2080 = vmatprep.subr.bf16.mxu0 0
        %2081 = vmatpush2.bf16.msra.mxu0 0
        %2082 = vmatprep.subr.bf16.mxu0 0
        %2083 = vmatpush2.bf16.msra.mxu0 0
        %2084 = vmatprep.subr.bf16.mxu0 0
        %2085 = vmatpush2.bf16.msra.mxu0 0
        %2086 = vmatprep.subr.bf16.mxu0 0
        %2087 = vmatpush2.bf16.msra.mxu0 0
        %2088 = vmatprep.mubr.bf16.mxu0 0
        %2089 = vmatmul.mubr.bf16.gmra.mxu0 %v1261
        %v2090 = vpop.f32.mrf.mxu0
        %v2091 = vadd.f32 %v1390, %v2090
        %v2092 = vpop.f32.mrf.mxu0
        %v2093 = vadd.f32 %v1394, %v2092
        %v2094 = vpop.f32.mrf.mxu0
        %v2095 = vadd.f32 %v1390, %v2094
        %v2096 = vpop.f32.mrf.mxu0
        %v2097 = vadd.f32 %v1394, %v2096
        %2098 = vmatprep.mubr.bf16.mxu0 0
        %2099 = vmatmul.mubr.bf16.gmra.mxu0 %v1262
        %v2100 = vpop.f32.mrf.mxu0
        %v2101 = vadd.f32 %v1390, %v2100
        %v2102 = vpop.f32.mrf.mxu0
        %v2103 = vadd.f32 %v1394, %v2102
        %v2104 = vpop.f32.mrf.mxu0
        %v2105 = vpop.f32.mrf.mxu0
        %2106 = vdwg.mxu0
        %2107 = vmatprep.subr.bf16.mxu0 %v1804
        %2108 = vmatpush1.bf16.msra.mxu0 %v1803
        %2109 = vmatprep.subr.bf16.mxu0 %v1792
        %2110 = vmatpush1.bf16.msra.mxu0 %v1791
        %2111 = vmatprep.subr.bf16.mxu0 %v1780
        %2112 = vmatpush1.bf16.msra.mxu0 %v1779
        %2113 = vmatprep.subr.bf16.mxu0 %v1768
        %2114 = vmatpush1.bf16.msra.mxu0 %v1767
        %2115 = vmatprep.subr.bf16.mxu0 %v1756
        %2116 = vmatpush1.bf16.msra.mxu0 %v1755
        %2117 = vmatprep.subr.bf16.mxu0 %v1744
        %2118 = vmatpush1.bf16.msra.mxu0 %v1743
        %2119 = vmatprep.subr.bf16.mxu0 %v1732
        %2120 = vmatpush1.bf16.msra.mxu0 %v1731
        %2121 = vmatprep.subr.bf16.mxu0 %v1720
        %2122 = vmatpush1.bf16.msra.mxu0 %v1719
        %2123 = vmatprep.subr.bf16.mxu0 0
        %2124 = vmatpush2.bf16.msra.mxu0 0
        %2125 = vmatprep.subr.bf16.mxu0 0
        %2126 = vmatpush2.bf16.msra.mxu0 0
        %2127 = vmatprep.subr.bf16.mxu0 0
        %2128 = vmatpush2.bf16.msra.mxu0 0
        %2129 = vmatprep.subr.bf16.mxu0 0
        %2130 = vmatpush2.bf16.msra.mxu0 0
        %2131 = vmatprep.subr.bf16.mxu0 0
        %2132 = vmatpush2.bf16.msra.mxu0 0
        %2133 = vmatprep.subr.bf16.mxu0 0
        %2134 = vmatpush2.bf16.msra.mxu0 0
        %2135 = vmatprep.subr.bf16.mxu0 0
        %2136 = vmatpush2.bf16.msra.mxu0 0
        %2137 = vmatprep.subr.bf16.mxu0 0
        %2138 = vmatpush2.bf16.msra.mxu0 0
        %2139 = vmatprep.mubr.bf16.mxu0 0
        %2140 = vmatmul.mubr.bf16.gmra.mxu0 %v1261
        %v2141 = vpop.f32.mrf.mxu0
        %v2142 = vadd.f32 %v1398, %v2141
        %v2143 = vpop.f32.mrf.mxu0
        %v2144 = vadd.f32 %v1402, %v2143
        %v2145 = vpop.f32.mrf.mxu0
        %v2146 = vadd.f32 %v1398, %v2145
        %v2147 = vpop.f32.mrf.mxu0
        %v2148 = vadd.f32 %v1402, %v2147
        %2149 = vmatprep.mubr.bf16.mxu0 0
        %2150 = vmatmul.mubr.bf16.gmra.mxu0 %v1262
        %v2151 = vpop.f32.mrf.mxu0
        %v2152 = vadd.f32 %v1398, %v2151
        %v2153 = vpop.f32.mrf.mxu0
        %v2154 = vadd.f32 %v1402, %v2153
        %v2155 = vpop.f32.mrf.mxu0
        %v2156 = vpop.f32.mrf.mxu0
        %2157 = vdwg.mxu0
        %2158 = vmatprep.subr.bf16.mxu0 %v1806
        %2159 = vmatpush1.bf16.msra.mxu0 %v1805
        %2160 = vmatprep.subr.bf16.mxu0 %v1794
        %2161 = vmatpush1.bf16.msra.mxu0 %v1793
        %2162 = vmatprep.subr.bf16.mxu0 %v1782
        %2163 = vmatpush1.bf16.msra.mxu0 %v1781
        %2164 = vmatprep.subr.bf16.mxu0 %v1770
        %2165 = vmatpush1.bf16.msra.mxu0 %v1769
        %2166 = vmatprep.subr.bf16.mxu0 %v1758
        %2167 = vmatpush1.bf16.msra.mxu0 %v1757
        %2168 = vmatprep.subr.bf16.mxu0 %v1746
        %2169 = vmatpush1.bf16.msra.mxu0 %v1745
        %2170 = vmatprep.subr.bf16.mxu0 %v1734
        %2171 = vmatpush1.bf16.msra.mxu0 %v1733
        %2172 = vmatprep.subr.bf16.mxu0 %v1722
        %2173 = vmatpush1.bf16.msra.mxu0 %v1721
        %2174 = vmatprep.subr.bf16.mxu0 0
        %2175 = vmatpush2.bf16.msra.mxu0 0
        %2176 = vmatprep.subr.bf16.mxu0 0
        %2177 = vmatpush2.bf16.msra.mxu0 0
        %2178 = vmatprep.subr.bf16.mxu0 0
        %2179 = vmatpush2.bf16.msra.mxu0 0
        %2180 = vmatprep.subr.bf16.mxu0 0
        %2181 = vmatpush2.bf16.msra.mxu0 0
        %2182 = vmatprep.subr.bf16.mxu0 0
        %2183 = vmatpush2.bf16.msra.mxu0 0
        %2184 = vmatprep.subr.bf16.mxu0 0
        %2185 = vmatpush2.bf16.msra.mxu0 0
        %2186 = vmatprep.subr.bf16.mxu0 0
        %2187 = vmatpush2.bf16.msra.mxu0 0
        %2188 = vmatprep.subr.bf16.mxu0 0
        %2189 = vmatpush2.bf16.msra.mxu0 0
        %2190 = vmatprep.mubr.bf16.mxu0 0
        %2191 = vmatmul.mubr.bf16.gmra.mxu0 %v1261
        %v2192 = vpop.f32.mrf.mxu0
        %v2193 = vadd.f32 %v1406, %v2192
        %v2194 = vpop.f32.mrf.mxu0
        %v2195 = vadd.f32 %v1410, %v2194
        %v2196 = vpop.f32.mrf.mxu0
        %v2197 = vadd.f32 %v1406, %v2196
        %v2198 = vpop.f32.mrf.mxu0
        %v2199 = vadd.f32 %v1410, %v2198
        %2200 = vmatprep.mubr.bf16.mxu0 0
        %2201 = vmatmul.mubr.bf16.gmra.mxu0 %v1262
        %v2202 = vpop.f32.mrf.mxu0
        %v2203 = vadd.f32 %v1406, %v2202
        %v2204 = vpop.f32.mrf.mxu0
        %v2205 = vadd.f32 %v1410, %v2204
        %v2206 = vpop.f32.mrf.mxu0
        %v2207 = vpop.f32.mrf.mxu0
        %2208 = vdwg.mxu0
        %v2209 = vld [vmem:[%s824] sm:$0xf]
        %v2210 = vld [vmem:[%s824 + $0x4] sm:$0xf]
        %v2211 = vld [vmem:[%s824 + $0x8] sm:$0xf]
        %v2212 = vld [vmem:[%s824 + $0xc] sm:$0xf]
        %v2213 = vld [vmem:[%s824 + $0x10] sm:$0xf]
        %v2214 = vld [vmem:[%s824 + $0x14] sm:$0xf]
        %v2215 = vld [vmem:[%s824 + $0x18] sm:$0xf]
        %v2216 = vld [vmem:[%s824 + $0x1c] sm:$0xf]
        %v2217 = vld [vmem:[%s824 + $0x20] sm:$0xf]
        %v2218 = vld [vmem:[%s824 + $0x24] sm:$0xf]
        %v2219 = vld [vmem:[%s824 + $0x28] sm:$0xf]
        %v2220 = vld [vmem:[%s824 + $0x2c] sm:$0xf]
        %v2221 = vld [vmem:[%s824 + $0x30] sm:$0xf]
        %v2222 = vld [vmem:[%s824 + $0x34] sm:$0xf]
        %v2223 = vld [vmem:[%s824 + $0x38] sm:$0xf]
        %v2224 = vld [vmem:[%s824 + $0x3c] sm:$0xf]
        %v2225 = vld [vmem:[%s824 + $0x40] sm:$0xf]
        %v2226 = vld [vmem:[%s824 + $0x44] sm:$0xf]
        %v2227 = vld [vmem:[%s824 + $0x48] sm:$0xf]
        %v2228 = vld [vmem:[%s824 + $0x4c] sm:$0xf]
        %v2229 = vld [vmem:[%s824 + $0x50] sm:$0xf]
        %v2230 = vld [vmem:[%s824 + $0x54] sm:$0xf]
        %v2231 = vld [vmem:[%s824 + $0x58] sm:$0xf]
        %v2232 = vld [vmem:[%s824 + $0x5c] sm:$0xf]
        %v2233 = vld [vmem:[%s824 + $0x60] sm:$0xf]
        %v2234 = vld [vmem:[%s824 + $0x64] sm:$0xf]
        %v2235 = vld [vmem:[%s824 + $0x68] sm:$0xf]
        %v2236 = vld [vmem:[%s824 + $0x6c] sm:$0xf]
        %v2237 = vld [vmem:[%s824 + $0x70] sm:$0xf]
        %v2238 = vld [vmem:[%s824 + $0x74] sm:$0xf]
        %v2239 = vld [vmem:[%s824 + $0x78] sm:$0xf]
        %v2240 = vld [vmem:[%s824 + $0x7c] sm:$0xf]
        %v2241 = vld [vmem:[%s824 + $0x80] sm:$0xf]
        %v2242 = vld [vmem:[%s824 + $0x84] sm:$0xf]
        %v2243 = vld [vmem:[%s824 + $0x88] sm:$0xf]
        %v2244 = vld [vmem:[%s824 + $0x8c] sm:$0xf]
        %v2245 = vld [vmem:[%s824 + $0x90] sm:$0xf]
        %v2246 = vld [vmem:[%s824 + $0x94] sm:$0xf]
        %v2247 = vld [vmem:[%s824 + $0x98] sm:$0xf]
        %v2248 = vld [vmem:[%s824 + $0x9c] sm:$0xf]
        %v2249 = vld [vmem:[%s824 + $0xa0] sm:$0xf]
        %v2250 = vld [vmem:[%s824 + $0xa4] sm:$0xf]
        %v2251 = vld [vmem:[%s824 + $0xa8] sm:$0xf]
        %v2252 = vld [vmem:[%s824 + $0xac] sm:$0xf]
        %v2253 = vld [vmem:[%s824 + $0xb0] sm:$0xf]
        %v2254 = vld [vmem:[%s824 + $0xb4] sm:$0xf]
        %v2255 = vld [vmem:[%s824 + $0xb8] sm:$0xf]
        %v2256 = vld [vmem:[%s824 + $0xbc] sm:$0xf]
        %v2257 = vld [vmem:[%s824 + $0xc0] sm:$0xf]
        %v2258 = vld [vmem:[%s824 + $0xc4] sm:$0xf]
        %v2259 = vld [vmem:[%s824 + $0xc8] sm:$0xf]
        %v2260 = vld [vmem:[%s824 + $0xcc] sm:$0xf]
        %v2261 = vld [vmem:[%s824 + $0xd0] sm:$0xf]
        %v2262 = vld [vmem:[%s824 + $0xd4] sm:$0xf]
        %v2263 = vld [vmem:[%s824 + $0xd8] sm:$0xf]
        %v2264 = vld [vmem:[%s824 + $0xdc] sm:$0xf]
        %v2265 = vld [vmem:[%s824 + $0xe0] sm:$0xf]
        %v2266 = vld [vmem:[%s824 + $0xe4] sm:$0xf]
        %v2267 = vld [vmem:[%s824 + $0xe8] sm:$0xf]
        %v2268 = vld [vmem:[%s824 + $0xec] sm:$0xf]
        %v2269 = vld [vmem:[%s824 + $0xf0] sm:$0xf]
        %v2270 = vld [vmem:[%s824 + $0xf4] sm:$0xf]
        %v2271 = vld [vmem:[%s824 + $0xf8] sm:$0xf]
        %v2272 = vld [vmem:[%s824 + $0xfc] sm:$0xf]
        %v2273 = vpack.c.bf16 %v1942, %v1938
        %v2274 = vpack.c.bf16 %v1948, %v1948
        %v2275 = vpack.c.bf16 %v2044, %v2040
        %v2276 = vpack.c.bf16 %v2050, %v2050
        %2277 = vmatprep.subr.bf16.mxu0 0
        %2278 = vmatpush1.bf16.xpose.msra.mxu0 0
        %2279 = vmatprep.subr.bf16.mxu0 0
        %2280 = vmatpush1.bf16.xpose.msra.mxu0 0
        %2281 = vmatprep.subr.bf16.mxu0 0
        %2282 = vmatpush1.bf16.xpose.msra.mxu0 0
        %2283 = vmatprep.subr.bf16.mxu0 0
        %2284 = vmatpush1.bf16.xpose.msra.mxu0 0
        %2285 = vmatprep.subr.bf16.mxu0 0
        %2286 = vmatpush1.bf16.xpose.msra.mxu0 0
        %2287 = vmatprep.subr.bf16.mxu0 0
        %2288 = vmatpush1.bf16.xpose.msra.mxu0 0
        %2289 = vmatprep.subr.bf16.mxu0 0
        %2290 = vmatpush1.bf16.xpose.msra.mxu0 %v2276
        %2291 = vmatprep.subr.bf16.mxu0 0
        %2292 = vmatpush1.bf16.xpose.msra.mxu0 %v2275
        %2293 = vmatprep.subr.bf16.mxu0 0
        %2294 = vmatpush2.bf16.xpose.msra.mxu0 0
        %2295 = vmatprep.subr.bf16.mxu0 0
        %2296 = vmatpush2.bf16.xpose.msra.mxu0 0
        %2297 = vmatprep.subr.bf16.mxu0 0
        %2298 = vmatpush2.bf16.xpose.msra.mxu0 0
        %2299 = vmatprep.subr.bf16.mxu0 0
        %2300 = vmatpush2.bf16.xpose.msra.mxu0 0
        %2301 = vmatprep.subr.bf16.mxu0 0
        %2302 = vmatpush2.bf16.xpose.msra.mxu0 0
        %2303 = vmatprep.subr.bf16.mxu0 0
        %2304 = vmatpush2.bf16.xpose.msra.mxu0 0
        %2305 = vmatprep.subr.bf16.mxu0 0
        %2306 = vmatpush2.bf16.xpose.msra.mxu0 0
        %2307 = vmatprep.subr.bf16.mxu0 0
        %2308 = vmatpush2.bf16.xpose.msra.mxu0 0
        %2309 = vmatprep.mubr.bf16.mxu0 0
        %2310 = vmatmul.mubr.bf16.gmra.mxu0 %v2273
        %v2311 = vpop.f32.mrf.mxu0
        %v2312 = vadd.f32 0.0, %v2311
        %v2313 = vpop.f32.mrf.mxu0
        %v2314 = vpop.f32.mrf.mxu0
        %v2315 = vadd.f32 0.0, %v2314
        %v2316 = vpop.f32.mrf.mxu0
        %2317 = vmatprep.mubr.bf16.mxu0 0
        %2318 = vmatmul.mubr.bf16.gmra.mxu0 %v2274
        %v2319 = vpop.f32.mrf.mxu0
        %v2320 = vadd.f32 0.0, %v2319
        %v2321 = vpop.f32.mrf.mxu0
        %v2322 = vpop.f32.mrf.mxu0
        %v2323 = vpop.f32.mrf.mxu0
        %2324 = vdwg.mxu0
        %vm2325 = vcmask 138240
        %v2326 = vsel %vm2325, %v2312, -inf
        %2327 = vmax.xlane.f32.xlu0 %v2326
        %v2328 = vpop.xlane.xlu0 %2327
        %v2329 = vsel %vm2325, %v2315, -inf
        %2330 = vmax.xlane.f32.xlu0 %v2329
        %v2331 = vpop.xlane.xlu0 %2330
        %vm2332 = vcmask 131072
        %v2333 = vsel %vm2332, %v2320, -inf
        %2334 = vmax.xlane.f32.xlu0 %v2333
        %v2335 = vpop.xlane.xlu0 %2334
        %v2336 = vsub.f32 %v2312, %v2328
        %v2337 = vsub.f32 %v2315, %v2331
        %v2338 = vsub.f32 %v2320, %v2335
        %v2339 = vmul.f32 %v2336, 1.442695
        %v2340 = vpow.pop %v2339
        %v2341 = vmul.f32 %v2337, 1.442695
        %v2342 = vpow.pop %v2341
        %v2343 = vmul.f32 %v2338, 1.442695
        %v2344 = vpow.pop %v2343
        %v2345 = vsel %vm2325, %v2340, 0.0
        %2346 = vadd.xlane.f32.xlu0 %v2345
        %v2347 = vpop.xlane.xlu0 %2346
        %v2348 = vsel %vm2325, %v2342, 0.0
        %2349 = vadd.xlane.f32.xlu0 %v2348
        %v2350 = vpop.xlane.xlu0 %2349
        %v2351 = vsel %vm2332, %v2344, 0.0
        %2352 = vadd.xlane.f32.xlu0 %v2351
        %v2353 = vpop.xlane.xlu0 %2352
        %v2354 = vrcp.pop %v2347
        %v2355 = vrcp.pop %v2350
        %v2356 = vrcp.pop %v2353
        %v2357 = vmul.f32 %v2340, %v2354
        %v2358 = vmul.f32 %v2342, %v2355
        %v2359 = vmul.f32 %v2344, %v2356
        %v2360 = vpack.c.bf16 %v2358, %v2357
        %v2361 = vpack.c.bf16 %v2359, %v2359
        %v2362 = vpack.c.bf16 %v2146, %v2142
        %v2363 = vpack.c.bf16 %v2152, %v2152
        %v2365 = vsel %vm2325, %v2360, 0
        %v2368 = vsel %vm2325, %v2361, 0
        %v2370 = vsel 0, 4294967295, 65535
        %v2371 = vsel %vm1210, %v2370, 0
        %v2373 = vand.u32 %v2363, %v2371
        %2375 = vmatprep.subr.bf16.mxu0 0
        %2376 = vmatpush1.bf16.msra.mxu0 0
        %2377 = vmatprep.subr.bf16.mxu0 0
        %2378 = vmatpush1.bf16.msra.mxu0 0
        %2379 = vmatprep.subr.bf16.mxu0 0
        %2380 = vmatpush1.bf16.msra.mxu0 0
        %2381 = vmatprep.subr.bf16.mxu0 0
        %2382 = vmatpush1.bf16.msra.mxu0 0
        %2383 = vmatprep.subr.bf16.mxu0 0
        %2384 = vmatpush1.bf16.msra.mxu0 0
        %2385 = vmatprep.subr.bf16.mxu0 0
        %2386 = vmatpush1.bf16.msra.mxu0 0
        %2387 = vmatprep.subr.bf16.mxu0 0
        %2388 = vmatpush1.bf16.msra.mxu0 %v2373
        %2389 = vmatprep.subr.bf16.mxu0 0
        %2390 = vmatpush1.bf16.msra.mxu0 %v2362
        %2391 = vmatprep.subr.bf16.mxu0 0
        %2392 = vmatpush2.bf16.msra.mxu0 0
        %2393 = vmatprep.subr.bf16.mxu0 0
        %2394 = vmatpush2.bf16.msra.mxu0 0
        %2395 = vmatprep.subr.bf16.mxu0 0
        %2396 = vmatpush2.bf16.msra.mxu0 0
        %2397 = vmatprep.subr.bf16.mxu0 0
        %2398 = vmatpush2.bf16.msra.mxu0 0
        %2399 = vmatprep.subr.bf16.mxu0 0
        %2400 = vmatpush2.bf16.msra.mxu0 0
        %2401 = vmatprep.subr.bf16.mxu0 0
        %2402 = vmatpush2.bf16.msra.mxu0 0
        %2403 = vmatprep.subr.bf16.mxu0 0
        %2404 = vmatpush2.bf16.msra.mxu0 0
        %2405 = vmatprep.subr.bf16.mxu0 0
        %2406 = vmatpush2.bf16.msra.mxu0 0
        %2407 = vmatprep.mubr.bf16.mxu0 0
        %2408 = vmatmul.mubr.bf16.gmra.mxu0 %v2365
        %v2409 = vpop.f32.mrf.mxu0
        %v2410 = vadd.f32 0.0, %v2409
        %v2411 = vpop.f32.mrf.mxu0
        %v2412 = vpop.f32.mrf.mxu0
        %v2413 = vadd.f32 0.0, %v2412
        %v2414 = vpop.f32.mrf.mxu0
        %2415 = vmatprep.mubr.bf16.mxu0 0
        %2416 = vmatmul.mubr.bf16.gmra.mxu0 %v2368
        %v2417 = vpop.f32.mrf.mxu0
        %v2418 = vadd.f32 0.0, %v2417
        %v2419 = vpop.f32.mrf.mxu0
        %v2420 = vpop.f32.mrf.mxu0
        %v2421 = vpop.f32.mrf.mxu0
        %2422 = vdwg.mxu0
        %v2423 = vpack.c.bf16 %v2413, %v2410
        %v2424 = vpack.c.bf16 %v2418, %v2418
        %v2425 = vpack.c.bf16 %v1944, %v1940
        %v2426 = vpack.c.bf16 %v1950, %v1950
        %v2427 = vpack.c.bf16 %v2046, %v2042
        %v2428 = vpack.c.bf16 %v2052, %v2052
        %2429 = vmatprep.subr.bf16.mxu0 0
        %2430 = vmatpush1.bf16.xpose.msra.mxu0 0
        %2431 = vmatprep.subr.bf16.mxu0 0
        %2432 = vmatpush1.bf16.xpose.msra.mxu0 0
        %2433 = vmatprep.subr.bf16.mxu0 0
        %2434 = vmatpush1.bf16.xpose.msra.mxu0 0
        %2435 = vmatprep.subr.bf16.mxu0 0
        %2436 = vmatpush1.bf16.xpose.msra.mxu0 0
        %2437 = vmatprep.subr.bf16.mxu0 0
        %2438 = vmatpush1.bf16.xpose.msra.mxu0 0
        %2439 = vmatprep.subr.bf16.mxu0 0
        %2440 = vmatpush1.bf16.xpose.msra.mxu0 0
        %2441 = vmatprep.subr.bf16.mxu0 0
        %2442 = vmatpush1.bf16.xpose.msra.mxu0 %v2428
        %2443 = vmatprep.subr.bf16.mxu0 0
        %2444 = vmatpush1.bf16.xpose.msra.mxu0 %v2427
        %2445 = vmatprep.subr.bf16.mxu0 0
        %2446 = vmatpush2.bf16.xpose.msra.mxu0 0
        %2447 = vmatprep.subr.bf16.mxu0 0
        %2448 = vmatpush2.bf16.xpose.msra.mxu0 0
        %2449 = vmatprep.subr.bf16.mxu0 0
        %2450 = vmatpush2.bf16.xpose.msra.mxu0 0
        %2451 = vmatprep.subr.bf16.mxu0 0
        %2452 = vmatpush2.bf16.xpose.msra.mxu0 0
        %2453 = vmatprep.subr.bf16.mxu0 0
        %2454 = vmatpush2.bf16.xpose.msra.mxu0 0
        %2455 = vmatprep.subr.bf16.mxu0 0
        %2456 = vmatpush2.bf16.xpose.msra.mxu0 0
        %2457 = vmatprep.subr.bf16.mxu0 0
        %2458 = vmatpush2.bf16.xpose.msra.mxu0 0
        %2459 = vmatprep.subr.bf16.mxu0 0
        %2460 = vmatpush2.bf16.xpose.msra.mxu0 0
        %2461 = vmatprep.mubr.bf16.mxu0 0
        %2462 = vmatmul.mubr.bf16.gmra.mxu0 %v2425
        %v2463 = vpop.f32.mrf.mxu0
        %v2464 = vadd.f32 0.0, %v2463
        %v2465 = vpop.f32.mrf.mxu0
        %v2466 = vpop.f32.mrf.mxu0
        %v2467 = vadd.f32 0.0, %v2466
        %v2468 = vpop.f32.mrf.mxu0
        %2469 = vmatprep.mubr.bf16.mxu0 0
        %2470 = vmatmul.mubr.bf16.gmra.mxu0 %v2426
        %v2471 = vpop.f32.mrf.mxu0
        %v2472 = vadd.f32 0.0, %v2471
        %v2473 = vpop.f32.mrf.mxu0
        %v2474 = vpop.f32.mrf.mxu0
        %v2475 = vpop.f32.mrf.mxu0
        %2476 = vdwg.mxu0
        %v2477 = vsel %vm2325, %v2464, -inf
        %2478 = vmax.xlane.f32.xlu0 %v2477
        %v2479 = vpop.xlane.xlu0 %2478
        %v2480 = vsel %vm2325, %v2467, -inf
        %2481 = vmax.xlane.f32.xlu0 %v2480
        %v2482 = vpop.xlane.xlu0 %2481
        %v2483 = vsel %vm2332, %v2472, -inf
        %2484 = vmax.xlane.f32.xlu0 %v2483
        %v2485 = vpop.xlane.xlu0 %2484
        %v2486 = vsub.f32 %v2464, %v2479
        %v2487 = vsub.f32 %v2467, %v2482
        %v2488 = vsub.f32 %v2472, %v2485
        %v2489 = vmul.f32 %v2486, 1.442695
        %v2490 = vpow.pop %v2489
        %v2491 = vmul.f32 %v2487, 1.442695
        %v2492 = vpow.pop %v2491
        %v2493 = vmul.f32 %v2488, 1.442695
        %v2494 = vpow.pop %v2493
        %v2495 = vsel %vm2325, %v2490, 0.0
        %2496 = vadd.xlane.f32.xlu0 %v2495
        %v2497 = vpop.xlane.xlu0 %2496
        %v2498 = vsel %vm2325, %v2492, 0.0
        %2499 = vadd.xlane.f32.xlu0 %v2498
        %v2500 = vpop.xlane.xlu0 %2499
        %v2501 = vsel %vm2332, %v2494, 0.0
        %2502 = vadd.xlane.f32.xlu0 %v2501
        %v2503 = vpop.xlane.xlu0 %2502
        %v2504 = vrcp.pop %v2497
        %v2505 = vrcp.pop %v2500
        %v2506 = vrcp.pop %v2503
        %v2507 = vmul.f32 %v2490, %v2504
        %v2508 = vmul.f32 %v2492, %v2505
        %v2509 = vmul.f32 %v2494, %v2506
        %v2510 = vpack.c.bf16 %v2508, %v2507
        %v2511 = vpack.c.bf16 %v2509, %v2509
        %v2512 = vpack.c.bf16 %v2148, %v2144
        %v2513 = vpack.c.bf16 %v2154, %v2154
        %v2515 = vsel %vm2325, %v2510, 0
        %v2518 = vsel %vm2325, %v2511, 0
        %v2521 = vand.u32 %v2513, %v2371
        %2523 = vmatprep.subr.bf16.mxu0 0
        %2524 = vmatpush1.bf16.msra.mxu0 0
        %2525 = vmatprep.subr.bf16.mxu0 0
        %2526 = vmatpush1.bf16.msra.mxu0 0
        %2527 = vmatprep.subr.bf16.mxu0 0
        %2528 = vmatpush1.bf16.msra.mxu0 0
        %2529 = vmatprep.subr.bf16.mxu0 0
        %2530 = vmatpush1.bf16.msra.mxu0 0
        %2531 = vmatprep.subr.bf16.mxu0 0
        %2532 = vmatpush1.bf16.msra.mxu0 0
        %2533 = vmatprep.subr.bf16.mxu0 0
        %2534 = vmatpush1.bf16.msra.mxu0 0
        %2535 = vmatprep.subr.bf16.mxu0 0
        %2536 = vmatpush1.bf16.msra.mxu0 %v2521
        %2537 = vmatprep.subr.bf16.mxu0 0
        %2538 = vmatpush1.bf16.msra.mxu0 %v2512
        %2539 = vmatprep.subr.bf16.mxu0 0
        %2540 = vmatpush2.bf16.msra.mxu0 0
        %2541 = vmatprep.subr.bf16.mxu0 0
        %2542 = vmatpush2.bf16.msra.mxu0 0
        %2543 = vmatprep.subr.bf16.mxu0 0
        %2544 = vmatpush2.bf16.msra.mxu0 0
        %2545 = vmatprep.subr.bf16.mxu0 0
        %2546 = vmatpush2.bf16.msra.mxu0 0
        %2547 = vmatprep.subr.bf16.mxu0 0
        %2548 = vmatpush2.bf16.msra.mxu0 0
        %2549 = vmatprep.subr.bf16.mxu0 0
        %2550 = vmatpush2.bf16.msra.mxu0 0
        %2551 = vmatprep.subr.bf16.mxu0 0
        %2552 = vmatpush2.bf16.msra.mxu0 0
        %2553 = vmatprep.subr.bf16.mxu0 0
        %2554 = vmatpush2.bf16.msra.mxu0 0
        %2555 = vmatprep.mubr.bf16.mxu0 0
        %2556 = vmatmul.mubr.bf16.gmra.mxu0 %v2515
        %v2557 = vpop.f32.mrf.mxu0
        %v2558 = vadd.f32 0.0, %v2557
        %v2559 = vpop.f32.mrf.mxu0
        %v2560 = vpop.f32.mrf.mxu0
        %v2561 = vadd.f32 0.0, %v2560
        %v2562 = vpop.f32.mrf.mxu0
        %2563 = vmatprep.mubr.bf16.mxu0 0
        %2564 = vmatmul.mubr.bf16.gmra.mxu0 %v2518
        %v2565 = vpop.f32.mrf.mxu0
        %v2566 = vadd.f32 0.0, %v2565
        %v2567 = vpop.f32.mrf.mxu0
        %v2568 = vpop.f32.mrf.mxu0
        %v2569 = vpop.f32.mrf.mxu0
        %2570 = vdwg.mxu0
        %v2571 = vpack.c.bf16 %v2561, %v2558
        %v2572 = vpack.c.bf16 %v2566, %v2566
        %v2589 = vunpack.c.l.b16 %v2225
        %v2590 = vunpack.c.l.b16 %v2226
        %v2591 = vunpack.c.l.b16 %v2227
        %v2592 = vunpack.c.l.b16 %v2228
        %v2593 = vunpack.c.l.b16 %v2229
        %v2594 = vunpack.c.l.b16 %v2230
        %v2595 = vunpack.c.l.b16 %v2231
        %v2596 = vunpack.c.l.b16 %v2232
        %v2597 = vunpack.c.l.b16 %v2233
        %v2598 = vunpack.c.l.b16 %v2234
        %v2599 = vunpack.c.l.b16 %v2235
        %v2600 = vunpack.c.l.b16 %v2236
        %v2601 = vunpack.c.l.b16 %v2237
        %v2602 = vunpack.c.l.b16 %v2238
        %v2603 = vunpack.c.l.b16 %v2239
        %v2604 = vunpack.c.l.b16 %v2240
        %v2605 = vpack.c.b16 %v2590, %v2589
        %v2606 = vpack.c.b16 %v2592, %v2591
        %v2607 = vpack.c.b16 %v2594, %v2593
        %v2608 = vpack.c.b16 %v2596, %v2595
        %v2609 = vpack.c.b16 %v2598, %v2597
        %v2610 = vpack.c.b16 %v2600, %v2599
        %v2611 = vpack.c.b16 %v2602, %v2601
        %v2612 = vpack.c.b16 %v2604, %v2603
        %2621 = vmatprep.subr.bf16.mxu0 0
        %2622 = vmatpush1.bf16.msra.mxu0 %v2612
        %2623 = vmatprep.subr.bf16.mxu0 0
        %2624 = vmatpush1.bf16.msra.mxu0 %v2611
        %2625 = vmatprep.subr.bf16.mxu0 0
        %2626 = vmatpush1.bf16.msra.mxu0 %v2610
        %2627 = vmatprep.subr.bf16.mxu0 0
        %2628 = vmatpush1.bf16.msra.mxu0 %v2609
        %2629 = vmatprep.subr.bf16.mxu0 0
        %2630 = vmatpush1.bf16.msra.mxu0 %v2608
        %2631 = vmatprep.subr.bf16.mxu0 0
        %2632 = vmatpush1.bf16.msra.mxu0 %v2607
        %2633 = vmatprep.subr.bf16.mxu0 0
        %2634 = vmatpush1.bf16.msra.mxu0 %v2606
        %2635 = vmatprep.subr.bf16.mxu0 0
        %2636 = vmatpush1.bf16.msra.mxu0 %v2605
        %2637 = vmatprep.subr.bf16.mxu0 0
        %2638 = vmatpush2.bf16.msra.mxu0 0
        %2639 = vmatprep.subr.bf16.mxu0 0
        %2640 = vmatpush2.bf16.msra.mxu0 0
        %2641 = vmatprep.subr.bf16.mxu0 0
        %2642 = vmatpush2.bf16.msra.mxu0 0
        %2643 = vmatprep.subr.bf16.mxu0 0
        %2644 = vmatpush2.bf16.msra.mxu0 0
        %2645 = vmatprep.subr.bf16.mxu0 0
        %2646 = vmatpush2.bf16.msra.mxu0 0
        %2647 = vmatprep.subr.bf16.mxu0 0
        %2648 = vmatpush2.bf16.msra.mxu0 0
        %2649 = vmatprep.subr.bf16.mxu0 0
        %2650 = vmatpush2.bf16.msra.mxu0 0
        %2651 = vmatprep.subr.bf16.mxu0 0
        %2652 = vmatpush2.bf16.msra.mxu0 0
        %2653 = vmatprep.mubr.bf16.mxu0 0
        %2654 = vmatmul.mubr.bf16.gmra.mxu0 %v2571
        %v2655 = vpop.f32.mrf.mxu0
        %v2656 = vadd.f32 0.0, %v2655
        %v2657 = vpop.f32.mrf.mxu0
        %v2658 = vpop.f32.mrf.mxu0
        %v2659 = vadd.f32 0.0, %v2658
        %v2660 = vpop.f32.mrf.mxu0
        %2661 = vmatprep.mubr.bf16.mxu0 0
        %2662 = vmatmul.mubr.bf16.gmra.mxu0 %v2572
        %v2663 = vpop.f32.mrf.mxu0
        %v2664 = vadd.f32 0.0, %v2663
        %v2665 = vpop.f32.mrf.mxu0
        %v2666 = vpop.f32.mrf.mxu0
        %v2667 = vpop.f32.mrf.mxu0
        %2668 = vdwg.mxu0
        %v2685 = vunpack.c.l.b16 %v2209
        %v2686 = vunpack.c.l.b16 %v2210
        %v2687 = vunpack.c.l.b16 %v2211
        %v2688 = vunpack.c.l.b16 %v2212
        %v2689 = vunpack.c.l.b16 %v2213
        %v2690 = vunpack.c.l.b16 %v2214
        %v2691 = vunpack.c.l.b16 %v2215
        %v2692 = vunpack.c.l.b16 %v2216
        %v2693 = vunpack.c.l.b16 %v2217
        %v2694 = vunpack.c.l.b16 %v2218
        %v2695 = vunpack.c.l.b16 %v2219
        %v2696 = vunpack.c.l.b16 %v2220
        %v2697 = vunpack.c.l.b16 %v2221
        %v2698 = vunpack.c.l.b16 %v2222
        %v2699 = vunpack.c.l.b16 %v2223
        %v2700 = vunpack.c.l.b16 %v2224
        %v2701 = vpack.c.b16 %v2686, %v2685
        %v2702 = vpack.c.b16 %v2688, %v2687
        %v2703 = vpack.c.b16 %v2690, %v2689
        %v2704 = vpack.c.b16 %v2692, %v2691
        %v2705 = vpack.c.b16 %v2694, %v2693
        %v2706 = vpack.c.b16 %v2696, %v2695
        %v2707 = vpack.c.b16 %v2698, %v2697
        %v2708 = vpack.c.b16 %v2700, %v2699
        %2717 = vmatprep.subr.bf16.mxu0 0
        %2718 = vmatpush1.bf16.msra.mxu0 %v2708
        %2719 = vmatprep.subr.bf16.mxu0 0
        %2720 = vmatpush1.bf16.msra.mxu0 %v2707
        %2721 = vmatprep.subr.bf16.mxu0 0
        %2722 = vmatpush1.bf16.msra.mxu0 %v2706
        %2723 = vmatprep.subr.bf16.mxu0 0
        %2724 = vmatpush1.bf16.msra.mxu0 %v2705
        %2725 = vmatprep.subr.bf16.mxu0 0
        %2726 = vmatpush1.bf16.msra.mxu0 %v2704
        %2727 = vmatprep.subr.bf16.mxu0 0
        %2728 = vmatpush1.bf16.msra.mxu0 %v2703
        %2729 = vmatprep.subr.bf16.mxu0 0
        %2730 = vmatpush1.bf16.msra.mxu0 %v2702
        %2731 = vmatprep.subr.bf16.mxu0 0
        %2732 = vmatpush1.bf16.msra.mxu0 %v2701
        %2733 = vmatprep.subr.bf16.mxu0 0
        %2734 = vmatpush2.bf16.msra.mxu0 0
        %2735 = vmatprep.subr.bf16.mxu0 0
        %2736 = vmatpush2.bf16.msra.mxu0 0
        %2737 = vmatprep.subr.bf16.mxu0 0
        %2738 = vmatpush2.bf16.msra.mxu0 0
        %2739 = vmatprep.subr.bf16.mxu0 0
        %2740 = vmatpush2.bf16.msra.mxu0 0
        %2741 = vmatprep.subr.bf16.mxu0 0
        %2742 = vmatpush2.bf16.msra.mxu0 0
        %2743 = vmatprep.subr.bf16.mxu0 0
        %2744 = vmatpush2.bf16.msra.mxu0 0
        %2745 = vmatprep.subr.bf16.mxu0 0
        %2746 = vmatpush2.bf16.msra.mxu0 0
        %2747 = vmatprep.subr.bf16.mxu0 0
        %2748 = vmatpush2.bf16.msra.mxu0 0
        %2749 = vmatprep.mubr.bf16.mxu0 0
        %2750 = vmatmul.mubr.bf16.gmra.mxu0 %v2423
        %v2751 = vpop.f32.mrf.mxu0
        %v2752 = vadd.f32 %v2656, %v2751
        %v2753 = vpop.f32.mrf.mxu0
        %v2754 = vpop.f32.mrf.mxu0
        %v2755 = vadd.f32 %v2659, %v2754
        %v2756 = vpop.f32.mrf.mxu0
        %2757 = vmatprep.mubr.bf16.mxu0 0
        %2758 = vmatmul.mubr.bf16.gmra.mxu0 %v2424
        %v2759 = vpop.f32.mrf.mxu0
        %v2760 = vadd.f32 %v2664, %v2759
        %v2761 = vpop.f32.mrf.mxu0
        %v2762 = vpop.f32.mrf.mxu0
        %v2763 = vpop.f32.mrf.mxu0
        %2764 = vdwg.mxu0
        %v2765 = vpack.c.bf16 %v1993, %v1989
        %v2766 = vpack.c.bf16 %v1999, %v1999
        %v2767 = vpack.c.bf16 %v2095, %v2091
        %v2768 = vpack.c.bf16 %v2101, %v2101
        %2769 = vmatprep.subr.bf16.mxu0 0
        %2770 = vmatpush1.bf16.xpose.msra.mxu0 0
        %2771 = vmatprep.subr.bf16.mxu0 0
        %2772 = vmatpush1.bf16.xpose.msra.mxu0 0
        %2773 = vmatprep.subr.bf16.mxu0 0
        %2774 = vmatpush1.bf16.xpose.msra.mxu0 0
        %2775 = vmatprep.subr.bf16.mxu0 0
        %2776 = vmatpush1.bf16.xpose.msra.mxu0 0
        %2777 = vmatprep.subr.bf16.mxu0 0
        %2778 = vmatpush1.bf16.xpose.msra.mxu0 0
        %2779 = vmatprep.subr.bf16.mxu0 0
        %2780 = vmatpush1.bf16.xpose.msra.mxu0 0
        %2781 = vmatprep.subr.bf16.mxu0 0
        %2782 = vmatpush1.bf16.xpose.msra.mxu0 %v2768
        %2783 = vmatprep.subr.bf16.mxu0 0
        %2784 = vmatpush1.bf16.xpose.msra.mxu0 %v2767
        %2785 = vmatprep.subr.bf16.mxu0 0
        %2786 = vmatpush2.bf16.xpose.msra.mxu0 0
        %2787 = vmatprep.subr.bf16.mxu0 0
        %2788 = vmatpush2.bf16.xpose.msra.mxu0 0
        %2789 = vmatprep.subr.bf16.mxu0 0
        %2790 = vmatpush2.bf16.xpose.msra.mxu0 0
        %2791 = vmatprep.subr.bf16.mxu0 0
        %2792 = vmatpush2.bf16.xpose.msra.mxu0 0
        %2793 = vmatprep.subr.bf16.mxu0 0
        %2794 = vmatpush2.bf16.xpose.msra.mxu0 0
        %2795 = vmatprep.subr.bf16.mxu0 0
        %2796 = vmatpush2.bf16.xpose.msra.mxu0 0
        %2797 = vmatprep.subr.bf16.mxu0 0
        %2798 = vmatpush2.bf16.xpose.msra.mxu0 0
        %2799 = vmatprep.subr.bf16.mxu0 0
        %2800 = vmatpush2.bf16.xpose.msra.mxu0 0
        %2801 = vmatprep.mubr.bf16.mxu0 0
        %2802 = vmatmul.mubr.bf16.gmra.mxu0 %v2765
        %v2803 = vpop.f32.mrf.mxu0
        %v2804 = vadd.f32 0.0, %v2803
        %v2805 = vpop.f32.mrf.mxu0
        %v2806 = vpop.f32.mrf.mxu0
        %v2807 = vadd.f32 0.0, %v2806
        %v2808 = vpop.f32.mrf.mxu0
        %2809 = vmatprep.mubr.bf16.mxu0 0
        %2810 = vmatmul.mubr.bf16.gmra.mxu0 %v2766
        %v2811 = vpop.f32.mrf.mxu0
        %v2812 = vadd.f32 0.0, %v2811
        %v2813 = vpop.f32.mrf.mxu0
        %v2814 = vpop.f32.mrf.mxu0
        %v2815 = vpop.f32.mrf.mxu0
        %2816 = vdwg.mxu0
        %v2817 = vsel %vm2325, %v2804, -inf
        %2818 = vmax.xlane.f32.xlu0 %v2817
        %v2819 = vpop.xlane.xlu0 %2818
        %v2820 = vsel %vm2325, %v2807, -inf
        %2821 = vmax.xlane.f32.xlu0 %v2820
        %v2822 = vpop.xlane.xlu0 %2821
        %v2823 = vsel %vm2332, %v2812, -inf
        %2824 = vmax.xlane.f32.xlu0 %v2823
        %v2825 = vpop.xlane.xlu0 %2824
        %v2826 = vsub.f32 %v2804, %v2819
        %v2827 = vsub.f32 %v2807, %v2822
        %v2828 = vsub.f32 %v2812, %v2825
        %v2829 = vmul.f32 %v2826, 1.442695
        %v2830 = vpow.pop %v2829
        %v2831 = vmul.f32 %v2827, 1.442695
        %v2832 = vpow.pop %v2831
        %v2833 = vmul.f32 %v2828, 1.442695
        %v2834 = vpow.pop %v2833
        %v2835 = vsel %vm2325, %v2830, 0.0
        %2836 = vadd.xlane.f32.xlu0 %v2835
        %v2837 = vpop.xlane.xlu0 %2836
        %v2838 = vsel %vm2325, %v2832, 0.0
        %2839 = vadd.xlane.f32.xlu0 %v2838
        %v2840 = vpop.xlane.xlu0 %2839
        %v2841 = vsel %vm2332, %v2834, 0.0
        %2842 = vadd.xlane.f32.xlu0 %v2841
        %v2843 = vpop.xlane.xlu0 %2842
        %v2844 = vrcp.pop %v2837
        %v2845 = vrcp.pop %v2840
        %v2846 = vrcp.pop %v2843
        %v2847 = vmul.f32 %v2830, %v2844
        %v2848 = vmul.f32 %v2832, %v2845
        %v2849 = vmul.f32 %v2834, %v2846
        %v2850 = vpack.c.bf16 %v2848, %v2847
        %v2851 = vpack.c.bf16 %v2849, %v2849
        %v2852 = vpack.c.bf16 %v2197, %v2193
        %v2853 = vpack.c.bf16 %v2203, %v2203
        %v2855 = vsel %vm2325, %v2850, 0
        %v2858 = vsel %vm2325, %v2851, 0
        %v2861 = vand.u32 %v2853, %v2371
        %2863 = vmatprep.subr.bf16.mxu0 0
        %2864 = vmatpush1.bf16.msra.mxu0 0
        %2865 = vmatprep.subr.bf16.mxu0 0
        %2866 = vmatpush1.bf16.msra.mxu0 0
        %2867 = vmatprep.subr.bf16.mxu0 0
        %2868 = vmatpush1.bf16.msra.mxu0 0
        %2869 = vmatprep.subr.bf16.mxu0 0
        %2870 = vmatpush1.bf16.msra.mxu0 0
        %2871 = vmatprep.subr.bf16.mxu0 0
        %2872 = vmatpush1.bf16.msra.mxu0 0
        %2873 = vmatprep.subr.bf16.mxu0 0
        %2874 = vmatpush1.bf16.msra.mxu0 0
        %2875 = vmatprep.subr.bf16.mxu0 0
        %2876 = vmatpush1.bf16.msra.mxu0 %v2861
        %2877 = vmatprep.subr.bf16.mxu0 0
        %2878 = vmatpush1.bf16.msra.mxu0 %v2852
        %2879 = vmatprep.subr.bf16.mxu0 0
        %2880 = vmatpush2.bf16.msra.mxu0 0
        %2881 = vmatprep.subr.bf16.mxu0 0
        %2882 = vmatpush2.bf16.msra.mxu0 0
        %2883 = vmatprep.subr.bf16.mxu0 0
        %2884 = vmatpush2.bf16.msra.mxu0 0
        %2885 = vmatprep.subr.bf16.mxu0 0
        %2886 = vmatpush2.bf16.msra.mxu0 0
        %2887 = vmatprep.subr.bf16.mxu0 0
        %2888 = vmatpush2.bf16.msra.mxu0 0
        %2889 = vmatprep.subr.bf16.mxu0 0
        %2890 = vmatpush2.bf16.msra.mxu0 0
        %2891 = vmatprep.subr.bf16.mxu0 0
        %2892 = vmatpush2.bf16.msra.mxu0 0
        %2893 = vmatprep.subr.bf16.mxu0 0
        %2894 = vmatpush2.bf16.msra.mxu0 0
        %2895 = vmatprep.mubr.bf16.mxu0 0
        %2896 = vmatmul.mubr.bf16.gmra.mxu0 %v2855
        %v2897 = vpop.f32.mrf.mxu0
        %v2898 = vadd.f32 0.0, %v2897
        %v2899 = vpop.f32.mrf.mxu0
        %v2900 = vpop.f32.mrf.mxu0
        %v2901 = vadd.f32 0.0, %v2900
        %v2902 = vpop.f32.mrf.mxu0
        %2903 = vmatprep.mubr.bf16.mxu0 0
        %2904 = vmatmul.mubr.bf16.gmra.mxu0 %v2858
        %v2905 = vpop.f32.mrf.mxu0
        %v2906 = vadd.f32 0.0, %v2905
        %v2907 = vpop.f32.mrf.mxu0
        %v2908 = vpop.f32.mrf.mxu0
        %v2909 = vpop.f32.mrf.mxu0
        %2910 = vdwg.mxu0
        %v2911 = vpack.c.bf16 %v2901, %v2898
        %v2912 = vpack.c.bf16 %v2906, %v2906
        %v2929 = vunpack.c.l.b16 %v2241
        %v2930 = vunpack.c.l.b16 %v2242
        %v2931 = vunpack.c.l.b16 %v2243
        %v2932 = vunpack.c.l.b16 %v2244
        %v2933 = vunpack.c.l.b16 %v2245
        %v2934 = vunpack.c.l.b16 %v2246
        %v2935 = vunpack.c.l.b16 %v2247
        %v2936 = vunpack.c.l.b16 %v2248
        %v2937 = vunpack.c.l.b16 %v2249
        %v2938 = vunpack.c.l.b16 %v2250
        %v2939 = vunpack.c.l.b16 %v2251
        %v2940 = vunpack.c.l.b16 %v2252
        %v2941 = vunpack.c.l.b16 %v2253
        %v2942 = vunpack.c.l.b16 %v2254
        %v2943 = vunpack.c.l.b16 %v2255
        %v2944 = vunpack.c.l.b16 %v2256
        %v2945 = vpack.c.b16 %v2930, %v2929
        %v2946 = vpack.c.b16 %v2932, %v2931
        %v2947 = vpack.c.b16 %v2934, %v2933
        %v2948 = vpack.c.b16 %v2936, %v2935
        %v2949 = vpack.c.b16 %v2938, %v2937
        %v2950 = vpack.c.b16 %v2940, %v2939
        %v2951 = vpack.c.b16 %v2942, %v2941
        %v2952 = vpack.c.b16 %v2944, %v2943
        %2961 = vmatprep.subr.bf16.mxu0 0
        %2962 = vmatpush1.bf16.msra.mxu0 %v2952
        %2963 = vmatprep.subr.bf16.mxu0 0
        %2964 = vmatpush1.bf16.msra.mxu0 %v2951
        %2965 = vmatprep.subr.bf16.mxu0 0
        %2966 = vmatpush1.bf16.msra.mxu0 %v2950
        %2967 = vmatprep.subr.bf16.mxu0 0
        %2968 = vmatpush1.bf16.msra.mxu0 %v2949
        %2969 = vmatprep.subr.bf16.mxu0 0
        %2970 = vmatpush1.bf16.msra.mxu0 %v2948
        %2971 = vmatprep.subr.bf16.mxu0 0
        %2972 = vmatpush1.bf16.msra.mxu0 %v2947
        %2973 = vmatprep.subr.bf16.mxu0 0
        %2974 = vmatpush1.bf16.msra.mxu0 %v2946
        %2975 = vmatprep.subr.bf16.mxu0 0
        %2976 = vmatpush1.bf16.msra.mxu0 %v2945
        %2977 = vmatprep.subr.bf16.mxu0 0
        %2978 = vmatpush2.bf16.msra.mxu0 0
        %2979 = vmatprep.subr.bf16.mxu0 0
        %2980 = vmatpush2.bf16.msra.mxu0 0
        %2981 = vmatprep.subr.bf16.mxu0 0
        %2982 = vmatpush2.bf16.msra.mxu0 0
        %2983 = vmatprep.subr.bf16.mxu0 0
        %2984 = vmatpush2.bf16.msra.mxu0 0
        %2985 = vmatprep.subr.bf16.mxu0 0
        %2986 = vmatpush2.bf16.msra.mxu0 0
        %2987 = vmatprep.subr.bf16.mxu0 0
        %2988 = vmatpush2.bf16.msra.mxu0 0
        %2989 = vmatprep.subr.bf16.mxu0 0
        %2990 = vmatpush2.bf16.msra.mxu0 0
        %2991 = vmatprep.subr.bf16.mxu0 0
        %2992 = vmatpush2.bf16.msra.mxu0 0
        %2993 = vmatprep.mubr.bf16.mxu0 0
        %2994 = vmatmul.mubr.bf16.gmra.mxu0 %v2911
        %v2995 = vpop.f32.mrf.mxu0
        %v2996 = vadd.f32 0.0, %v2995
        %v2997 = vpop.f32.mrf.mxu0
        %v2998 = vpop.f32.mrf.mxu0
        %v2999 = vadd.f32 0.0, %v2998
        %v3000 = vpop.f32.mrf.mxu0
        %3001 = vmatprep.mubr.bf16.mxu0 0
        %3002 = vmatmul.mubr.bf16.gmra.mxu0 %v2912
        %v3003 = vpop.f32.mrf.mxu0
        %v3004 = vadd.f32 0.0, %v3003
        %v3005 = vpop.f32.mrf.mxu0
        %v3006 = vpop.f32.mrf.mxu0
        %v3007 = vpop.f32.mrf.mxu0
        %3008 = vdwg.mxu0
        %v3009 = vadd.f32 %v2752, %v2996
        %v3010 = vadd.f32 %v2755, %v2999
        %v3011 = vadd.f32 %v2760, %v3004
        %v3012 = vpack.c.bf16 %v1995, %v1991
        %v3013 = vpack.c.bf16 %v2001, %v2001
        %v3014 = vpack.c.bf16 %v2097, %v2093
        %v3015 = vpack.c.bf16 %v2103, %v2103
        %3016 = vmatprep.subr.bf16.mxu0 0
        %3017 = vmatpush1.bf16.xpose.msra.mxu0 0
        %3018 = vmatprep.subr.bf16.mxu0 0
        %3019 = vmatpush1.bf16.xpose.msra.mxu0 0
        %3020 = vmatprep.subr.bf16.mxu0 0
        %3021 = vmatpush1.bf16.xpose.msra.mxu0 0
        %3022 = vmatprep.subr.bf16.mxu0 0
        %3023 = vmatpush1.bf16.xpose.msra.mxu0 0
        %3024 = vmatprep.subr.bf16.mxu0 0
        %3025 = vmatpush1.bf16.xpose.msra.mxu0 0
        %3026 = vmatprep.subr.bf16.mxu0 0
        %3027 = vmatpush1.bf16.xpose.msra.mxu0 0
        %3028 = vmatprep.subr.bf16.mxu0 0
        %3029 = vmatpush1.bf16.xpose.msra.mxu0 %v3015
        %3030 = vmatprep.subr.bf16.mxu0 0
        %3031 = vmatpush1.bf16.xpose.msra.mxu0 %v3014
        %3032 = vmatprep.subr.bf16.mxu0 0
        %3033 = vmatpush2.bf16.xpose.msra.mxu0 0
        %3034 = vmatprep.subr.bf16.mxu0 0
        %3035 = vmatpush2.bf16.xpose.msra.mxu0 0
        %3036 = vmatprep.subr.bf16.mxu0 0
        %3037 = vmatpush2.bf16.xpose.msra.mxu0 0
        %3038 = vmatprep.subr.bf16.mxu0 0
        %3039 = vmatpush2.bf16.xpose.msra.mxu0 0
        %3040 = vmatprep.subr.bf16.mxu0 0
        %3041 = vmatpush2.bf16.xpose.msra.mxu0 0
        %3042 = vmatprep.subr.bf16.mxu0 0
        %3043 = vmatpush2.bf16.xpose.msra.mxu0 0
        %3044 = vmatprep.subr.bf16.mxu0 0
        %3045 = vmatpush2.bf16.xpose.msra.mxu0 0
        %3046 = vmatprep.subr.bf16.mxu0 0
        %3047 = vmatpush2.bf16.xpose.msra.mxu0 0
        %3048 = vmatprep.mubr.bf16.mxu0 0
        %3049 = vmatmul.mubr.bf16.gmra.mxu0 %v3012
        %v3050 = vpop.f32.mrf.mxu0
        %v3051 = vadd.f32 0.0, %v3050
        %v3052 = vpop.f32.mrf.mxu0
        %v3053 = vpop.f32.mrf.mxu0
        %v3054 = vadd.f32 0.0, %v3053
        %v3055 = vpop.f32.mrf.mxu0
        %3056 = vmatprep.mubr.bf16.mxu0 0
        %3057 = vmatmul.mubr.bf16.gmra.mxu0 %v3013
        %v3058 = vpop.f32.mrf.mxu0
        %v3059 = vadd.f32 0.0, %v3058
        %v3060 = vpop.f32.mrf.mxu0
        %v3061 = vpop.f32.mrf.mxu0
        %v3062 = vpop.f32.mrf.mxu0
        %3063 = vdwg.mxu0
        %v3064 = vsel %vm2325, %v3051, -inf
        %3065 = vmax.xlane.f32.xlu0 %v3064
        %v3066 = vpop.xlane.xlu0 %3065
        %v3067 = vsel %vm2325, %v3054, -inf
        %3068 = vmax.xlane.f32.xlu0 %v3067
        %v3069 = vpop.xlane.xlu0 %3068
        %v3070 = vsel %vm2332, %v3059, -inf
        %3071 = vmax.xlane.f32.xlu0 %v3070
        %v3072 = vpop.xlane.xlu0 %3071
        %v3073 = vsub.f32 %v3051, %v3066
        %v3074 = vsub.f32 %v3054, %v3069
        %v3075 = vsub.f32 %v3059, %v3072
        %v3076 = vmul.f32 %v3073, 1.442695
        %v3077 = vpow.pop %v3076
        %v3078 = vmul.f32 %v3074, 1.442695
        %v3079 = vpow.pop %v3078
        %v3080 = vmul.f32 %v3075, 1.442695
        %v3081 = vpow.pop %v3080
        %v3082 = vsel %vm2325, %v3077, 0.0
        %3083 = vadd.xlane.f32.xlu0 %v3082
        %v3084 = vpop.xlane.xlu0 %3083
        %v3085 = vsel %vm2325, %v3079, 0.0
        %3086 = vadd.xlane.f32.xlu0 %v3085
        %v3087 = vpop.xlane.xlu0 %3086
        %v3088 = vsel %vm2332, %v3081, 0.0
        %3089 = vadd.xlane.f32.xlu0 %v3088
        %v3090 = vpop.xlane.xlu0 %3089
        %v3091 = vrcp.pop %v3084
        %v3092 = vrcp.pop %v3087
        %v3093 = vrcp.pop %v3090
        %v3094 = vmul.f32 %v3077, %v3091
        %v3095 = vmul.f32 %v3079, %v3092
        %v3096 = vmul.f32 %v3081, %v3093
        %v3097 = vpack.c.bf16 %v3095, %v3094
        %v3098 = vpack.c.bf16 %v3096, %v3096
        %v3099 = vpack.c.bf16 %v2199, %v2195
        %v3100 = vpack.c.bf16 %v2205, %v2205
        %v3102 = vsel %vm2325, %v3097, 0
        %v3105 = vsel %vm2325, %v3098, 0
        %v3108 = vand.u32 %v3100, %v2371
        %3110 = vmatprep.subr.bf16.mxu0 0
        %3111 = vmatpush1.bf16.msra.mxu0 0
        %3112 = vmatprep.subr.bf16.mxu0 0
        %3113 = vmatpush1.bf16.msra.mxu0 0
        %3114 = vmatprep.subr.bf16.mxu0 0
        %3115 = vmatpush1.bf16.msra.mxu0 0
        %3116 = vmatprep.subr.bf16.mxu0 0
        %3117 = vmatpush1.bf16.msra.mxu0 0
        %3118 = vmatprep.subr.bf16.mxu0 0
        %3119 = vmatpush1.bf16.msra.mxu0 0
        %3120 = vmatprep.subr.bf16.mxu0 0
        %3121 = vmatpush1.bf16.msra.mxu0 0
        %3122 = vmatprep.subr.bf16.mxu0 0
        %3123 = vmatpush1.bf16.msra.mxu0 %v3108
        %3124 = vmatprep.subr.bf16.mxu0 0
        %3125 = vmatpush1.bf16.msra.mxu0 %v3099
        %3126 = vmatprep.subr.bf16.mxu0 0
        %3127 = vmatpush2.bf16.msra.mxu0 0
        %3128 = vmatprep.subr.bf16.mxu0 0
        %3129 = vmatpush2.bf16.msra.mxu0 0
        %3130 = vmatprep.subr.bf16.mxu0 0
        %3131 = vmatpush2.bf16.msra.mxu0 0
        %3132 = vmatprep.subr.bf16.mxu0 0
        %3133 = vmatpush2.bf16.msra.mxu0 0
        %3134 = vmatprep.subr.bf16.mxu0 0
        %3135 = vmatpush2.bf16.msra.mxu0 0
        %3136 = vmatprep.subr.bf16.mxu0 0
        %3137 = vmatpush2.bf16.msra.mxu0 0
        %3138 = vmatprep.subr.bf16.mxu0 0
        %3139 = vmatpush2.bf16.msra.mxu0 0
        %3140 = vmatprep.subr.bf16.mxu0 0
        %3141 = vmatpush2.bf16.msra.mxu0 0
        %3142 = vmatprep.mubr.bf16.mxu0 0
        %3143 = vmatmul.mubr.bf16.gmra.mxu0 %v3102
        %v3144 = vpop.f32.mrf.mxu0
        %v3145 = vadd.f32 0.0, %v3144
        %v3146 = vpop.f32.mrf.mxu0
        %v3147 = vpop.f32.mrf.mxu0
        %v3148 = vadd.f32 0.0, %v3147
        %v3149 = vpop.f32.mrf.mxu0
        %3150 = vmatprep.mubr.bf16.mxu0 0
        %3151 = vmatmul.mubr.bf16.gmra.mxu0 %v3105
        %v3152 = vpop.f32.mrf.mxu0
        %v3153 = vadd.f32 0.0, %v3152
        %v3154 = vpop.f32.mrf.mxu0
        %v3155 = vpop.f32.mrf.mxu0
        %v3156 = vpop.f32.mrf.mxu0
        %3157 = vdwg.mxu0
        %v3158 = vpack.c.bf16 %v3148, %v3145
        %v3159 = vpack.c.bf16 %v3153, %v3153
        %v3176 = vunpack.c.l.b16 %v2257
        %v3177 = vunpack.c.l.b16 %v2258
        %v3178 = vunpack.c.l.b16 %v2259
        %v3179 = vunpack.c.l.b16 %v2260
        %v3180 = vunpack.c.l.b16 %v2261
        %v3181 = vunpack.c.l.b16 %v2262
        %v3182 = vunpack.c.l.b16 %v2263
        %v3183 = vunpack.c.l.b16 %v2264
        %v3184 = vunpack.c.l.b16 %v2265
        %v3185 = vunpack.c.l.b16 %v2266
        %v3186 = vunpack.c.l.b16 %v2267
        %v3187 = vunpack.c.l.b16 %v2268
        %v3188 = vunpack.c.l.b16 %v2269
        %v3189 = vunpack.c.l.b16 %v2270
        %v3190 = vunpack.c.l.b16 %v2271
        %v3191 = vunpack.c.l.b16 %v2272
        %v3192 = vpack.c.b16 %v3177, %v3176
        %v3193 = vpack.c.b16 %v3179, %v3178
        %v3194 = vpack.c.b16 %v3181, %v3180
        %v3195 = vpack.c.b16 %v3183, %v3182
        %v3196 = vpack.c.b16 %v3185, %v3184
        %v3197 = vpack.c.b16 %v3187, %v3186
        %v3198 = vpack.c.b16 %v3189, %v3188
        %v3199 = vpack.c.b16 %v3191, %v3190
        %3208 = vmatprep.subr.bf16.mxu0 0
        %3209 = vmatpush1.bf16.msra.mxu0 %v3199
        %3210 = vmatprep.subr.bf16.mxu0 0
        %3211 = vmatpush1.bf16.msra.mxu0 %v3198
        %3212 = vmatprep.subr.bf16.mxu0 0
        %3213 = vmatpush1.bf16.msra.mxu0 %v3197
        %3214 = vmatprep.subr.bf16.mxu0 0
        %3215 = vmatpush1.bf16.msra.mxu0 %v3196
        %3216 = vmatprep.subr.bf16.mxu0 0
        %3217 = vmatpush1.bf16.msra.mxu0 %v3195
        %3218 = vmatprep.subr.bf16.mxu0 0
        %3219 = vmatpush1.bf16.msra.mxu0 %v3194
        %3220 = vmatprep.subr.bf16.mxu0 0
        %3221 = vmatpush1.bf16.msra.mxu0 %v3193
        %3222 = vmatprep.subr.bf16.mxu0 0
        %3223 = vmatpush1.bf16.msra.mxu0 %v3192
        %3224 = vmatprep.subr.bf16.mxu0 0
        %3225 = vmatpush2.bf16.msra.mxu0 0
        %3226 = vmatprep.subr.bf16.mxu0 0
        %3227 = vmatpush2.bf16.msra.mxu0 0
        %3228 = vmatprep.subr.bf16.mxu0 0
        %3229 = vmatpush2.bf16.msra.mxu0 0
        %3230 = vmatprep.subr.bf16.mxu0 0
        %3231 = vmatpush2.bf16.msra.mxu0 0
        %3232 = vmatprep.subr.bf16.mxu0 0
        %3233 = vmatpush2.bf16.msra.mxu0 0
        %3234 = vmatprep.subr.bf16.mxu0 0
        %3235 = vmatpush2.bf16.msra.mxu0 0
        %3236 = vmatprep.subr.bf16.mxu0 0
        %3237 = vmatpush2.bf16.msra.mxu0 0
        %3238 = vmatprep.subr.bf16.mxu0 0
        %3239 = vmatpush2.bf16.msra.mxu0 0
        %3240 = vmatprep.mubr.bf16.mxu0 0
        %3241 = vmatmul.mubr.bf16.gmra.mxu0 %v3158
        %v3242 = vpop.f32.mrf.mxu0
        %v3243 = vadd.f32 0.0, %v3242
        %v3244 = vpop.f32.mrf.mxu0
        %v3245 = vpop.f32.mrf.mxu0
        %v3246 = vadd.f32 0.0, %v3245
        %v3247 = vpop.f32.mrf.mxu0
        %3248 = vmatprep.mubr.bf16.mxu0 0
        %3249 = vmatmul.mubr.bf16.gmra.mxu0 %v3159
        %v3250 = vpop.f32.mrf.mxu0
        %v3251 = vadd.f32 0.0, %v3250
        %v3252 = vpop.f32.mrf.mxu0
        %v3253 = vpop.f32.mrf.mxu0
        %v3254 = vpop.f32.mrf.mxu0
        %3255 = vdwg.mxu0
        %v3256 = vadd.f32 %v3009, %v3243
        %v3257 = vadd.f32 %v3010, %v3246
        %v3258 = vadd.f32 %v3011, %v3251
        %v3259 = vadd.f32 %v1201, %v3256
        %v3260 = vadd.f32 %v1202, %v3257
        %v3261 = vadd.f32 %v1203, %v3258
        %v3262 = vld [vmem:[%s958] sm:$0x1]
        %v3264 = vlaneseq
        %v3265 = vshrl.u32 %v3264, 7
        %v3266 = vsub.s32 0, %v3265
        %v3267 = vrot.slane %v3262, %v3266
        %v3269 = vadd.f32 %v3259, %v3267
        %v3270 = vadd.f32 %v3260, %v3267
        %v3271 = vadd.f32 %v3261, %v3267
        %v3272 = vld [vmem:[%s961] sm:$0x1]
        %v3273 = vld [vmem:[%s964] sm:$0x1]
        %3274 = vadd.xlane.f32.xlu0 %v3269
        %v3275 = vpop.xlane.xlu0 %3274
        %3276 = vadd.xlane.f32.xlu0 %v3270
        %v3277 = vpop.xlane.xlu0 %3276
        %v3278 = vsel %vm1210, %v3271, 0.0
        %3279 = vadd.xlane.f32.xlu0 %v3278
        %v3280 = vpop.xlane.xlu0 %3279
        %v3281 = vmul.f32 %v3275, %v1214
        %v3282 = vmul.f32 %v3277, %v1214
        %v3283 = vmul.f32 %v3280, %v1214
        %v3284 = vsub.f32 %v3269, %v3281
        %v3285 = vsub.f32 %v3270, %v3282
        %v3286 = vsub.f32 %v3271, %v3283
        %v3287 = vmul.f32 %v3284, %v3284
        %v3288 = vmul.f32 %v3285, %v3285
        %v3289 = vmul.f32 %v3286, %v3286
        %3290 = vadd.xlane.f32.xlu0 %v3287
        %v3291 = vpop.xlane.xlu0 %3290
        %3292 = vadd.xlane.f32.xlu0 %v3288
        %v3293 = vpop.xlane.xlu0 %3292
        %v3294 = vsel %vm1210, %v3289, 0.0
        %3295 = vadd.xlane.f32.xlu0 %v3294
        %v3296 = vpop.xlane.xlu0 %3295
        %v3297 = vmul.f32 %v3291, %v1214
        %v3298 = vmul.f32 %v3293, %v1214
        %v3299 = vmul.f32 %v3296, %v1214
        %v3300 = vadd.f32 %v3297, 1e-05
        %v3301 = vadd.f32 %v3298, 1e-05
        %v3302 = vadd.f32 %v3299, 1e-05
        %v3303 = vrsqrt.pop %v3300
        %v3304 = vrsqrt.pop %v3301
        %v3305 = vrsqrt.pop %v3302
        %v3306 = vmul.f32 %v3284, %v3303
        %v3307 = vmul.f32 %v3285, %v3304
        %v3308 = vmul.f32 %v3286, %v3305
        %v3310 = vlaneseq
        %v3311 = vshrl.u32 %v3310, 7
        %v3312 = vsub.s32 0, %v3311
        %v3313 = vrot.slane %v3272, %v3312
        %v3315 = vmul.f32 %v3306, %v3313
        %v3316 = vmul.f32 %v3307, %v3313
        %v3317 = vmul.f32 %v3308, %v3313
        %v3319 = vlaneseq
        %v3320 = vshrl.u32 %v3319, 7
        %v3321 = vsub.s32 0, %v3320
        %v3322 = vrot.slane %v3273, %v3321
        %v3324 = vadd.f32 %v3315, %v3322
        %v3325 = vadd.f32 %v3316, %v3322
        %v3326 = vadd.f32 %v3317, %v3322
        %v3327 = vpack.c.bf16 %v3325, %v3324
        %v3328 = vpack.c.bf16 %v3326, %v3326
        %v3329 = vld [vmem:[%s833] sm:$0xff]
        %v3330 = vld [vmem:[%s833 + $0x8] sm:$0xff]
        %v3331 = vld [vmem:[%s833 + $0x10] sm:$0xff]
        %v3332 = vld [vmem:[%s833 + $0x18] sm:$0xff]
        %v3333 = vld [vmem:[%s833 + $0x20] sm:$0xff]
        %v3334 = vld [vmem:[%s833 + $0x28] sm:$0xff]
        %v3335 = vld [vmem:[%s833 + $0x30] sm:$0xff]
        %v3336 = vld [vmem:[%s833 + $0x38] sm:$0xff]
        %v3337 = vld [vmem:[%s833 + $0x40] sm:$0xff]
        %v3338 = vld [vmem:[%s833 + $0x48] sm:$0xff]
        %v3339 = vld [vmem:[%s833 + $0x50] sm:$0xff]
        %v3340 = vld [vmem:[%s833 + $0x58] sm:$0xff]
        %v3341 = vld [vmem:[%s833 + $0x60] sm:$0xff]
        %v3342 = vld [vmem:[%s833 + $0x68] sm:$0xff]
        %v3343 = vld [vmem:[%s833 + $0x70] sm:$0xff]
        %v3344 = vld [vmem:[%s833 + $0x78] sm:$0xff]
        %v3345 = vld [vmem:[%s833 + $0x80] sm:$0xff]
        %v3346 = vld [vmem:[%s833 + $0x88] sm:$0xff]
        %v3347 = vld [vmem:[%s833 + $0x90] sm:$0xff]
        %v3348 = vld [vmem:[%s833 + $0x98] sm:$0xff]
        %v3349 = vld [vmem:[%s833 + $0xa0] sm:$0xff]
        %v3350 = vld [vmem:[%s833 + $0xa8] sm:$0xff]
        %v3351 = vld [vmem:[%s833 + $0xb0] sm:$0xff]
        %v3352 = vld [vmem:[%s833 + $0xb8] sm:$0xff]
        %v3353 = vld [vmem:[%s833 + $0xc0] sm:$0xff]
        %v3354 = vld [vmem:[%s833 + $0xc8] sm:$0xff]
        %v3355 = vld [vmem:[%s833 + $0xd0] sm:$0xff]
        %v3356 = vld [vmem:[%s833 + $0xd8] sm:$0xff]
        %v3357 = vld [vmem:[%s833 + $0xe0] sm:$0xff]
        %v3358 = vld [vmem:[%s833 + $0xe8] sm:$0xff]
        %v3359 = vld [vmem:[%s833 + $0xf0] sm:$0xff]
        %v3360 = vld [vmem:[%s833 + $0xf8] sm:$0xff]
        %v3361 = vld [vmem:[%s968] sm:$0xf]
        %v3363 = vlaneseq
        %v3364 = vshrl.u32 %v3363, 7
        %v3365 = vsub.s32 0, %v3364
        %v3366 = vrot.slane %v3361, %v3365
        %v3367 = vlaneseq
        %v3368 = vshrl.u32 %v3367, 7
        %v3369 = vsub.s32 1, %v3368
        %v3370 = vrot.slane %v3361, %v3369
        %v3371 = vlaneseq
        %v3372 = vshrl.u32 %v3371, 7
        %v3373 = vsub.s32 2, %v3372
        %v3374 = vrot.slane %v3361, %v3373
        %v3375 = vlaneseq
        %v3376 = vshrl.u32 %v3375, 7
        %v3377 = vsub.s32 3, %v3376
        %v3378 = vrot.slane %v3361, %v3377
        %v3415 = vunpack.c.l.b16 %v3329
        %v3416 = vunpack.c.h.b16 %v3329
        %v3417 = vunpack.c.l.b16 %v3330
        %v3418 = vunpack.c.h.b16 %v3330
        %v3419 = vunpack.c.l.b16 %v3331
        %v3420 = vunpack.c.h.b16 %v3331
        %v3421 = vunpack.c.l.b16 %v3332
        %v3422 = vunpack.c.h.b16 %v3332
        %v3423 = vunpack.c.l.b16 %v3333
        %v3424 = vunpack.c.h.b16 %v3333
        %v3425 = vunpack.c.l.b16 %v3334
        %v3426 = vunpack.c.h.b16 %v3334
        %v3427 = vunpack.c.l.b16 %v3335
        %v3428 = vunpack.c.h.b16 %v3335
        %v3429 = vunpack.c.l.b16 %v3336
        %v3430 = vunpack.c.h.b16 %v3336
        %v3431 = vunpack.c.l.b16 %v3337
        %v3432 = vunpack.c.h.b16 %v3337
        %v3433 = vunpack.c.l.b16 %v3338
        %v3434 = vunpack.c.h.b16 %v3338
        %v3435 = vunpack.c.l.b16 %v3339
        %v3436 = vunpack.c.h.b16 %v3339
        %v3437 = vunpack.c.l.b16 %v3340
        %v3438 = vunpack.c.h.b16 %v3340
        %v3439 = vunpack.c.l.b16 %v3341
        %v3440 = vunpack.c.h.b16 %v3341
        %v3441 = vunpack.c.l.b16 %v3342
        %v3442 = vunpack.c.h.b16 %v3342
        %v3443 = vunpack.c.l.b16 %v3343
        %v3444 = vunpack.c.h.b16 %v3343
        %v3445 = vunpack.c.l.b16 %v3344
        %v3446 = vunpack.c.h.b16 %v3344
        %v3447 = vunpack.c.l.b16 %v3345
        %v3448 = vunpack.c.h.b16 %v3345
        %v3449 = vunpack.c.l.b16 %v3346
        %v3450 = vunpack.c.h.b16 %v3346
        %v3451 = vunpack.c.l.b16 %v3347
        %v3452 = vunpack.c.h.b16 %v3347
        %v3453 = vunpack.c.l.b16 %v3348
        %v3454 = vunpack.c.h.b16 %v3348
        %v3455 = vunpack.c.l.b16 %v3349
        %v3456 = vunpack.c.h.b16 %v3349
        %v3457 = vunpack.c.l.b16 %v3350
        %v3458 = vunpack.c.h.b16 %v3350
        %v3459 = vunpack.c.l.b16 %v3351
        %v3460 = vunpack.c.h.b16 %v3351
        %v3461 = vunpack.c.l.b16 %v3352
        %v3462 = vunpack.c.h.b16 %v3352
        %v3463 = vunpack.c.l.b16 %v3353
        %v3464 = vunpack.c.h.b16 %v3353
        %v3465 = vunpack.c.l.b16 %v3354
        %v3466 = vunpack.c.h.b16 %v3354
        %v3467 = vunpack.c.l.b16 %v3355
        %v3468 = vunpack.c.h.b16 %v3355
        %v3469 = vunpack.c.l.b16 %v3356
        %v3470 = vunpack.c.h.b16 %v3356
        %v3471 = vunpack.c.l.b16 %v3357
        %v3472 = vunpack.c.h.b16 %v3357
        %v3473 = vunpack.c.l.b16 %v3358
        %v3474 = vunpack.c.h.b16 %v3358
        %v3475 = vunpack.c.l.b16 %v3359
        %v3476 = vunpack.c.h.b16 %v3359
        %v3477 = vunpack.c.l.b16 %v3360
        %v3478 = vunpack.c.h.b16 %v3360
        %v3479 = vpack.c.b16 %v3419, %v3415
        %v3480 = vpack.c.b16 %v3420, %v3416
        %v3481 = vpack.c.b16 %v3421, %v3417
        %v3482 = vpack.c.b16 %v3422, %v3418
        %v3483 = vpack.c.b16 %v3427, %v3423
        %v3484 = vpack.c.b16 %v3428, %v3424
        %v3485 = vpack.c.b16 %v3429, %v3425
        %v3486 = vpack.c.b16 %v3430, %v3426
        %v3487 = vpack.c.b16 %v3435, %v3431
        %v3488 = vpack.c.b16 %v3436, %v3432
        %v3489 = vpack.c.b16 %v3437, %v3433
        %v3490 = vpack.c.b16 %v3438, %v3434
        %v3491 = vpack.c.b16 %v3443, %v3439
        %v3492 = vpack.c.b16 %v3444, %v3440
        %v3493 = vpack.c.b16 %v3445, %v3441
        %v3494 = vpack.c.b16 %v3446, %v3442
        %v3495 = vpack.c.b16 %v3451, %v3447
        %v3496 = vpack.c.b16 %v3452, %v3448
        %v3497 = vpack.c.b16 %v3453, %v3449
        %v3498 = vpack.c.b16 %v3454, %v3450
        %v3499 = vpack.c.b16 %v3459, %v3455
        %v3500 = vpack.c.b16 %v3460, %v3456
        %v3501 = vpack.c.b16 %v3461, %v3457
        %v3502 = vpack.c.b16 %v3462, %v3458
        %v3503 = vpack.c.b16 %v3467, %v3463
        %v3504 = vpack.c.b16 %v3468, %v3464
        %v3505 = vpack.c.b16 %v3469, %v3465
        %v3506 = vpack.c.b16 %v3470, %v3466
        %v3507 = vpack.c.b16 %v3475, %v3471
        %v3508 = vpack.c.b16 %v3476, %v3472
        %v3509 = vpack.c.b16 %v3477, %v3473
        %v3510 = vpack.c.b16 %v3478, %v3474
        %3543 = vmatprep.subr.bf16.mxu0 %v3508
        %3544 = vmatpush1.bf16.msra.mxu0 %v3507
        %3545 = vmatprep.subr.bf16.mxu0 %v3504
        %3546 = vmatpush1.bf16.msra.mxu0 %v3503
        %3547 = vmatprep.subr.bf16.mxu0 %v3500
        %3548 = vmatpush1.bf16.msra.mxu0 %v3499
        %3549 = vmatprep.subr.bf16.mxu0 %v3496
        %3550 = vmatpush1.bf16.msra.mxu0 %v3495
        %3551 = vmatprep.subr.bf16.mxu0 %v3492
        %3552 = vmatpush1.bf16.msra.mxu0 %v3491
        %3553 = vmatprep.subr.bf16.mxu0 %v3488
        %3554 = vmatpush1.bf16.msra.mxu0 %v3487
        %3555 = vmatprep.subr.bf16.mxu0 %v3484
        %3556 = vmatpush1.bf16.msra.mxu0 %v3483
        %3557 = vmatprep.subr.bf16.mxu0 %v3480
        %3558 = vmatpush1.bf16.msra.mxu0 %v3479
        %3559 = vmatprep.subr.bf16.mxu0 0
        %3560 = vmatpush2.bf16.msra.mxu0 0
        %3561 = vmatprep.subr.bf16.mxu0 0
        %3562 = vmatpush2.bf16.msra.mxu0 0
        %3563 = vmatprep.subr.bf16.mxu0 0
        %3564 = vmatpush2.bf16.msra.mxu0 0
        %3565 = vmatprep.subr.bf16.mxu0 0
        %3566 = vmatpush2.bf16.msra.mxu0 0
        %3567 = vmatprep.subr.bf16.mxu0 0
        %3568 = vmatpush2.bf16.msra.mxu0 0
        %3569 = vmatprep.subr.bf16.mxu0 0
        %3570 = vmatpush2.bf16.msra.mxu0 0
        %3571 = vmatprep.subr.bf16.mxu0 0
        %3572 = vmatpush2.bf16.msra.mxu0 0
        %3573 = vmatprep.subr.bf16.mxu0 0
        %3574 = vmatpush2.bf16.msra.mxu0 0
        %3575 = vmatprep.mubr.bf16.mxu0 0
        %3576 = vmatmul.mubr.bf16.gmra.mxu0 %v3327
        %v3577 = vpop.f32.mrf.mxu0
        %v3578 = vadd.f32 %v3366, %v3577
        %v3579 = vpop.f32.mrf.mxu0
        %v3580 = vadd.f32 %v3370, %v3579
        %v3581 = vpop.f32.mrf.mxu0
        %v3582 = vadd.f32 %v3366, %v3581
        %v3583 = vpop.f32.mrf.mxu0
        %v3584 = vadd.f32 %v3370, %v3583
        %3585 = vmatprep.mubr.bf16.mxu0 0
        %3586 = vmatmul.mubr.bf16.gmra.mxu0 %v3328
        %v3587 = vpop.f32.mrf.mxu0
        %v3588 = vadd.f32 %v3366, %v3587
        %v3589 = vpop.f32.mrf.mxu0
        %v3590 = vadd.f32 %v3370, %v3589
        %v3591 = vpop.f32.mrf.mxu0
        %v3592 = vpop.f32.mrf.mxu0
        %3593 = vdwg.mxu0
        %3594 = vmatprep.subr.bf16.mxu0 %v3510
        %3595 = vmatpush1.bf16.msra.mxu0 %v3509
        %3596 = vmatprep.subr.bf16.mxu0 %v3506
        %3597 = vmatpush1.bf16.msra.mxu0 %v3505
        %3598 = vmatprep.subr.bf16.mxu0 %v3502
        %3599 = vmatpush1.bf16.msra.mxu0 %v3501
        %3600 = vmatprep.subr.bf16.mxu0 %v3498
        %3601 = vmatpush1.bf16.msra.mxu0 %v3497
        %3602 = vmatprep.subr.bf16.mxu0 %v3494
        %3603 = vmatpush1.bf16.msra.mxu0 %v3493
        %3604 = vmatprep.subr.bf16.mxu0 %v3490
        %3605 = vmatpush1.bf16.msra.mxu0 %v3489
        %3606 = vmatprep.subr.bf16.mxu0 %v3486
        %3607 = vmatpush1.bf16.msra.mxu0 %v3485
        %3608 = vmatprep.subr.bf16.mxu0 %v3482
        %3609 = vmatpush1.bf16.msra.mxu0 %v3481
        %3610 = vmatprep.subr.bf16.mxu0 0
        %3611 = vmatpush2.bf16.msra.mxu0 0
        %3612 = vmatprep.subr.bf16.mxu0 0
        %3613 = vmatpush2.bf16.msra.mxu0 0
        %3614 = vmatprep.subr.bf16.mxu0 0
        %3615 = vmatpush2.bf16.msra.mxu0 0
        %3616 = vmatprep.subr.bf16.mxu0 0
        %3617 = vmatpush2.bf16.msra.mxu0 0
        %3618 = vmatprep.subr.bf16.mxu0 0
        %3619 = vmatpush2.bf16.msra.mxu0 0
        %3620 = vmatprep.subr.bf16.mxu0 0
        %3621 = vmatpush2.bf16.msra.mxu0 0
        %3622 = vmatprep.subr.bf16.mxu0 0
        %3623 = vmatpush2.bf16.msra.mxu0 0
        %3624 = vmatprep.subr.bf16.mxu0 0
        %3625 = vmatpush2.bf16.msra.mxu0 0
        %3626 = vmatprep.mubr.bf16.mxu0 0
        %3627 = vmatmul.mubr.bf16.gmra.mxu0 %v3327
        %v3628 = vpop.f32.mrf.mxu0
        %v3629 = vadd.f32 %v3374, %v3628
        %v3630 = vpop.f32.mrf.mxu0
        %v3631 = vadd.f32 %v3378, %v3630
        %v3632 = vpop.f32.mrf.mxu0
        %v3633 = vadd.f32 %v3374, %v3632
        %v3634 = vpop.f32.mrf.mxu0
        %v3635 = vadd.f32 %v3378, %v3634
        %3636 = vmatprep.mubr.bf16.mxu0 0
        %3637 = vmatmul.mubr.bf16.gmra.mxu0 %v3328
        %v3638 = vpop.f32.mrf.mxu0
        %v3639 = vadd.f32 %v3374, %v3638
        %v3640 = vpop.f32.mrf.mxu0
        %v3641 = vadd.f32 %v3378, %v3640
        %v3642 = vpop.f32.mrf.mxu0
        %v3643 = vpop.f32.mrf.mxu0
        %3644 = vdwg.mxu0
        %v3645 = vmul.f32 %v3578, 1.702
        %v3646 = vmul.f32 %v3580, 1.702
        %v3647 = vmul.f32 %v3629, 1.702
        %v3648 = vmul.f32 %v3631, 1.702
        %v3649 = vmul.f32 %v3582, 1.702
        %v3650 = vmul.f32 %v3584, 1.702
        %v3651 = vmul.f32 %v3633, 1.702
        %v3652 = vmul.f32 %v3635, 1.702
        %v3653 = vmul.f32 %v3588, 1.702
        %v3654 = vmul.f32 %v3590, 1.702
        %v3655 = vmul.f32 %v3639, 1.702
        %v3656 = vmul.f32 %v3641, 1.702
        %v3657 = vxor.u32 %v3645, 2147483648
        %v3658 = vxor.u32 %v3646, 2147483648
        %v3659 = vxor.u32 %v3647, 2147483648
        %v3660 = vxor.u32 %v3648, 2147483648
        %v3661 = vxor.u32 %v3649, 2147483648
        %v3662 = vxor.u32 %v3650, 2147483648
        %v3663 = vxor.u32 %v3651, 2147483648
        %v3664 = vxor.u32 %v3652, 2147483648
        %v3665 = vxor.u32 %v3653, 2147483648
        %v3666 = vxor.u32 %v3654, 2147483648
        %v3667 = vxor.u32 %v3655, 2147483648
        %v3668 = vxor.u32 %v3656, 2147483648
        %v3669 = vmul.f32 %v3657, 1.442695
        %v3670 = vpow.pop %v3669
        %v3671 = vmul.f32 %v3658, 1.442695
        %v3672 = vpow.pop %v3671
        %v3673 = vmul.f32 %v3659, 1.442695
        %v3674 = vpow.pop %v3673
        %v3675 = vmul.f32 %v3660, 1.442695
        %v3676 = vpow.pop %v3675
        %v3677 = vmul.f32 %v3661, 1.442695
        %v3678 = vpow.pop %v3677
        %v3679 = vmul.f32 %v3662, 1.442695
        %v3680 = vpow.pop %v3679
        %v3681 = vmul.f32 %v3663, 1.442695
        %v3682 = vpow.pop %v3681
        %v3683 = vmul.f32 %v3664, 1.442695
        %v3684 = vpow.pop %v3683
        %v3685 = vmul.f32 %v3665, 1.442695
        %v3686 = vpow.pop %v3685
        %v3687 = vmul.f32 %v3666, 1.442695
        %v3688 = vpow.pop %v3687
        %v3689 = vmul.f32 %v3667, 1.442695
        %v3690 = vpow.pop %v3689
        %v3691 = vmul.f32 %v3668, 1.442695
        %v3692 = vpow.pop %v3691
        %v3693 = vadd.f32 %v3670, 1.0
        %v3694 = vadd.f32 %v3672, 1.0
        %v3695 = vadd.f32 %v3674, 1.0
        %v3696 = vadd.f32 %v3676, 1.0
        %v3697 = vadd.f32 %v3678, 1.0
        %v3698 = vadd.f32 %v3680, 1.0
        %v3699 = vadd.f32 %v3682, 1.0
        %v3700 = vadd.f32 %v3684, 1.0
        %v3701 = vadd.f32 %v3686, 1.0
        %v3702 = vadd.f32 %v3688, 1.0
        %v3703 = vadd.f32 %v3690, 1.0
        %v3704 = vadd.f32 %v3692, 1.0
        %v3705 = vrcp.pop %v3693
        %v3706 = vmul.f32 1.0, %v3705
        %v3707 = vrcp.pop %v3694
        %v3708 = vmul.f32 1.0, %v3707
        %v3709 = vrcp.pop %v3695
        %v3710 = vmul.f32 1.0, %v3709
        %v3711 = vrcp.pop %v3696
        %v3712 = vmul.f32 1.0, %v3711
        %v3713 = vrcp.pop %v3697
        %v3714 = vmul.f32 1.0, %v3713
        %v3715 = vrcp.pop %v3698
        %v3716 = vmul.f32 1.0, %v3715
        %v3717 = vrcp.pop %v3699
        %v3718 = vmul.f32 1.0, %v3717
        %v3719 = vrcp.pop %v3700
        %v3720 = vmul.f32 1.0, %v3719
        %v3721 = vrcp.pop %v3701
        %v3722 = vmul.f32 1.0, %v3721
        %v3723 = vrcp.pop %v3702
        %v3724 = vmul.f32 1.0, %v3723
        %v3725 = vrcp.pop %v3703
        %v3726 = vmul.f32 1.0, %v3725
        %v3727 = vrcp.pop %v3704
        %v3728 = vmul.f32 1.0, %v3727
        %v3729 = vmul.f32 %v3578, %v3706
        %v3730 = vmul.f32 %v3580, %v3708
        %v3731 = vmul.f32 %v3629, %v3710
        %v3732 = vmul.f32 %v3631, %v3712
        %v3733 = vmul.f32 %v3582, %v3714
        %v3734 = vmul.f32 %v3584, %v3716
        %v3735 = vmul.f32 %v3633, %v3718
        %v3736 = vmul.f32 %v3635, %v3720
        %v3737 = vmul.f32 %v3588, %v3722
        %v3738 = vmul.f32 %v3590, %v3724
        %v3739 = vmul.f32 %v3639, %v3726
        %v3740 = vmul.f32 %v3641, %v3728
        %v3741 = vpack.c.bf16 %v3733, %v3729
        %v3742 = vpack.c.bf16 %v3734, %v3730
        %v3743 = vpack.c.bf16 %v3735, %v3731
        %v3744 = vpack.c.bf16 %v3736, %v3732
        %v3745 = vpack.c.bf16 %v3737, %v3737
        %v3746 = vpack.c.bf16 %v3738, %v3738
        %v3747 = vpack.c.bf16 %v3739, %v3739
        %v3748 = vpack.c.bf16 %v3740, %v3740
        %v3749 = vld [vmem:[%s842] sm:$0xf]
        %v3750 = vld [vmem:[%s842 + $0x4] sm:$0xf]
        %v3751 = vld [vmem:[%s842 + $0x8] sm:$0xf]
        %v3752 = vld [vmem:[%s842 + $0xc] sm:$0xf]
        %v3753 = vld [vmem:[%s842 + $0x10] sm:$0xf]
        %v3754 = vld [vmem:[%s842 + $0x14] sm:$0xf]
        %v3755 = vld [vmem:[%s842 + $0x18] sm:$0xf]
        %v3756 = vld [vmem:[%s842 + $0x1c] sm:$0xf]
        %v3757 = vld [vmem:[%s842 + $0x20] sm:$0xf]
        %v3758 = vld [vmem:[%s842 + $0x24] sm:$0xf]
        %v3759 = vld [vmem:[%s842 + $0x28] sm:$0xf]
        %v3760 = vld [vmem:[%s842 + $0x2c] sm:$0xf]
        %v3761 = vld [vmem:[%s842 + $0x30] sm:$0xf]
        %v3762 = vld [vmem:[%s842 + $0x34] sm:$0xf]
        %v3763 = vld [vmem:[%s842 + $0x38] sm:$0xf]
        %v3764 = vld [vmem:[%s842 + $0x3c] sm:$0xf]
        %v3765 = vld [vmem:[%s842 + $0x40] sm:$0xf]
        %v3766 = vld [vmem:[%s842 + $0x44] sm:$0xf]
        %v3767 = vld [vmem:[%s842 + $0x48] sm:$0xf]
        %v3768 = vld [vmem:[%s842 + $0x4c] sm:$0xf]
        %v3769 = vld [vmem:[%s842 + $0x50] sm:$0xf]
        %v3770 = vld [vmem:[%s842 + $0x54] sm:$0xf]
        %v3771 = vld [vmem:[%s842 + $0x58] sm:$0xf]
        %v3772 = vld [vmem:[%s842 + $0x5c] sm:$0xf]
        %v3773 = vld [vmem:[%s842 + $0x60] sm:$0xf]
        %v3774 = vld [vmem:[%s842 + $0x64] sm:$0xf]
        %v3775 = vld [vmem:[%s842 + $0x68] sm:$0xf]
        %v3776 = vld [vmem:[%s842 + $0x6c] sm:$0xf]
        %v3777 = vld [vmem:[%s842 + $0x70] sm:$0xf]
        %v3778 = vld [vmem:[%s842 + $0x74] sm:$0xf]
        %v3779 = vld [vmem:[%s842 + $0x78] sm:$0xf]
        %v3780 = vld [vmem:[%s842 + $0x7c] sm:$0xf]
        %v3781 = vld [vmem:[%s842 + $0x80] sm:$0xf]
        %v3782 = vld [vmem:[%s842 + $0x84] sm:$0xf]
        %v3783 = vld [vmem:[%s842 + $0x88] sm:$0xf]
        %v3784 = vld [vmem:[%s842 + $0x8c] sm:$0xf]
        %v3785 = vld [vmem:[%s842 + $0x90] sm:$0xf]
        %v3786 = vld [vmem:[%s842 + $0x94] sm:$0xf]
        %v3787 = vld [vmem:[%s842 + $0x98] sm:$0xf]
        %v3788 = vld [vmem:[%s842 + $0x9c] sm:$0xf]
        %v3789 = vld [vmem:[%s842 + $0xa0] sm:$0xf]
        %v3790 = vld [vmem:[%s842 + $0xa4] sm:$0xf]
        %v3791 = vld [vmem:[%s842 + $0xa8] sm:$0xf]
        %v3792 = vld [vmem:[%s842 + $0xac] sm:$0xf]
        %v3793 = vld [vmem:[%s842 + $0xb0] sm:$0xf]
        %v3794 = vld [vmem:[%s842 + $0xb4] sm:$0xf]
        %v3795 = vld [vmem:[%s842 + $0xb8] sm:$0xf]
        %v3796 = vld [vmem:[%s842 + $0xbc] sm:$0xf]
        %v3797 = vld [vmem:[%s842 + $0xc0] sm:$0xf]
        %v3798 = vld [vmem:[%s842 + $0xc4] sm:$0xf]
        %v3799 = vld [vmem:[%s842 + $0xc8] sm:$0xf]
        %v3800 = vld [vmem:[%s842 + $0xcc] sm:$0xf]
        %v3801 = vld [vmem:[%s842 + $0xd0] sm:$0xf]
        %v3802 = vld [vmem:[%s842 + $0xd4] sm:$0xf]
        %v3803 = vld [vmem:[%s842 + $0xd8] sm:$0xf]
        %v3804 = vld [vmem:[%s842 + $0xdc] sm:$0xf]
        %v3805 = vld [vmem:[%s842 + $0xe0] sm:$0xf]
        %v3806 = vld [vmem:[%s842 + $0xe4] sm:$0xf]
        %v3807 = vld [vmem:[%s842 + $0xe8] sm:$0xf]
        %v3808 = vld [vmem:[%s842 + $0xec] sm:$0xf]
        %v3809 = vld [vmem:[%s842 + $0xf0] sm:$0xf]
        %v3810 = vld [vmem:[%s842 + $0xf4] sm:$0xf]
        %v3811 = vld [vmem:[%s842 + $0xf8] sm:$0xf]
        %v3812 = vld [vmem:[%s842 + $0xfc] sm:$0xf]
        %v3877 = vunpack.c.l.b16 %v3749
        %v3878 = vunpack.c.l.b16 %v3750
        %v3879 = vunpack.c.l.b16 %v3751
        %v3880 = vunpack.c.l.b16 %v3752
        %v3881 = vunpack.c.l.b16 %v3753
        %v3882 = vunpack.c.l.b16 %v3754
        %v3883 = vunpack.c.l.b16 %v3755
        %v3884 = vunpack.c.l.b16 %v3756
        %v3885 = vunpack.c.l.b16 %v3757
        %v3886 = vunpack.c.l.b16 %v3758
        %v3887 = vunpack.c.l.b16 %v3759
        %v3888 = vunpack.c.l.b16 %v3760
        %v3889 = vunpack.c.l.b16 %v3761
        %v3890 = vunpack.c.l.b16 %v3762
        %v3891 = vunpack.c.l.b16 %v3763
        %v3892 = vunpack.c.l.b16 %v3764
        %v3893 = vunpack.c.l.b16 %v3765
        %v3894 = vunpack.c.l.b16 %v3766
        %v3895 = vunpack.c.l.b16 %v3767
        %v3896 = vunpack.c.l.b16 %v3768
        %v3897 = vunpack.c.l.b16 %v3769
        %v3898 = vunpack.c.l.b16 %v3770
        %v3899 = vunpack.c.l.b16 %v3771
        %v3900 = vunpack.c.l.b16 %v3772
        %v3901 = vunpack.c.l.b16 %v3773
        %v3902 = vunpack.c.l.b16 %v3774
        %v3903 = vunpack.c.l.b16 %v3775
        %v3904 = vunpack.c.l.b16 %v3776
        %v3905 = vunpack.c.l.b16 %v3777
        %v3906 = vunpack.c.l.b16 %v3778
        %v3907 = vunpack.c.l.b16 %v3779
        %v3908 = vunpack.c.l.b16 %v3780
        %v3909 = vunpack.c.l.b16 %v3781
        %v3910 = vunpack.c.l.b16 %v3782
        %v3911 = vunpack.c.l.b16 %v3783
        %v3912 = vunpack.c.l.b16 %v3784
        %v3913 = vunpack.c.l.b16 %v3785
        %v3914 = vunpack.c.l.b16 %v3786
        %v3915 = vunpack.c.l.b16 %v3787
        %v3916 = vunpack.c.l.b16 %v3788
        %v3917 = vunpack.c.l.b16 %v3789
        %v3918 = vunpack.c.l.b16 %v3790
        %v3919 = vunpack.c.l.b16 %v3791
        %v3920 = vunpack.c.l.b16 %v3792
        %v3921 = vunpack.c.l.b16 %v3793
        %v3922 = vunpack.c.l.b16 %v3794
        %v3923 = vunpack.c.l.b16 %v3795
        %v3924 = vunpack.c.l.b16 %v3796
        %v3925 = vunpack.c.l.b16 %v3797
        %v3926 = vunpack.c.l.b16 %v3798
        %v3927 = vunpack.c.l.b16 %v3799
        %v3928 = vunpack.c.l.b16 %v3800
        %v3929 = vunpack.c.l.b16 %v3801
        %v3930 = vunpack.c.l.b16 %v3802
        %v3931 = vunpack.c.l.b16 %v3803
        %v3932 = vunpack.c.l.b16 %v3804
        %v3933 = vunpack.c.l.b16 %v3805
        %v3934 = vunpack.c.l.b16 %v3806
        %v3935 = vunpack.c.l.b16 %v3807
        %v3936 = vunpack.c.l.b16 %v3808
        %v3937 = vunpack.c.l.b16 %v3809
        %v3938 = vunpack.c.l.b16 %v3810
        %v3939 = vunpack.c.l.b16 %v3811
        %v3940 = vunpack.c.l.b16 %v3812
        %v3941 = vpack.c.b16 %v3878, %v3877
        %v3942 = vpack.c.b16 %v3880, %v3879
        %v3943 = vpack.c.b16 %v3882, %v3881
        %v3944 = vpack.c.b16 %v3884, %v3883
        %v3945 = vpack.c.b16 %v3886, %v3885
        %v3946 = vpack.c.b16 %v3888, %v3887
        %v3947 = vpack.c.b16 %v3890, %v3889
        %v3948 = vpack.c.b16 %v3892, %v3891
        %v3949 = vpack.c.b16 %v3894, %v3893
        %v3950 = vpack.c.b16 %v3896, %v3895
        %v3951 = vpack.c.b16 %v3898, %v3897
        %v3952 = vpack.c.b16 %v3900, %v3899
        %v3953 = vpack.c.b16 %v3902, %v3901
        %v3954 = vpack.c.b16 %v3904, %v3903
        %v3955 = vpack.c.b16 %v3906, %v3905
        %v3956 = vpack.c.b16 %v3908, %v3907
        %v3957 = vpack.c.b16 %v3910, %v3909
        %v3958 = vpack.c.b16 %v3912, %v3911
        %v3959 = vpack.c.b16 %v3914, %v3913
        %v3960 = vpack.c.b16 %v3916, %v3915
        %v3961 = vpack.c.b16 %v3918, %v3917
        %v3962 = vpack.c.b16 %v3920, %v3919
        %v3963 = vpack.c.b16 %v3922, %v3921
        %v3964 = vpack.c.b16 %v3924, %v3923
        %v3965 = vpack.c.b16 %v3926, %v3925
        %v3966 = vpack.c.b16 %v3928, %v3927
        %v3967 = vpack.c.b16 %v3930, %v3929
        %v3968 = vpack.c.b16 %v3932, %v3931
        %v3969 = vpack.c.b16 %v3934, %v3933
        %v3970 = vpack.c.b16 %v3936, %v3935
        %v3971 = vpack.c.b16 %v3938, %v3937
        %v3972 = vpack.c.b16 %v3940, %v3939
        %4005 = vmatprep.subr.bf16.mxu0 0
        %4006 = vmatpush1.bf16.msra.mxu0 %v3948
        %4007 = vmatprep.subr.bf16.mxu0 0
        %4008 = vmatpush1.bf16.msra.mxu0 %v3947
        %4009 = vmatprep.subr.bf16.mxu0 0
        %4010 = vmatpush1.bf16.msra.mxu0 %v3946
        %4011 = vmatprep.subr.bf16.mxu0 0
        %4012 = vmatpush1.bf16.msra.mxu0 %v3945
        %4013 = vmatprep.subr.bf16.mxu0 0
        %4014 = vmatpush1.bf16.msra.mxu0 %v3944
        %4015 = vmatprep.subr.bf16.mxu0 0
        %4016 = vmatpush1.bf16.msra.mxu0 %v3943
        %4017 = vmatprep.subr.bf16.mxu0 0
        %4018 = vmatpush1.bf16.msra.mxu0 %v3942
        %4019 = vmatprep.subr.bf16.mxu0 0
        %4020 = vmatpush1.bf16.msra.mxu0 %v3941
        %4021 = vmatprep.subr.bf16.mxu0 0
        %4022 = vmatpush2.bf16.msra.mxu0 %v3956
        %4023 = vmatprep.subr.bf16.mxu0 0
        %4024 = vmatpush2.bf16.msra.mxu0 %v3955
        %4025 = vmatprep.subr.bf16.mxu0 0
        %4026 = vmatpush2.bf16.msra.mxu0 %v3954
        %4027 = vmatprep.subr.bf16.mxu0 0
        %4028 = vmatpush2.bf16.msra.mxu0 %v3953
        %4029 = vmatprep.subr.bf16.mxu0 0
        %4030 = vmatpush2.bf16.msra.mxu0 %v3952
        %4031 = vmatprep.subr.bf16.mxu0 0
        %4032 = vmatpush2.bf16.msra.mxu0 %v3951
        %4033 = vmatprep.subr.bf16.mxu0 0
        %4034 = vmatpush2.bf16.msra.mxu0 %v3950
        %4035 = vmatprep.subr.bf16.mxu0 0
        %4036 = vmatpush2.bf16.msra.mxu0 %v3949
        %4037 = vmatprep.mubr.bf16.mxu0 %v3742
        %4038 = vmatmul.mubr.bf16.gmra.mxu0 %v3741
        %v4039 = vpop.f32.mrf.mxu0
        %v4040 = vadd.f32 0.0, %v4039
        %v4041 = vpop.f32.mrf.mxu0
        %v4042 = vpop.f32.mrf.mxu0
        %v4043 = vadd.f32 0.0, %v4042
        %v4044 = vpop.f32.mrf.mxu0
        %4045 = vmatprep.mubr.bf16.mxu0 %v3746
        %4046 = vmatmul.mubr.bf16.gmra.mxu0 %v3745
        %v4047 = vpop.f32.mrf.mxu0
        %v4048 = vadd.f32 0.0, %v4047
        %v4049 = vpop.f32.mrf.mxu0
        %v4050 = vpop.f32.mrf.mxu0
        %v4051 = vpop.f32.mrf.mxu0
        %4052 = vdwg.mxu0
        %4053 = vmatprep.subr.bf16.mxu0 0
        %4054 = vmatpush1.bf16.msra.mxu0 %v3964
        %4055 = vmatprep.subr.bf16.mxu0 0
        %4056 = vmatpush1.bf16.msra.mxu0 %v3963
        %4057 = vmatprep.subr.bf16.mxu0 0
        %4058 = vmatpush1.bf16.msra.mxu0 %v3962
        %4059 = vmatprep.subr.bf16.mxu0 0
        %4060 = vmatpush1.bf16.msra.mxu0 %v3961
        %4061 = vmatprep.subr.bf16.mxu0 0
        %4062 = vmatpush1.bf16.msra.mxu0 %v3960
        %4063 = vmatprep.subr.bf16.mxu0 0
        %4064 = vmatpush1.bf16.msra.mxu0 %v3959
        %4065 = vmatprep.subr.bf16.mxu0 0
        %4066 = vmatpush1.bf16.msra.mxu0 %v3958
        %4067 = vmatprep.subr.bf16.mxu0 0
        %4068 = vmatpush1.bf16.msra.mxu0 %v3957
        %4069 = vmatprep.subr.bf16.mxu0 0
        %4070 = vmatpush2.bf16.msra.mxu0 %v3972
        %4071 = vmatprep.subr.bf16.mxu0 0
        %4072 = vmatpush2.bf16.msra.mxu0 %v3971
        %4073 = vmatprep.subr.bf16.mxu0 0
        %4074 = vmatpush2.bf16.msra.mxu0 %v3970
        %4075 = vmatprep.subr.bf16.mxu0 0
        %4076 = vmatpush2.bf16.msra.mxu0 %v3969
        %4077 = vmatprep.subr.bf16.mxu0 0
        %4078 = vmatpush2.bf16.msra.mxu0 %v3968
        %4079 = vmatprep.subr.bf16.mxu0 0
        %4080 = vmatpush2.bf16.msra.mxu0 %v3967
        %4081 = vmatprep.subr.bf16.mxu0 0
        %4082 = vmatpush2.bf16.msra.mxu0 %v3966
        %4083 = vmatprep.subr.bf16.mxu0 0
        %4084 = vmatpush2.bf16.msra.mxu0 %v3965
        %4085 = vmatprep.mubr.bf16.mxu0 %v3744
        %4086 = vmatmul.mubr.bf16.gmra.mxu0 %v3743
        %v4087 = vpop.f32.mrf.mxu0
        %v4088 = vadd.f32 %v4040, %v4087
        %v4089 = vpop.f32.mrf.mxu0
        %v4090 = vpop.f32.mrf.mxu0
        %v4091 = vadd.f32 %v4043, %v4090
        %v4092 = vpop.f32.mrf.mxu0
        %4093 = vmatprep.mubr.bf16.mxu0 %v3748
        %4094 = vmatmul.mubr.bf16.gmra.mxu0 %v3747
        %v4095 = vpop.f32.mrf.mxu0
        %v4096 = vadd.f32 %v4048, %v4095
        %v4097 = vpop.f32.mrf.mxu0
        %v4098 = vpop.f32.mrf.mxu0
        %v4099 = vpop.f32.mrf.mxu0
        %4100 = vdwg.mxu0
        %v4101 = vadd.f32 %v3269, %v4088
        %v4102 = vadd.f32 %v3270, %v4091
        %v4103 = vadd.f32 %v3271, %v4096
        %v4104 = vld [vmem:[%s971] sm:$0x1]
        %v4106 = vlaneseq
        %v4107 = vshrl.u32 %v4106, 7
        %v4108 = vsub.s32 0, %v4107
        %v4109 = vrot.slane %v4104, %v4108
        %v4111 = vadd.f32 %v4101, %v4109
        %v4112 = vadd.f32 %v4102, %v4109
        %v4113 = vadd.f32 %v4103, %v4109
        %4114 = vst [vmem:[#allocation2] sm:$0xff] %v4111
        %4115 = vst [vmem:[#allocation2 + $0x8] sm:$0xff] %v4112
        %4116 = vst [vmem:[#allocation2 + $0x10] sm:$0x1] %v4113
        %p4117 = scmp.eq.s32.totalorder %s50, 1
        // Predicated region
        $region137: #{tpu_custom_call.1} parent=99 // pred_check
          %p4118 = pneg %p4117
        $region138: #{tpu_custom_call.1} parent=99 // pred_check_branch
          %4120 = sbr.rel (%p4118) target = $region140
        $region139: #{tpu_custom_call.1} parent=99 // pred_region
          %v4121 = vld [vmem:[%s17] sm:$0x1]
          %v4122 = vld [vmem:[%s18] sm:$0x1]
          %v4123 = vsel %vm1210, %v4111, 0.0
          %4124 = vadd.xlane.f32.xlu0 %v4123
          %v4125 = vpop.xlane.xlu0 %4124
          %v4126 = vmul.f32 %v4125, %v1214
          %v4127 = vsub.f32 %v4111, %v4126
          %v4128 = vmul.f32 %v4127, %v4127
          %v4129 = vsel %vm1210, %v4128, 0.0
          %4130 = vadd.xlane.f32.xlu0 %v4129
          %v4131 = vpop.xlane.xlu0 %4130
          %v4132 = vmul.f32 %v4131, %v1214
          %v4133 = vadd.f32 %v4132, 1e-05
          %v4134 = vrsqrt.pop %v4133
          %v4135 = vmul.f32 %v4127, %v4134
          %v4136 = vmul.f32 %v4135, %v4121
          %v4137 = vadd.f32 %v4136, %v4122
          %v4138 = vpack.c.bf16 %v4137, %v4137
          %v4139 = vld [vmem:[%s19] sm:$0xf]
          %v4140 = vld [vmem:[%s19 + $0x4] sm:$0xf]
          %v4141 = vld [vmem:[%s19 + $0x8] sm:$0xf]
          %v4142 = vld [vmem:[%s19 + $0xc] sm:$0xf]
          %v4143 = vld [vmem:[%s19 + $0x10] sm:$0xf]
          %v4144 = vld [vmem:[%s19 + $0x14] sm:$0xf]
          %v4145 = vld [vmem:[%s19 + $0x18] sm:$0xf]
          %v4146 = vld [vmem:[%s19 + $0x1c] sm:$0xf]
          %v4147 = vld [vmem:[%s19 + $0x20] sm:$0xf]
          %v4148 = vld [vmem:[%s19 + $0x24] sm:$0xf]
          %v4149 = vld [vmem:[%s19 + $0x28] sm:$0xf]
          %v4150 = vld [vmem:[%s19 + $0x2c] sm:$0xf]
          %v4151 = vld [vmem:[%s19 + $0x30] sm:$0xf]
          %v4152 = vld [vmem:[%s19 + $0x34] sm:$0xf]
          %v4153 = vld [vmem:[%s19 + $0x38] sm:$0xf]
          %v4154 = vld [vmem:[%s19 + $0x3c] sm:$0xf]
          %v4171 = vunpack.c.l.b16 %v4139
          %v4172 = vunpack.c.l.b16 %v4140
          %v4173 = vunpack.c.l.b16 %v4141
          %v4174 = vunpack.c.l.b16 %v4142
          %v4175 = vunpack.c.l.b16 %v4143
          %v4176 = vunpack.c.l.b16 %v4144
          %v4177 = vunpack.c.l.b16 %v4145
          %v4178 = vunpack.c.l.b16 %v4146
          %v4179 = vunpack.c.l.b16 %v4147
          %v4180 = vunpack.c.l.b16 %v4148
          %v4181 = vunpack.c.l.b16 %v4149
          %v4182 = vunpack.c.l.b16 %v4150
          %v4183 = vunpack.c.l.b16 %v4151
          %v4184 = vunpack.c.l.b16 %v4152
          %v4185 = vunpack.c.l.b16 %v4153
          %v4186 = vunpack.c.l.b16 %v4154
          %v4187 = vpack.c.b16 %v4172, %v4171
          %v4188 = vpack.c.b16 %v4174, %v4173
          %v4189 = vpack.c.b16 %v4176, %v4175
          %v4190 = vpack.c.b16 %v4178, %v4177
          %v4191 = vpack.c.b16 %v4180, %v4179
          %v4192 = vpack.c.b16 %v4182, %v4181
          %v4193 = vpack.c.b16 %v4184, %v4183
          %v4194 = vpack.c.b16 %v4186, %v4185
          %4203 = vmatprep.subr.bf16.mxu0 0
          %4204 = vmatpush1.bf16.msra.mxu0 %v4194
          %4205 = vmatprep.subr.bf16.mxu0 0
          %4206 = vmatpush1.bf16.msra.mxu0 %v4193
          %4207 = vmatprep.subr.bf16.mxu0 0
          %4208 = vmatpush1.bf16.msra.mxu0 %v4192
          %4209 = vmatprep.subr.bf16.mxu0 0
          %4210 = vmatpush1.bf16.msra.mxu0 %v4191
          %4211 = vmatprep.subr.bf16.mxu0 0
          %4212 = vmatpush1.bf16.msra.mxu0 %v4190
          %4213 = vmatprep.subr.bf16.mxu0 0
          %4214 = vmatpush1.bf16.msra.mxu0 %v4189
          %4215 = vmatprep.subr.bf16.mxu0 0
          %4216 = vmatpush1.bf16.msra.mxu0 %v4188
          %4217 = vmatprep.subr.bf16.mxu0 0
          %4218 = vmatpush1.bf16.msra.mxu0 %v4187
          %4219 = vmatprep.subr.bf16.mxu0 0
          %4220 = vmatpush2.bf16.msra.mxu0 0
          %4221 = vmatprep.subr.bf16.mxu0 0
          %4222 = vmatpush2.bf16.msra.mxu0 0
          %4223 = vmatprep.subr.bf16.mxu0 0
          %4224 = vmatpush2.bf16.msra.mxu0 0
          %4225 = vmatprep.subr.bf16.mxu0 0
          %4226 = vmatpush2.bf16.msra.mxu0 0
          %4227 = vmatprep.subr.bf16.mxu0 0
          %4228 = vmatpush2.bf16.msra.mxu0 0
          %4229 = vmatprep.subr.bf16.mxu0 0
          %4230 = vmatpush2.bf16.msra.mxu0 0
          %4231 = vmatprep.subr.bf16.mxu0 0
          %4232 = vmatpush2.bf16.msra.mxu0 0
          %4233 = vmatprep.subr.bf16.mxu0 0
          %4234 = vmatpush2.bf16.msra.mxu0 0
          %4235 = vmatprep.mubr.bf16.mxu0 0
          %4236 = vmatmul.mubr.bf16.gmra.mxu0 %v4138
          %v4237 = vpop.f32.mrf.mxu0
          %v4238 = vadd.f32 0.0, %v4237
          %v4239 = vpop.f32.mrf.mxu0
          %v4240 = vpop.f32.mrf.mxu0
          %v4241 = vpop.f32.mrf.mxu0
          %4242 = vdwg.mxu0
          %4243 = vst [vmem:[%s944] sm:$0x1] %v4238
        $region140: #{tpu_custom_call.1} parent=99 // pred_fallthru
          _
        %s4244 = sand.u32 %s550, 1
        %s4245 = scalar_lea.sflag [#allocation5], %s4244
        %s4246 = sand.u32 %s550, 1
        %s4247 = scalar_lea.vmem [#allocation17], %s4246
        // Predicated region
        $region141: #{tpu_custom_call.1} parent=99 // pred_check
          %p4248 = pneg %p560
        $region142: #{tpu_custom_call.1} parent=99 // pred_check_branch
          %4250 = sbr.rel (%p4248) target = $region144
        $region143: #{tpu_custom_call.1} parent=99 // pred_region
          %s4252 = ssub.s32 16, 16
          %4253 = vsyncadd %s4245, %s4252
          %s4254 = smul.addr %s49, 16
          %s4255 = scalar_lea.hbm %s20, %s4254
          %s4257 = sshll.u32 %s4247, 4
          %s4258 = int_to_ptr.vmem [resolvable:$true] %s4257
          %4260 = dma.vmem_to_hbm [thread:$0]  %s4258, 16, %s4255, %s4245
        $region144: #{tpu_custom_call.1} parent=99 // pred_fallthru
          _
      $region100: #{tpu_custom_call.1} parent=5 // pred_fallthru
        _
      %p4261 = scmp.le.s32.totalorder 2, %s40
      // Predicated region
      $region145: #{tpu_custom_call.1} parent=5 // pred_check
        %p4262 = pneg %p4261
      $region146: #{tpu_custom_call.1} parent=5 // pred_check_branch
        %4264 = sbr.rel (%p4262) target = $region148
      $region147: #{tpu_custom_call.1} parent=5 // pred_region
        %s4265 = ssub.s32 %s40, 2
        // Predicated region
        $region149: #{tpu_custom_call.1} parent=147 // pred_check
          %p4266 = pneg %p566
        $region150: #{tpu_custom_call.1} parent=147 // pred_check_branch
          %4268 = sbr.rel (%p4266) target = $region152
        $region151: #{tpu_custom_call.1} parent=147 // pred_region
          %s4269 = sand.u32 %s551, 1
          %s4270 = scalar_lea.sflag [#allocation5], %s4269
          %s4271 = sand.u32 %s551, 1
          %s4272 = scalar_lea.vmem [#allocation17], %s4271
          %4273 = dma.done %s4270, 16
        $region152: #{tpu_custom_call.1} parent=147 // pred_fallthru
          _
      $region148: #{tpu_custom_call.1} parent=5 // pred_fallthru
        _
    $region6: #{tpu_custom_call.1} parent=1 // loop_footer
      %s44 = sadd.s32 1, %s40
    $region7: #{tpu_custom_call.1} parent=1 // loop_footer_branch
      %39 = sbr.rel target = $region3
    $region8: #{tpu_custom_call.1} parent=1 // loop_exit
      _
    %4274 = vsyncpa [#allocation4], 1
    %s4275 = scalar_lea.sflag [#allocation4], 1
    %4276 = vsyncpa %s4275, 1
    %4277 = vsyncpa [#allocation7], 1
    %4278 = vsyncpa [#allocation10], 1
    %s4279 = scalar_lea.sflag [#allocation10], 1
    %4280 = vsyncpa %s4279, 1
    %4281 = vsyncpa [#allocation13], 1
    %s4282 = scalar_lea.sflag [#allocation13], 1
    %4283 = vsyncpa %s4282, 1
    %4284 = vsyncpa [#allocation16], 1
    %s4285 = scalar_lea.sflag [#allocation16], 1
    %4286 = vsyncpa %s4285, 1
    %4287 = vsyncpa [#allocation5], 1
    %s4288 = scalar_lea.sflag [#allocation5], 1
    %4289 = vsyncpa %s4288, 1

</llo_original>
